<compile_context>
chip_gen: v7x
topology: tpu7x:2x2x1
jax: 0.10.0
libtpu: 0.0.40
codegen_flags: <defaults>
</compile_context>

<pallas_src>
import functools

import jax
import jax.numpy as jnp
from jax.experimental import pallas as pl
from jax.experimental.pallas import tpu as pltpu

IN_DIM = 32 * 32 * 3            # 3072
H1, H2, H3, OUT = 512, 128, 64, 10
OUT_PAD = 128                   # lane-dense output slab, sliced to OUT in wrapper
TB_MAX = 512                    # max batch tile (multiple of 8); fits v7x 64 MiB VMEM
VMEM_LIMIT = 48 * 1024 * 1024   # explicit scoped-VMEM budget (safe on v5e/v6e/v7x)


def _round_up(x, m):
    return ((x + m - 1) // m) * m


def _mlp_kernel(x_ref, w1_ref, b1_ref, w2_ref, b2_ref,
                w3_ref, b3_ref, w4_ref, b4_ref, o_ref):
    """Fused hot path: 4 MXU matmuls + bias + ReLU, all resident in VMEM.

    Matmul inputs are cast to the weight dtype right before the dot (so an
    optional bf16 path keeps the VPU bias-add/ReLU in f32); accumulation is f32.
    """
    def dot(a, w_ref):
        return jnp.dot(a.astype(w_ref.dtype), w_ref[...],
                       preferred_element_type=jnp.float32)

    h = jnp.maximum(dot(x_ref[...], w1_ref) + b1_ref[...], 0.0)
    h = jnp.maximum(dot(h, w2_ref) + b2_ref[...], 0.0)
    h = jnp.maximum(dot(h, w3_ref) + b3_ref[...], 0.0)
    o_ref[...] = (dot(h, w4_ref) + b4_ref[...]).astype(o_ref.dtype)


def _choose_tb(n):
    """Batch tile: multiple of 8, capped at TB_MAX; if the whole batch would be a
    single grid step (and there is enough work), split into 2 tiles so the
    "parallel" grid axis shards across both TensorCores on v7x."""
    n8 = max(8, _round_up(n, 8))
    tb = min(TB_MAX, n8)
    if n8 >= 16 and pl.cdiv(n, tb) == 1:
        tb = max(8, _round_up(pl.cdiv(n8, 2), 8))
    return tb


@functools.partial(jax.jit, static_argnames=("compute_dtype",))
def cifar_dnn_forward(x_nchw, params, compute_dtype=jnp.float32):
    w1, b1, w2, b2, w3, b3, w4, b4 = params
    n = x_nchw.shape[0]

    # Flatten exactly like torch: x.view(-1, 32*32*3) on NCHW data.
    # No batch padding: the edge grid block is handled by Pallas masking and the
    # padded output lanes are sliced off below.
    x = x_nchw.reshape(n, IN_DIM).astype(compute_dtype)

    w1c = w1.astype(compute_dtype)
    w2c = w2.astype(compute_dtype)
    w3c = w3.astype(compute_dtype)
    # Lane-dense output: pad the last layer to 128 output lanes (unmasked vst).
    w4p = jnp.pad(w4, ((0, 0), (0, OUT_PAD - OUT))).astype(compute_dtype)
    b4p = jnp.pad(b4, (0, OUT_PAD - OUT)).reshape(1, OUT_PAD).astype(jnp.float32)
    # Biases stay f32 (VPU elementwise path stays f32 regardless of compute dtype).
    b1r = b1.reshape(1, H1).astype(jnp.float32)
    b2r = b2.reshape(1, H2).astype(jnp.float32)
    b3r = b3.reshape(1, H3).astype(jnp.float32)

    tb = _choose_tb(n)
    grid = (pl.cdiv(n, tb),)
    full = lambda i: (0, 0)  # weights/biases: same full block every grid step

    esize = jnp.dtype(compute_dtype).itemsize
    weight_elems = IN_DIM * H1 + H1 * H2 + H2 * H3 + H3 * OUT_PAD
    flops = 2 * n * weight_elems
    bytes_accessed = (n * IN_DIM * esize            # x read
                      + n * OUT_PAD * 4             # out write
                      + weight_elems * esize        # weights read
                      + (H1 + H2 + H3 + OUT_PAD) * 4)  # biases read

    out = pl.pallas_call(
        _mlp_kernel,
        out_shape=jax.ShapeDtypeStruct((n, OUT_PAD), jnp.float32),
        grid_spec=pltpu.PrefetchScalarGridSpec(
            num_scalar_prefetch=0,
            grid=grid,
            in_specs=[
                pl.BlockSpec((tb, IN_DIM), lambda i: (i, 0)),      # x tile
                pl.BlockSpec((IN_DIM, H1), full), pl.BlockSpec((1, H1), full),
                pl.BlockSpec((H1, H2), full),     pl.BlockSpec((1, H2), full),
                pl.BlockSpec((H2, H3), full),     pl.BlockSpec((1, H3), full),
                pl.BlockSpec((H3, OUT_PAD), full), pl.BlockSpec((1, OUT_PAD), full),
            ],
            out_specs=pl.BlockSpec((tb, OUT_PAD), lambda i: (i, 0)),
        ),
        compiler_params=pltpu.CompilerParams(
            dimension_semantics=("parallel",),
            vmem_limit_bytes=VMEM_LIMIT,
        ),
        cost_estimate=pl.CostEstimate(
            flops=flops, transcendentals=0, bytes_accessed=bytes_accessed),
    )(x, w1c, b1r, w2c, b2r, w3c, b3r, w4p, b4p)

    # Drop the padded output lanes (rows already match the real batch size).
    return out[:, :OUT]


def init_params(key):
    """Deterministic init mimicking nn.Linear (uniform(-1/sqrt(in), 1/sqrt(in))).
    Weights stored as (in_features, out_features) — torch weight transposed."""
    dims = [(IN_DIM, H1), (H1, H2), (H2, H3), (H3, OUT)]
    params = []
    for (fan_in, fan_out) in dims:
        key, kw, kb = jax.random.split(key, 3)
        bound = 1.0 / jnp.sqrt(float(fan_in))
        w = jax.random.uniform(kw, (fan_in, fan_out), jnp.float32, -bound, bound)
        b = jax.random.uniform(kb, (fan_out,), jnp.float32, -bound, bound)
        params += [w, b]
    return tuple(params)


def reference_forward(x_nchw, params):
    """Plain-JAX reference mirroring the PyTorch forward."""
    w1, b1, w2, b2, w3, b3, w4, b4 = params
    x = x_nchw.reshape(x_nchw.shape[0], IN_DIM).astype(jnp.float32)
    x = jnp.maximum(x @ w1 + b1, 0.0)
    x = jnp.maximum(x @ w2 + b2, 0.0)
    x = jnp.maximum(x @ w3 + b3, 0.0)
    return x @ w4 + b4


if __name__ == "__main__":
    key = jax.random.PRNGKey(0)
    kx, kp = jax.random.split(key)
    # CIFAR-shaped input (small batch): NCHW = (2, 3, 32, 32)
    x = jax.random.normal(kx, (2, 3, 32, 32), jnp.float32)
    params = init_params(kp)

    out = cifar_dnn_forward(x, params)
    out = jax.block_until_ready(out)

    ref = reference_forward(x, params)
    assert out.shape == (2, 10), out.shape
    assert jnp.allclose(out, ref, atol=1e-4, rtol=1e-4), "mismatch vs reference"
    print("KERNEL_OK")
</pallas_src>

<mosaic_0001>
module attributes {stable_mosaic.version = 11 : i64} {
  func.func @_mlp_kernel(%arg0: i32, %arg1: memref<8x3072xf32, #tpu.memory_space<vmem>>, %arg2: memref<3072x512xf32, #tpu.memory_space<vmem>>, %arg3: memref<1x512xf32, #tpu.memory_space<vmem>>, %arg4: memref<512x128xf32, #tpu.memory_space<vmem>>, %arg5: memref<1x128xf32, #tpu.memory_space<vmem>>, %arg6: memref<128x64xf32, #tpu.memory_space<vmem>>, %arg7: memref<1x64xf32, #tpu.memory_space<vmem>>, %arg8: memref<64x128xf32, #tpu.memory_space<vmem>>, %arg9: memref<1x128xf32, #tpu.memory_space<vmem>>, %arg10: memref<8x128xf32, #tpu.memory_space<vmem>>) attributes {dimension_semantics = [#tpu.dimension_semantics<parallel>], iteration_bounds = array<i64: 1>, scalar_prefetch = 0 : i64, scratch_operands = 0 : i64, tpu.core_type = #tpu.core_type<tc>, window_params = [{transform_indices = @transform_0, window_bounds = array<i64: 8, 3072>}, {pipeline_mode = #tpu.pipeline_mode<synchronous>, transform_indices = @transform_1, window_bounds = array<i64: 3072, 512>}, {pipeline_mode = #tpu.pipeline_mode<synchronous>, transform_indices = @transform_2, window_bounds = array<i64: 1, 512>}, {pipeline_mode = #tpu.pipeline_mode<synchronous>, transform_indices = @transform_3, window_bounds = array<i64: 512, 128>}, {pipeline_mode = #tpu.pipeline_mode<synchronous>, transform_indices = @transform_4, window_bounds = array<i64: 1, 128>}, {pipeline_mode = #tpu.pipeline_mode<synchronous>, transform_indices = @transform_5, window_bounds = array<i64: 128, 64>}, {pipeline_mode = #tpu.pipeline_mode<synchronous>, transform_indices = @transform_6, window_bounds = array<i64: 1, 64>}, {pipeline_mode = #tpu.pipeline_mode<synchronous>, transform_indices = @transform_7, window_bounds = array<i64: 64, 128>}, {pipeline_mode = #tpu.pipeline_mode<synchronous>, transform_indices = @transform_8, window_bounds = array<i64: 1, 128>}, {transform_indices = @transform_9, window_bounds = array<i64: 8, 128>}]} {
    %c0 = arith.constant 0 : index
    %c0_0 = arith.constant 0 : index
    %0 = vector.load %arg1[%c0, %c0_0] : memref<8x3072xf32, #tpu.memory_space<vmem>>, vector<8x3072xf32>
    %c0_1 = arith.constant 0 : index
    %c0_2 = arith.constant 0 : index
    %1 = vector.load %arg2[%c0_1, %c0_2] : memref<3072x512xf32, #tpu.memory_space<vmem>>, vector<3072x512xf32>
    %cst = arith.constant dense<0.000000e+00> : vector<8x512xf32>
    %2 = tpu.matmul %0, %1, %cst {dimension_numbers = #tpu.dot_dimension_numbers<[1], [0], [0], [1], [0, 0, 1, 1], [], []>} : vector<8x3072xf32>, vector<3072x512xf32>, vector<8x512xf32> -> vector<8x512xf32>
    %c0_3 = arith.constant 0 : index
    %c0_4 = arith.constant 0 : index
    %3 = vector.load %arg3[%c0_3, %c0_4] : memref<1x512xf32, #tpu.memory_space<vmem>>, vector<1x512xf32>
    %4 = vector.broadcast %3 : vector<1x512xf32> to vector<8x512xf32>
    %5 = arith.addf %2, %4 : vector<8x512xf32>
    %cst_5 = arith.constant 0.000000e+00 : f32
    %6 = vector.broadcast %cst_5 : f32 to vector<8x512xf32>
    %7 = arith.maximumf %5, %6 : vector<8x512xf32>
    %c0_6 = arith.constant 0 : index
    %c0_7 = arith.constant 0 : index
    %8 = vector.load %arg4[%c0_6, %c0_7] : memref<512x128xf32, #tpu.memory_space<vmem>>, vector<512x128xf32>
    %cst_8 = arith.constant dense<0.000000e+00> : vector<8x128xf32>
    %9 = tpu.matmul %7, %8, %cst_8 {dimension_numbers = #tpu.dot_dimension_numbers<[1], [0], [0], [1], [0, 0, 1, 1], [], []>} : vector<8x512xf32>, vector<512x128xf32>, vector<8x128xf32> -> vector<8x128xf32>
    %c0_9 = arith.constant 0 : index
    %c0_10 = arith.constant 0 : index
    %10 = vector.load %arg5[%c0_9, %c0_10] : memref<1x128xf32, #tpu.memory_space<vmem>>, vector<1x128xf32>
    %11 = vector.broadcast %10 : vector<1x128xf32> to vector<8x128xf32>
    %12 = arith.addf %9, %11 : vector<8x128xf32>
    %cst_11 = arith.constant 0.000000e+00 : f32
    %13 = vector.broadcast %cst_11 : f32 to vector<8x128xf32>
    %14 = arith.maximumf %12, %13 : vector<8x128xf32>
    %c0_12 = arith.constant 0 : index
    %c0_13 = arith.constant 0 : index
    %15 = vector.load %arg6[%c0_12, %c0_13] : memref<128x64xf32, #tpu.memory_space<vmem>>, vector<128x64xf32>
    %cst_14 = arith.constant dense<0.000000e+00> : vector<8x64xf32>
    %16 = tpu.matmul %14, %15, %cst_14 {dimension_numbers = #tpu.dot_dimension_numbers<[1], [0], [0], [1], [0, 0, 1, 1], [], []>} : vector<8x128xf32>, vector<128x64xf32>, vector<8x64xf32> -> vector<8x64xf32>
    %c0_15 = arith.constant 0 : index
    %c0_16 = arith.constant 0 : index
    %17 = vector.load %arg7[%c0_15, %c0_16] : memref<1x64xf32, #tpu.memory_space<vmem>>, vector<1x64xf32>
    %18 = vector.broadcast %17 : vector<1x64xf32> to vector<8x64xf32>
    %19 = arith.addf %16, %18 : vector<8x64xf32>
    %cst_17 = arith.constant 0.000000e+00 : f32
    %20 = vector.broadcast %cst_17 : f32 to vector<8x64xf32>
    %21 = arith.maximumf %19, %20 : vector<8x64xf32>
    %c0_18 = arith.constant 0 : index
    %c0_19 = arith.constant 0 : index
    %22 = vector.load %arg8[%c0_18, %c0_19] : memref<64x128xf32, #tpu.memory_space<vmem>>, vector<64x128xf32>
    %cst_20 = arith.constant dense<0.000000e+00> : vector<8x128xf32>
    %23 = tpu.matmul %21, %22, %cst_20 {dimension_numbers = #tpu.dot_dimension_numbers<[1], [0], [0], [1], [0, 0, 1, 1], [], []>} : vector<8x64xf32>, vector<64x128xf32>, vector<8x128xf32> -> vector<8x128xf32>
    %c0_21 = arith.constant 0 : index
    %c0_22 = arith.constant 0 : index
    %24 = vector.load %arg9[%c0_21, %c0_22] : memref<1x128xf32, #tpu.memory_space<vmem>>, vector<1x128xf32>
    %25 = vector.broadcast %24 : vector<1x128xf32> to vector<8x128xf32>
    %26 = arith.addf %23, %25 : vector<8x128xf32>
    %c0_23 = arith.constant 0 : index
    %c0_24 = arith.constant 0 : index
    %27 = vector.load %arg10[%c0_23, %c0_24] : memref<8x128xf32, #tpu.memory_space<vmem>>, vector<8x128xf32>
    tpu.vector_store %arg10[%c0_23, %c0_24], %26 {strides = array<i32>} : memref<8x128xf32, #tpu.memory_space<vmem>>, vector<8x128xf32>,
    return
  }
  func.func @transform_0(%arg0: i32) -> (i32, i32) {
    %c0_i32 = arith.constant 0 : i32
    %c0_i32_0 = arith.constant 0 : i32
    return %arg0, %c0_i32 : i32, i32
  }
  func.func @transform_1(%arg0: i32) -> (i32, i32) {
    %c0_i32 = arith.constant 0 : i32
    %c0_i32_0 = arith.constant 0 : i32
    %c0_i32_1 = arith.constant 0 : i32
    return %c0_i32, %c0_i32_0 : i32, i32
  }
  func.func @transform_2(%arg0: i32) -> (i32, i32) {
    %c0_i32 = arith.constant 0 : i32
    %c0_i32_0 = arith.constant 0 : i32
    %c0_i32_1 = arith.constant 0 : i32
    return %c0_i32, %c0_i32_0 : i32, i32
  }
  func.func @transform_3(%arg0: i32) -> (i32, i32) {
    %c0_i32 = arith.constant 0 : i32
    %c0_i32_0 = arith.constant 0 : i32
    %c0_i32_1 = arith.constant 0 : i32
    return %c0_i32, %c0_i32_0 : i32, i32
  }
  func.func @transform_4(%arg0: i32) -> (i32, i32) {
    %c0_i32 = arith.constant 0 : i32
    %c0_i32_0 = arith.constant 0 : i32
    %c0_i32_1 = arith.constant 0 : i32
    return %c0_i32, %c0_i32_0 : i32, i32
  }
  func.func @transform_5(%arg0: i32) -> (i32, i32) {
    %c0_i32 = arith.constant 0 : i32
    %c0_i32_0 = arith.constant 0 : i32
    %c0_i32_1 = arith.constant 0 : i32
    return %c0_i32, %c0_i32_0 : i32, i32
  }
  func.func @transform_6(%arg0: i32) -> (i32, i32) {
    %c0_i32 = arith.constant 0 : i32
    %c0_i32_0 = arith.constant 0 : i32
    %c0_i32_1 = arith.constant 0 : i32
    return %c0_i32, %c0_i32_0 : i32, i32
  }
  func.func @transform_7(%arg0: i32) -> (i32, i32) {
    %c0_i32 = arith.constant 0 : i32
    %c0_i32_0 = arith.constant 0 : i32
    %c0_i32_1 = arith.constant 0 : i32
    return %c0_i32, %c0_i32_0 : i32, i32
  }
  func.func @transform_8(%arg0: i32) -> (i32, i32) {
    %c0_i32 = arith.constant 0 : i32
    %c0_i32_0 = arith.constant 0 : i32
    %c0_i32_1 = arith.constant 0 : i32
    return %c0_i32, %c0_i32_0 : i32, i32
  }
  func.func @transform_9(%arg0: i32) -> (i32, i32) {
    %c0_i32 = arith.constant 0 : i32
    %c0_i32_0 = arith.constant 0 : i32
    return %arg0, %c0_i32 : i32, i32
  }
}

</mosaic_0001>

<llo_original>
// kernel: cifar_dnn_forward.1
$region0: #{cifar_dnn_forward.1}
  #allocation0 [shape = 'u32[]', space=smem, size = 0x4, offset = 0x4, fixed_abs, tag = 'smem constant byte address 0x4 - core index']
  #allocation1 [shape = 'u32[144,128]{1,0:T(1,128)}', space=vmem, size = 0x12000, scoped, tag = 'internal scratch']
  %s0 = inlined_call_operand.vmem [shape: f32[2,3072], index: 0, kind: input, shape index: {}]
  %s1 = inlined_call_operand.hbm [shape: f32[3072,512], index: 1, kind: input, shape index: {}]
  %s2 = inlined_call_operand.hbm [shape: f32[1,512], index: 2, kind: input, shape index: {}]
  %s3 = inlined_call_operand.hbm [shape: f32[512,128], index: 3, kind: input, shape index: {}]
  %s4 = inlined_call_operand.hbm [shape: f32[1,128], index: 4, kind: input, shape index: {}]
  %s5 = inlined_call_operand.vmem [shape: f32[128,64], index: 5, kind: input, shape index: {}]
  %s6 = inlined_call_operand.hbm [shape: f32[1,64], index: 6, kind: input, shape index: {}]
  %s7 = inlined_call_operand.vmem [shape: f32[64,128], index: 7, kind: input, shape index: {}]
  %s8 = inlined_call_operand.vmem [shape: f32[1,128], index: 8, kind: input, shape index: {}]
  %s9 = inlined_call_operand.hbm [shape: f32[2,128], index: 9, kind: output, shape index: {}]
  %s10 = sld [smem:[#allocation0]]
  $region66: #{cifar_dnn_forward.1} parent=0
    _
  %s12 = ssub.s32 1, %s10
  %s13 = scalar_select 0, %s12, %s10
  $region1: #{cifar_dnn_forward.1} parent=0
    #allocation2 [shape = 'u8[6291456]{0}', space=vmem, size = 0x600000, scoped, tag = 'input window, operand 1, single buffered']
    #allocation3 [shape = 's32[1]{0}', space=sflag, size = 0x4, scoped, tag = 'scoped memory for cifar_dnn_forward.1']
    #allocation4 [shape = 's32[1]{0}', space=sflag, size = 0x4, scoped, tag = 'scoped memory for cifar_dnn_forward.1']
    #allocation5 [shape = 'u8[2048]{0}', space=vmem, size = 0x800, scoped, tag = 'input window, operand 2, single buffered']
    #allocation6 [shape = 's32[1]{0}', space=sflag, size = 0x4, scoped, tag = 'scoped memory for cifar_dnn_forward.1']
    #allocation7 [shape = 'u8[262144]{0}', space=vmem, size = 0x40000, scoped, tag = 'input window, operand 3, single buffered']
    #allocation8 [shape = 'u8[512]{0}', space=vmem, size = 0x400, scoped, tag = 'input window, operand 4, single buffered']
    #allocation9 [shape = 's32[1]{0}', space=sflag, size = 0x4, scoped, tag = 'scoped memory for cifar_dnn_forward.1']
    #allocation10 [shape = 'u8[512]{0}', space=vmem, size = 0x400, scoped, tag = 'input window, operand 6, single buffered']
    #allocation11 [shape = 'u8[4096]{0}', space=vmem, size = 0x1000, scoped, tag = 'output window, operand 0, single buffered']
    %14 = vsyncpa [#allocation3], 0
    %15 = vsyncpa [#allocation6], 0
    %16 = vsyncpa [#allocation9], 0
    %17 = vsyncpa [#allocation4], 0
    // Predicated region
    $region2: #{cifar_dnn_forward.1} parent=1 // pred_check
      _
    $region3: #{cifar_dnn_forward.1} parent=1 // pred_check_branch
      %19 = sbr.rel (0) target = $region5
    $region4: #{cifar_dnn_forward.1} parent=1 // pred_region
      _
    $region5: #{cifar_dnn_forward.1} parent=1 // pred_fallthru
      _
    // Predicated region
    $region6: #{cifar_dnn_forward.1} parent=1 // pred_check
      _
    $region7: #{cifar_dnn_forward.1} parent=1 // pred_check_branch
      %21 = sbr.rel (0) target = $region9
    $region8: #{cifar_dnn_forward.1} parent=1 // pred_region
      %s23 = ssub.s32 196608, 196608
      %24 = vsyncadd [#allocation3], %s23
      %s25 = sshll.u32 [#allocation2], 4
      %s26 = int_to_ptr.vmem [resolvable:$true] %s25
      %31 = dma.hbm_to_vmem [thread:$0]  %s1, 196608, %s26, [#allocation3], 512, 512, 32
    $region9: #{cifar_dnn_forward.1} parent=1 // pred_fallthru
      _
    // Predicated region
    $region10: #{cifar_dnn_forward.1} parent=1 // pred_check
      _
    $region11: #{cifar_dnn_forward.1} parent=1 // pred_check_branch
      %33 = sbr.rel (0) target = $region13
    $region12: #{cifar_dnn_forward.1} parent=1 // pred_region
      %s35 = ssub.s32 64, 64
      %36 = vsyncadd [#allocation6], %s35
      %s38 = sshll.u32 [#allocation5], 4
      %s39 = int_to_ptr.vmem [resolvable:$true] %s38
      %41 = dma.hbm_to_vmem [thread:$0]  %s2, 64, %s39, [#allocation6]
    $region13: #{cifar_dnn_forward.1} parent=1 // pred_fallthru
      _
    // Predicated region
    $region14: #{cifar_dnn_forward.1} parent=1 // pred_check
      _
    $region15: #{cifar_dnn_forward.1} parent=1 // pred_check_branch
      %43 = sbr.rel (0) target = $region17
    $region16: #{cifar_dnn_forward.1} parent=1 // pred_region
      %s45 = ssub.s32 8192, 8192
      %46 = vsyncadd [#allocation6], %s45
      %s47 = sshll.u32 [#allocation7], 4
      %s48 = int_to_ptr.vmem [resolvable:$true] %s47
      %53 = dma.hbm_to_vmem [thread:$0]  %s3, 8192, %s48, [#allocation6], 128, 128, 8
    $region17: #{cifar_dnn_forward.1} parent=1 // pred_fallthru
      _
    // Predicated region
    $region18: #{cifar_dnn_forward.1} parent=1 // pred_check
      _
    $region19: #{cifar_dnn_forward.1} parent=1 // pred_check_branch
      %55 = sbr.rel (0) target = $region21
    $region20: #{cifar_dnn_forward.1} parent=1 // pred_region
      %s57 = ssub.s32 16, 16
      %58 = vsyncadd [#allocation9], %s57
      %s60 = sshll.u32 [#allocation8], 4
      %s61 = int_to_ptr.vmem [resolvable:$true] %s60
      %63 = dma.hbm_to_vmem [thread:$0]  %s4, 16, %s61, [#allocation9]
    $region21: #{cifar_dnn_forward.1} parent=1 // pred_fallthru
      _
    // Predicated region
    $region22: #{cifar_dnn_forward.1} parent=1 // pred_check
      _
    $region23: #{cifar_dnn_forward.1} parent=1 // pred_check_branch
      %65 = sbr.rel (0) target = $region25
    $region24: #{cifar_dnn_forward.1} parent=1 // pred_region
      _
    $region25: #{cifar_dnn_forward.1} parent=1 // pred_fallthru
      _
    // Predicated region
    $region26: #{cifar_dnn_forward.1} parent=1 // pred_check
      _
    $region27: #{cifar_dnn_forward.1} parent=1 // pred_check_branch
      %67 = sbr.rel (0) target = $region29
    $region28: #{cifar_dnn_forward.1} parent=1 // pred_region
      %s69 = ssub.s32 16, 16
      %70 = vsyncadd [#allocation9], %s69
      %s72 = sshll.u32 [#allocation10], 4
      %s73 = int_to_ptr.vmem [resolvable:$true] %s72
      %75 = dma.hbm_to_vmem [thread:$0]  %s6, 16, %s73, [#allocation9]
    $region29: #{cifar_dnn_forward.1} parent=1 // pred_fallthru
      _
    // Predicated region
    $region30: #{cifar_dnn_forward.1} parent=1 // pred_check
      _
    $region31: #{cifar_dnn_forward.1} parent=1 // pred_check_branch
      %77 = sbr.rel (0) target = $region33
    $region32: #{cifar_dnn_forward.1} parent=1 // pred_region
      _
    $region33: #{cifar_dnn_forward.1} parent=1 // pred_fallthru
      _
    // Predicated region
    $region34: #{cifar_dnn_forward.1} parent=1 // pred_check
      _
    $region35: #{cifar_dnn_forward.1} parent=1 // pred_check_branch
      %79 = sbr.rel (0) target = $region37
    $region36: #{cifar_dnn_forward.1} parent=1 // pred_region
      _
    $region37: #{cifar_dnn_forward.1} parent=1 // pred_fallthru
      _
    // Predicated region
    $region38: #{cifar_dnn_forward.1} parent=1 // pred_check
      _
    $region39: #{cifar_dnn_forward.1} parent=1 // pred_check_branch
      %81 = sbr.rel (0) target = $region41
    $region40: #{cifar_dnn_forward.1} parent=1 // pred_region
      %82 = dma.done [#allocation3], 196608
    $region41: #{cifar_dnn_forward.1} parent=1 // pred_fallthru
      _
    // Predicated region
    $region42: #{cifar_dnn_forward.1} parent=1 // pred_check
      _
    $region43: #{cifar_dnn_forward.1} parent=1 // pred_check_branch
      %84 = sbr.rel (0) target = $region45
    $region44: #{cifar_dnn_forward.1} parent=1 // pred_region
      %85 = dma.done [#allocation6], 64
    $region45: #{cifar_dnn_forward.1} parent=1 // pred_fallthru
      _
    // Predicated region
    $region46: #{cifar_dnn_forward.1} parent=1 // pred_check
      _
    $region47: #{cifar_dnn_forward.1} parent=1 // pred_check_branch
      %87 = sbr.rel (0) target = $region49
    $region48: #{cifar_dnn_forward.1} parent=1 // pred_region
      %88 = dma.done [#allocation6], 8192
    $region49: #{cifar_dnn_forward.1} parent=1 // pred_fallthru
      _
    // Predicated region
    $region50: #{cifar_dnn_forward.1} parent=1 // pred_check
      _
    $region51: #{cifar_dnn_forward.1} parent=1 // pred_check_branch
      %90 = sbr.rel (0) target = $region53
    $region52: #{cifar_dnn_forward.1} parent=1 // pred_region
      %91 = dma.done [#allocation9], 16
    $region53: #{cifar_dnn_forward.1} parent=1 // pred_fallthru
      _
    // Predicated region
    $region54: #{cifar_dnn_forward.1} parent=1 // pred_check
      _
    $region55: #{cifar_dnn_forward.1} parent=1 // pred_check_branch
      %93 = sbr.rel (0) target = $region57
    $region56: #{cifar_dnn_forward.1} parent=1 // pred_region
      %94 = dma.done [#allocation9], 16
    $region57: #{cifar_dnn_forward.1} parent=1 // pred_fallthru
      _
    %v95 = vld [vmem:[%s0] sm:$0xff]
    %v96 = vld [vmem:[%s0 + $0x8] sm:$0xff]
    %v97 = vld [vmem:[%s0 + $0x10] sm:$0xff]
    %v98 = vld [vmem:[%s0 + $0x18] sm:$0xff]
    %v99 = vld [vmem:[%s0 + $0x20] sm:$0xff]
    %v100 = vld [vmem:[%s0 + $0x28] sm:$0xff]
    %v101 = vld [vmem:[%s0 + $0x30] sm:$0xff]
    %v102 = vld [vmem:[%s0 + $0x38] sm:$0xff]
    %v103 = vld [vmem:[%s0 + $0x40] sm:$0xff]
    %v104 = vld [vmem:[%s0 + $0x48] sm:$0xff]
    %v105 = vld [vmem:[%s0 + $0x50] sm:$0xff]
    %v106 = vld [vmem:[%s0 + $0x58] sm:$0xff]
    %v107 = vld [vmem:[%s0 + $0x60] sm:$0xff]
    %v108 = vld [vmem:[%s0 + $0x68] sm:$0xff]
    %v109 = vld [vmem:[%s0 + $0x70] sm:$0xff]
    %v110 = vld [vmem:[%s0 + $0x78] sm:$0xff]
    %v111 = vld [vmem:[%s0 + $0x80] sm:$0xff]
    %v112 = vld [vmem:[%s0 + $0x88] sm:$0xff]
    %v113 = vld [vmem:[%s0 + $0x90] sm:$0xff]
    %v114 = vld [vmem:[%s0 + $0x98] sm:$0xff]
    %v115 = vld [vmem:[%s0 + $0xa0] sm:$0xff]
    %v116 = vld [vmem:[%s0 + $0xa8] sm:$0xff]
    %v117 = vld [vmem:[%s0 + $0xb0] sm:$0xff]
    %v118 = vld [vmem:[%s0 + $0xb8] sm:$0xff]
    %v119 = vld [vmem:[#allocation2] sm:$0xff]
    %v120 = vld [vmem:[#allocation2 + $0x8] sm:$0xff]
    %v121 = vld [vmem:[#allocation2 + $0x10] sm:$0xff]
    %v122 = vld [vmem:[#allocation2 + $0x18] sm:$0xff]
    %v123 = vld [vmem:[#allocation2 + $0x20] sm:$0xff]
    %v124 = vld [vmem:[#allocation2 + $0x28] sm:$0xff]
    %v125 = vld [vmem:[#allocation2 + $0x30] sm:$0xff]
    %v126 = vld [vmem:[#allocation2 + $0x38] sm:$0xff]
    %v127 = vld [vmem:[#allocation2 + $0x40] sm:$0xff]
    %v128 = vld [vmem:[#allocation2 + $0x48] sm:$0xff]
    %v129 = vld [vmem:[#allocation2 + $0x50] sm:$0xff]
    %v130 = vld [vmem:[#allocation2 + $0x58] sm:$0xff]
    %v131 = vld [vmem:[#allocation2 + $0x60] sm:$0xff]
    %v132 = vld [vmem:[#allocation2 + $0x68] sm:$0xff]
    %v133 = vld [vmem:[#allocation2 + $0x70] sm:$0xff]
    %v134 = vld [vmem:[#allocation2 + $0x78] sm:$0xff]
    %v135 = vld [vmem:[#allocation2 + $0x80] sm:$0xff]
    %v136 = vld [vmem:[#allocation2 + $0x88] sm:$0xff]
    %v137 = vld [vmem:[#allocation2 + $0x90] sm:$0xff]
    %v138 = vld [vmem:[#allocation2 + $0x98] sm:$0xff]
    %v139 = vld [vmem:[#allocation2 + $0xa0] sm:$0xff]
    %v140 = vld [vmem:[#allocation2 + $0xa8] sm:$0xff]
    %v141 = vld [vmem:[#allocation2 + $0xb0] sm:$0xff]
    %v142 = vld [vmem:[#allocation2 + $0xb8] sm:$0xff]
    %v143 = vld [vmem:[#allocation2 + $0xc0] sm:$0xff]
    %v144 = vld [vmem:[#allocation2 + $0xc8] sm:$0xff]
    %v145 = vld [vmem:[#allocation2 + $0xd0] sm:$0xff]
    %v146 = vld [vmem:[#allocation2 + $0xd8] sm:$0xff]
    %v147 = vld [vmem:[#allocation2 + $0xe0] sm:$0xff]
    %v148 = vld [vmem:[#allocation2 + $0xe8] sm:$0xff]
    %v149 = vld [vmem:[#allocation2 + $0xf0] sm:$0xff]
    %v150 = vld [vmem:[#allocation2 + $0xf8] sm:$0xff]
    %v151 = vld [vmem:[#allocation2 + $0x100] sm:$0xff]
    %v152 = vld [vmem:[#allocation2 + $0x108] sm:$0xff]
    %v153 = vld [vmem:[#allocation2 + $0x110] sm:$0xff]
    %v154 = vld [vmem:[#allocation2 + $0x118] sm:$0xff]
    %v155 = vld [vmem:[#allocation2 + $0x120] sm:$0xff]
    %v156 = vld [vmem:[#allocation2 + $0x128] sm:$0xff]
    %v157 = vld [vmem:[#allocation2 + $0x130] sm:$0xff]
    %v158 = vld [vmem:[#allocation2 + $0x138] sm:$0xff]
    %v159 = vld [vmem:[#allocation2 + $0x140] sm:$0xff]
    %v160 = vld [vmem:[#allocation2 + $0x148] sm:$0xff]
    %v161 = vld [vmem:[#allocation2 + $0x150] sm:$0xff]
    %v162 = vld [vmem:[#allocation2 + $0x158] sm:$0xff]
    %v163 = vld [vmem:[#allocation2 + $0x160] sm:$0xff]
    %v164 = vld [vmem:[#allocation2 + $0x168] sm:$0xff]
    %v165 = vld [vmem:[#allocation2 + $0x170] sm:$0xff]
    %v166 = vld [vmem:[#allocation2 + $0x178] sm:$0xff]
    %v167 = vld [vmem:[#allocation2 + $0x180] sm:$0xff]
    %v168 = vld [vmem:[#allocation2 + $0x188] sm:$0xff]
    %v169 = vld [vmem:[#allocation2 + $0x190] sm:$0xff]
    %v170 = vld [vmem:[#allocation2 + $0x198] sm:$0xff]
    %v171 = vld [vmem:[#allocation2 + $0x1a0] sm:$0xff]
    %v172 = vld [vmem:[#allocation2 + $0x1a8] sm:$0xff]
    %v173 = vld [vmem:[#allocation2 + $0x1b0] sm:$0xff]
    %v174 = vld [vmem:[#allocation2 + $0x1b8] sm:$0xff]
    %v175 = vld [vmem:[#allocation2 + $0x1c0] sm:$0xff]
    %v176 = vld [vmem:[#allocation2 + $0x1c8] sm:$0xff]
    %v177 = vld [vmem:[#allocation2 + $0x1d0] sm:$0xff]
    %v178 = vld [vmem:[#allocation2 + $0x1d8] sm:$0xff]
    %v179 = vld [vmem:[#allocation2 + $0x1e0] sm:$0xff]
    %v180 = vld [vmem:[#allocation2 + $0x1e8] sm:$0xff]
    %v181 = vld [vmem:[#allocation2 + $0x1f0] sm:$0xff]
    %v182 = vld [vmem:[#allocation2 + $0x1f8] sm:$0xff]
    %v183 = vld [vmem:[#allocation2 + $0x200] sm:$0xff]
    %v184 = vld [vmem:[#allocation2 + $0x208] sm:$0xff]
    %v185 = vld [vmem:[#allocation2 + $0x210] sm:$0xff]
    %v186 = vld [vmem:[#allocation2 + $0x218] sm:$0xff]
    %v187 = vld [vmem:[#allocation2 + $0x220] sm:$0xff]
    %v188 = vld [vmem:[#allocation2 + $0x228] sm:$0xff]
    %v189 = vld [vmem:[#allocation2 + $0x230] sm:$0xff]
    %v190 = vld [vmem:[#allocation2 + $0x238] sm:$0xff]
    %v191 = vld [vmem:[#allocation2 + $0x240] sm:$0xff]
    %v192 = vld [vmem:[#allocation2 + $0x248] sm:$0xff]
    %v193 = vld [vmem:[#allocation2 + $0x250] sm:$0xff]
    %v194 = vld [vmem:[#allocation2 + $0x258] sm:$0xff]
    %v195 = vld [vmem:[#allocation2 + $0x260] sm:$0xff]
    %v196 = vld [vmem:[#allocation2 + $0x268] sm:$0xff]
    %v197 = vld [vmem:[#allocation2 + $0x270] sm:$0xff]
    %v198 = vld [vmem:[#allocation2 + $0x278] sm:$0xff]
    %v199 = vld [vmem:[#allocation2 + $0x280] sm:$0xff]
    %v200 = vld [vmem:[#allocation2 + $0x288] sm:$0xff]
    %v201 = vld [vmem:[#allocation2 + $0x290] sm:$0xff]
    %v202 = vld [vmem:[#allocation2 + $0x298] sm:$0xff]
    %v203 = vld [vmem:[#allocation2 + $0x2a0] sm:$0xff]
    %v204 = vld [vmem:[#allocation2 + $0x2a8] sm:$0xff]
    %v205 = vld [vmem:[#allocation2 + $0x2b0] sm:$0xff]
    %v206 = vld [vmem:[#allocation2 + $0x2b8] sm:$0xff]
    %v207 = vld [vmem:[#allocation2 + $0x2c0] sm:$0xff]
    %v208 = vld [vmem:[#allocation2 + $0x2c8] sm:$0xff]
    %v209 = vld [vmem:[#allocation2 + $0x2d0] sm:$0xff]
    %v210 = vld [vmem:[#allocation2 + $0x2d8] sm:$0xff]
    %v211 = vld [vmem:[#allocation2 + $0x2e0] sm:$0xff]
    %v212 = vld [vmem:[#allocation2 + $0x2e8] sm:$0xff]
    %v213 = vld [vmem:[#allocation2 + $0x2f0] sm:$0xff]
    %v214 = vld [vmem:[#allocation2 + $0x2f8] sm:$0xff]
    %v215 = vld [vmem:[#allocation2 + $0x300] sm:$0xff]
    %v216 = vld [vmem:[#allocation2 + $0x308] sm:$0xff]
    %v217 = vld [vmem:[#allocation2 + $0x310] sm:$0xff]
    %v218 = vld [vmem:[#allocation2 + $0x318] sm:$0xff]
    %v219 = vld [vmem:[#allocation2 + $0x320] sm:$0xff]
    %v220 = vld [vmem:[#allocation2 + $0x328] sm:$0xff]
    %v221 = vld [vmem:[#allocation2 + $0x330] sm:$0xff]
    %v222 = vld [vmem:[#allocation2 + $0x338] sm:$0xff]
    %v223 = vld [vmem:[#allocation2 + $0x340] sm:$0xff]
    %v224 = vld [vmem:[#allocation2 + $0x348] sm:$0xff]
    %v225 = vld [vmem:[#allocation2 + $0x350] sm:$0xff]
    %v226 = vld [vmem:[#allocation2 + $0x358] sm:$0xff]
    %v227 = vld [vmem:[#allocation2 + $0x360] sm:$0xff]
    %v228 = vld [vmem:[#allocation2 + $0x368] sm:$0xff]
    %v229 = vld [vmem:[#allocation2 + $0x370] sm:$0xff]
    %v230 = vld [vmem:[#allocation2 + $0x378] sm:$0xff]
    %v231 = vld [vmem:[#allocation2 + $0x380] sm:$0xff]
    %v232 = vld [vmem:[#allocation2 + $0x388] sm:$0xff]
    %v233 = vld [vmem:[#allocation2 + $0x390] sm:$0xff]
    %v234 = vld [vmem:[#allocation2 + $0x398] sm:$0xff]
    %v235 = vld [vmem:[#allocation2 + $0x3a0] sm:$0xff]
    %v236 = vld [vmem:[#allocation2 + $0x3a8] sm:$0xff]
    %v237 = vld [vmem:[#allocation2 + $0x3b0] sm:$0xff]
    %v238 = vld [vmem:[#allocation2 + $0x3b8] sm:$0xff]
    %v239 = vld [vmem:[#allocation2 + $0x3c0] sm:$0xff]
    %v240 = vld [vmem:[#allocation2 + $0x3c8] sm:$0xff]
    %v241 = vld [vmem:[#allocation2 + $0x3d0] sm:$0xff]
    %v242 = vld [vmem:[#allocation2 + $0x3d8] sm:$0xff]
    %v243 = vld [vmem:[#allocation2 + $0x3e0] sm:$0xff]
    %v244 = vld [vmem:[#allocation2 + $0x3e8] sm:$0xff]
    %v245 = vld [vmem:[#allocation2 + $0x3f0] sm:$0xff]
    %v246 = vld [vmem:[#allocation2 + $0x3f8] sm:$0xff]
    %v247 = vld [vmem:[#allocation2 + $0x400] sm:$0xff]
    %v248 = vld [vmem:[#allocation2 + $0x408] sm:$0xff]
    %v249 = vld [vmem:[#allocation2 + $0x410] sm:$0xff]
    %v250 = vld [vmem:[#allocation2 + $0x418] sm:$0xff]
    %v251 = vld [vmem:[#allocation2 + $0x420] sm:$0xff]
    %v252 = vld [vmem:[#allocation2 + $0x428] sm:$0xff]
    %v253 = vld [vmem:[#allocation2 + $0x430] sm:$0xff]
    %v254 = vld [vmem:[#allocation2 + $0x438] sm:$0xff]
    %v255 = vld [vmem:[#allocation2 + $0x440] sm:$0xff]
    %v256 = vld [vmem:[#allocation2 + $0x448] sm:$0xff]
    %v257 = vld [vmem:[#allocation2 + $0x450] sm:$0xff]
    %v258 = vld [vmem:[#allocation2 + $0x458] sm:$0xff]
    %v259 = vld [vmem:[#allocation2 + $0x460] sm:$0xff]
    %v260 = vld [vmem:[#allocation2 + $0x468] sm:$0xff]
    %v261 = vld [vmem:[#allocation2 + $0x470] sm:$0xff]
    %v262 = vld [vmem:[#allocation2 + $0x478] sm:$0xff]
    %v263 = vld [vmem:[#allocation2 + $0x480] sm:$0xff]
    %v264 = vld [vmem:[#allocation2 + $0x488] sm:$0xff]
    %v265 = vld [vmem:[#allocation2 + $0x490] sm:$0xff]
    %v266 = vld [vmem:[#allocation2 + $0x498] sm:$0xff]
    %v267 = vld [vmem:[#allocation2 + $0x4a0] sm:$0xff]
    %v268 = vld [vmem:[#allocation2 + $0x4a8] sm:$0xff]
    %v269 = vld [vmem:[#allocation2 + $0x4b0] sm:$0xff]
    %v270 = vld [vmem:[#allocation2 + $0x4b8] sm:$0xff]
    %v271 = vld [vmem:[#allocation2 + $0x4c0] sm:$0xff]
    %v272 = vld [vmem:[#allocation2 + $0x4c8] sm:$0xff]
    %v273 = vld [vmem:[#allocation2 + $0x4d0] sm:$0xff]
    %v274 = vld [vmem:[#allocation2 + $0x4d8] sm:$0xff]
    %v275 = vld [vmem:[#allocation2 + $0x4e0] sm:$0xff]
    %v276 = vld [vmem:[#allocation2 + $0x4e8] sm:$0xff]
    %v277 = vld [vmem:[#allocation2 + $0x4f0] sm:$0xff]
    %v278 = vld [vmem:[#allocation2 + $0x4f8] sm:$0xff]
    %v279 = vld [vmem:[#allocation2 + $0x500] sm:$0xff]
    %v280 = vld [vmem:[#allocation2 + $0x508] sm:$0xff]
    %v281 = vld [vmem:[#allocation2 + $0x510] sm:$0xff]
    %v282 = vld [vmem:[#allocation2 + $0x518] sm:$0xff]
    %v283 = vld [vmem:[#allocation2 + $0x520] sm:$0xff]
    %v284 = vld [vmem:[#allocation2 + $0x528] sm:$0xff]
    %v285 = vld [vmem:[#allocation2 + $0x530] sm:$0xff]
    %v286 = vld [vmem:[#allocation2 + $0x538] sm:$0xff]
    %v287 = vld [vmem:[#allocation2 + $0x540] sm:$0xff]
    %v288 = vld [vmem:[#allocation2 + $0x548] sm:$0xff]
    %v289 = vld [vmem:[#allocation2 + $0x550] sm:$0xff]
    %v290 = vld [vmem:[#allocation2 + $0x558] sm:$0xff]
    %v291 = vld [vmem:[#allocation2 + $0x560] sm:$0xff]
    %v292 = vld [vmem:[#allocation2 + $0x568] sm:$0xff]
    %v293 = vld [vmem:[#allocation2 + $0x570] sm:$0xff]
    %v294 = vld [vmem:[#allocation2 + $0x578] sm:$0xff]
    %v295 = vld [vmem:[#allocation2 + $0x580] sm:$0xff]
    %v296 = vld [vmem:[#allocation2 + $0x588] sm:$0xff]
    %v297 = vld [vmem:[#allocation2 + $0x590] sm:$0xff]
    %v298 = vld [vmem:[#allocation2 + $0x598] sm:$0xff]
    %v299 = vld [vmem:[#allocation2 + $0x5a0] sm:$0xff]
    %v300 = vld [vmem:[#allocation2 + $0x5a8] sm:$0xff]
    %v301 = vld [vmem:[#allocation2 + $0x5b0] sm:$0xff]
    %v302 = vld [vmem:[#allocation2 + $0x5b8] sm:$0xff]
    %v303 = vld [vmem:[#allocation2 + $0x5c0] sm:$0xff]
    %v304 = vld [vmem:[#allocation2 + $0x5c8] sm:$0xff]
    %v305 = vld [vmem:[#allocation2 + $0x5d0] sm:$0xff]
    %v306 = vld [vmem:[#allocation2 + $0x5d8] sm:$0xff]
    %v307 = vld [vmem:[#allocation2 + $0x5e0] sm:$0xff]
    %v308 = vld [vmem:[#allocation2 + $0x5e8] sm:$0xff]
    %v309 = vld [vmem:[#allocation2 + $0x5f0] sm:$0xff]
    %v310 = vld [vmem:[#allocation2 + $0x5f8] sm:$0xff]
    %v311 = vld [vmem:[#allocation2 + $0x600] sm:$0xff]
    %v312 = vld [vmem:[#allocation2 + $0x608] sm:$0xff]
    %v313 = vld [vmem:[#allocation2 + $0x610] sm:$0xff]
    %v314 = vld [vmem:[#allocation2 + $0x618] sm:$0xff]
    %v315 = vld [vmem:[#allocation2 + $0x620] sm:$0xff]
    %v316 = vld [vmem:[#allocation2 + $0x628] sm:$0xff]
    %v317 = vld [vmem:[#allocation2 + $0x630] sm:$0xff]
    %v318 = vld [vmem:[#allocation2 + $0x638] sm:$0xff]
    %v319 = vld [vmem:[#allocation2 + $0x640] sm:$0xff]
    %v320 = vld [vmem:[#allocation2 + $0x648] sm:$0xff]
    %v321 = vld [vmem:[#allocation2 + $0x650] sm:$0xff]
    %v322 = vld [vmem:[#allocation2 + $0x658] sm:$0xff]
    %v323 = vld [vmem:[#allocation2 + $0x660] sm:$0xff]
    %v324 = vld [vmem:[#allocation2 + $0x668] sm:$0xff]
    %v325 = vld [vmem:[#allocation2 + $0x670] sm:$0xff]
    %v326 = vld [vmem:[#allocation2 + $0x678] sm:$0xff]
    %v327 = vld [vmem:[#allocation2 + $0x680] sm:$0xff]
    %v328 = vld [vmem:[#allocation2 + $0x688] sm:$0xff]
    %v329 = vld [vmem:[#allocation2 + $0x690] sm:$0xff]
    %v330 = vld [vmem:[#allocation2 + $0x698] sm:$0xff]
    %v331 = vld [vmem:[#allocation2 + $0x6a0] sm:$0xff]
    %v332 = vld [vmem:[#allocation2 + $0x6a8] sm:$0xff]
    %v333 = vld [vmem:[#allocation2 + $0x6b0] sm:$0xff]
    %v334 = vld [vmem:[#allocation2 + $0x6b8] sm:$0xff]
    %v335 = vld [vmem:[#allocation2 + $0x6c0] sm:$0xff]
    %v336 = vld [vmem:[#allocation2 + $0x6c8] sm:$0xff]
    %v337 = vld [vmem:[#allocation2 + $0x6d0] sm:$0xff]
    %v338 = vld [vmem:[#allocation2 + $0x6d8] sm:$0xff]
    %v339 = vld [vmem:[#allocation2 + $0x6e0] sm:$0xff]
    %v340 = vld [vmem:[#allocation2 + $0x6e8] sm:$0xff]
    %v341 = vld [vmem:[#allocation2 + $0x6f0] sm:$0xff]
    %v342 = vld [vmem:[#allocation2 + $0x6f8] sm:$0xff]
    %v343 = vld [vmem:[#allocation2 + $0x700] sm:$0xff]
    %v344 = vld [vmem:[#allocation2 + $0x708] sm:$0xff]
    %v345 = vld [vmem:[#allocation2 + $0x710] sm:$0xff]
    %v346 = vld [vmem:[#allocation2 + $0x718] sm:$0xff]
    %v347 = vld [vmem:[#allocation2 + $0x720] sm:$0xff]
    %v348 = vld [vmem:[#allocation2 + $0x728] sm:$0xff]
    %v349 = vld [vmem:[#allocation2 + $0x730] sm:$0xff]
    %v350 = vld [vmem:[#allocation2 + $0x738] sm:$0xff]
    %v351 = vld [vmem:[#allocation2 + $0x740] sm:$0xff]
    %v352 = vld [vmem:[#allocation2 + $0x748] sm:$0xff]
    %v353 = vld [vmem:[#allocation2 + $0x750] sm:$0xff]
    %v354 = vld [vmem:[#allocation2 + $0x758] sm:$0xff]
    %v355 = vld [vmem:[#allocation2 + $0x760] sm:$0xff]
    %v356 = vld [vmem:[#allocation2 + $0x768] sm:$0xff]
    %v357 = vld [vmem:[#allocation2 + $0x770] sm:$0xff]
    %v358 = vld [vmem:[#allocation2 + $0x778] sm:$0xff]
    %v359 = vld [vmem:[#allocation2 + $0x780] sm:$0xff]
    %v360 = vld [vmem:[#allocation2 + $0x788] sm:$0xff]
    %v361 = vld [vmem:[#allocation2 + $0x790] sm:$0xff]
    %v362 = vld [vmem:[#allocation2 + $0x798] sm:$0xff]
    %v363 = vld [vmem:[#allocation2 + $0x7a0] sm:$0xff]
    %v364 = vld [vmem:[#allocation2 + $0x7a8] sm:$0xff]
    %v365 = vld [vmem:[#allocation2 + $0x7b0] sm:$0xff]
    %v366 = vld [vmem:[#allocation2 + $0x7b8] sm:$0xff]
    %v367 = vld [vmem:[#allocation2 + $0x7c0] sm:$0xff]
    %v368 = vld [vmem:[#allocation2 + $0x7c8] sm:$0xff]
    %v369 = vld [vmem:[#allocation2 + $0x7d0] sm:$0xff]
    %v370 = vld [vmem:[#allocation2 + $0x7d8] sm:$0xff]
    %v371 = vld [vmem:[#allocation2 + $0x7e0] sm:$0xff]
    %v372 = vld [vmem:[#allocation2 + $0x7e8] sm:$0xff]
    %v373 = vld [vmem:[#allocation2 + $0x7f0] sm:$0xff]
    %v374 = vld [vmem:[#allocation2 + $0x7f8] sm:$0xff]
    %v375 = vld [vmem:[#allocation2 + $0x800] sm:$0xff]
    %v376 = vld [vmem:[#allocation2 + $0x808] sm:$0xff]
    %v377 = vld [vmem:[#allocation2 + $0x810] sm:$0xff]
    %v378 = vld [vmem:[#allocation2 + $0x818] sm:$0xff]
    %v379 = vld [vmem:[#allocation2 + $0x820] sm:$0xff]
    %v380 = vld [vmem:[#allocation2 + $0x828] sm:$0xff]
    %v381 = vld [vmem:[#allocation2 + $0x830] sm:$0xff]
    %v382 = vld [vmem:[#allocation2 + $0x838] sm:$0xff]
    %v383 = vld [vmem:[#allocation2 + $0x840] sm:$0xff]
    %v384 = vld [vmem:[#allocation2 + $0x848] sm:$0xff]
    %v385 = vld [vmem:[#allocation2 + $0x850] sm:$0xff]
    %v386 = vld [vmem:[#allocation2 + $0x858] sm:$0xff]
    %v387 = vld [vmem:[#allocation2 + $0x860] sm:$0xff]
    %v388 = vld [vmem:[#allocation2 + $0x868] sm:$0xff]
    %v389 = vld [vmem:[#allocation2 + $0x870] sm:$0xff]
    %v390 = vld [vmem:[#allocation2 + $0x878] sm:$0xff]
    %v391 = vld [vmem:[#allocation2 + $0x880] sm:$0xff]
    %v392 = vld [vmem:[#allocation2 + $0x888] sm:$0xff]
    %v393 = vld [vmem:[#allocation2 + $0x890] sm:$0xff]
    %v394 = vld [vmem:[#allocation2 + $0x898] sm:$0xff]
    %v395 = vld [vmem:[#allocation2 + $0x8a0] sm:$0xff]
    %v396 = vld [vmem:[#allocation2 + $0x8a8] sm:$0xff]
    %v397 = vld [vmem:[#allocation2 + $0x8b0] sm:$0xff]
    %v398 = vld [vmem:[#allocation2 + $0x8b8] sm:$0xff]
    %v399 = vld [vmem:[#allocation2 + $0x8c0] sm:$0xff]
    %v400 = vld [vmem:[#allocation2 + $0x8c8] sm:$0xff]
    %v401 = vld [vmem:[#allocation2 + $0x8d0] sm:$0xff]
    %v402 = vld [vmem:[#allocation2 + $0x8d8] sm:$0xff]
    %v403 = vld [vmem:[#allocation2 + $0x8e0] sm:$0xff]
    %v404 = vld [vmem:[#allocation2 + $0x8e8] sm:$0xff]
    %v405 = vld [vmem:[#allocation2 + $0x8f0] sm:$0xff]
    %v406 = vld [vmem:[#allocation2 + $0x8f8] sm:$0xff]
    %v407 = vld [vmem:[#allocation2 + $0x900] sm:$0xff]
    %v408 = vld [vmem:[#allocation2 + $0x908] sm:$0xff]
    %v409 = vld [vmem:[#allocation2 + $0x910] sm:$0xff]
    %v410 = vld [vmem:[#allocation2 + $0x918] sm:$0xff]
    %v411 = vld [vmem:[#allocation2 + $0x920] sm:$0xff]
    %v412 = vld [vmem:[#allocation2 + $0x928] sm:$0xff]
    %v413 = vld [vmem:[#allocation2 + $0x930] sm:$0xff]
    %v414 = vld [vmem:[#allocation2 + $0x938] sm:$0xff]
    %v415 = vld [vmem:[#allocation2 + $0x940] sm:$0xff]
    %v416 = vld [vmem:[#allocation2 + $0x948] sm:$0xff]
    %v417 = vld [vmem:[#allocation2 + $0x950] sm:$0xff]
    %v418 = vld [vmem:[#allocation2 + $0x958] sm:$0xff]
    %v419 = vld [vmem:[#allocation2 + $0x960] sm:$0xff]
    %v420 = vld [vmem:[#allocation2 + $0x968] sm:$0xff]
    %v421 = vld [vmem:[#allocation2 + $0x970] sm:$0xff]
    %v422 = vld [vmem:[#allocation2 + $0x978] sm:$0xff]
    %v423 = vld [vmem:[#allocation2 + $0x980] sm:$0xff]
    %v424 = vld [vmem:[#allocation2 + $0x988] sm:$0xff]
    %v425 = vld [vmem:[#allocation2 + $0x990] sm:$0xff]
    %v426 = vld [vmem:[#allocation2 + $0x998] sm:$0xff]
    %v427 = vld [vmem:[#allocation2 + $0x9a0] sm:$0xff]
    %v428 = vld [vmem:[#allocation2 + $0x9a8] sm:$0xff]
    %v429 = vld [vmem:[#allocation2 + $0x9b0] sm:$0xff]
    %v430 = vld [vmem:[#allocation2 + $0x9b8] sm:$0xff]
    %v431 = vld [vmem:[#allocation2 + $0x9c0] sm:$0xff]
    %v432 = vld [vmem:[#allocation2 + $0x9c8] sm:$0xff]
    %v433 = vld [vmem:[#allocation2 + $0x9d0] sm:$0xff]
    %v434 = vld [vmem:[#allocation2 + $0x9d8] sm:$0xff]
    %v435 = vld [vmem:[#allocation2 + $0x9e0] sm:$0xff]
    %v436 = vld [vmem:[#allocation2 + $0x9e8] sm:$0xff]
    %v437 = vld [vmem:[#allocation2 + $0x9f0] sm:$0xff]
    %v438 = vld [vmem:[#allocation2 + $0x9f8] sm:$0xff]
    %v439 = vld [vmem:[#allocation2 + $0xa00] sm:$0xff]
    %v440 = vld [vmem:[#allocation2 + $0xa08] sm:$0xff]
    %v441 = vld [vmem:[#allocation2 + $0xa10] sm:$0xff]
    %v442 = vld [vmem:[#allocation2 + $0xa18] sm:$0xff]
    %v443 = vld [vmem:[#allocation2 + $0xa20] sm:$0xff]
    %v444 = vld [vmem:[#allocation2 + $0xa28] sm:$0xff]
    %v445 = vld [vmem:[#allocation2 + $0xa30] sm:$0xff]
    %v446 = vld [vmem:[#allocation2 + $0xa38] sm:$0xff]
    %v447 = vld [vmem:[#allocation2 + $0xa40] sm:$0xff]
    %v448 = vld [vmem:[#allocation2 + $0xa48] sm:$0xff]
    %v449 = vld [vmem:[#allocation2 + $0xa50] sm:$0xff]
    %v450 = vld [vmem:[#allocation2 + $0xa58] sm:$0xff]
    %v451 = vld [vmem:[#allocation2 + $0xa60] sm:$0xff]
    %v452 = vld [vmem:[#allocation2 + $0xa68] sm:$0xff]
    %v453 = vld [vmem:[#allocation2 + $0xa70] sm:$0xff]
    %v454 = vld [vmem:[#allocation2 + $0xa78] sm:$0xff]
    %v455 = vld [vmem:[#allocation2 + $0xa80] sm:$0xff]
    %v456 = vld [vmem:[#allocation2 + $0xa88] sm:$0xff]
    %v457 = vld [vmem:[#allocation2 + $0xa90] sm:$0xff]
    %v458 = vld [vmem:[#allocation2 + $0xa98] sm:$0xff]
    %v459 = vld [vmem:[#allocation2 + $0xaa0] sm:$0xff]
    %v460 = vld [vmem:[#allocation2 + $0xaa8] sm:$0xff]
    %v461 = vld [vmem:[#allocation2 + $0xab0] sm:$0xff]
    %v462 = vld [vmem:[#allocation2 + $0xab8] sm:$0xff]
    %v463 = vld [vmem:[#allocation2 + $0xac0] sm:$0xff]
    %v464 = vld [vmem:[#allocation2 + $0xac8] sm:$0xff]
    %v465 = vld [vmem:[#allocation2 + $0xad0] sm:$0xff]
    %v466 = vld [vmem:[#allocation2 + $0xad8] sm:$0xff]
    %v467 = vld [vmem:[#allocation2 + $0xae0] sm:$0xff]
    %v468 = vld [vmem:[#allocation2 + $0xae8] sm:$0xff]
    %v469 = vld [vmem:[#allocation2 + $0xaf0] sm:$0xff]
    %v470 = vld [vmem:[#allocation2 + $0xaf8] sm:$0xff]
    %v471 = vld [vmem:[#allocation2 + $0xb00] sm:$0xff]
    %v472 = vld [vmem:[#allocation2 + $0xb08] sm:$0xff]
    %v473 = vld [vmem:[#allocation2 + $0xb10] sm:$0xff]
    %v474 = vld [vmem:[#allocation2 + $0xb18] sm:$0xff]
    %v475 = vld [vmem:[#allocation2 + $0xb20] sm:$0xff]
    %v476 = vld [vmem:[#allocation2 + $0xb28] sm:$0xff]
    %v477 = vld [vmem:[#allocation2 + $0xb30] sm:$0xff]
    %v478 = vld [vmem:[#allocation2 + $0xb38] sm:$0xff]
    %v479 = vld [vmem:[#allocation2 + $0xb40] sm:$0xff]
    %v480 = vld [vmem:[#allocation2 + $0xb48] sm:$0xff]
    %v481 = vld [vmem:[#allocation2 + $0xb50] sm:$0xff]
    %v482 = vld [vmem:[#allocation2 + $0xb58] sm:$0xff]
    %v483 = vld [vmem:[#allocation2 + $0xb60] sm:$0xff]
    %v484 = vld [vmem:[#allocation2 + $0xb68] sm:$0xff]
    %v485 = vld [vmem:[#allocation2 + $0xb70] sm:$0xff]
    %v486 = vld [vmem:[#allocation2 + $0xb78] sm:$0xff]
    %v487 = vld [vmem:[#allocation2 + $0xb80] sm:$0xff]
    %v488 = vld [vmem:[#allocation2 + $0xb88] sm:$0xff]
    %v489 = vld [vmem:[#allocation2 + $0xb90] sm:$0xff]
    %v490 = vld [vmem:[#allocation2 + $0xb98] sm:$0xff]
    %v491 = vld [vmem:[#allocation2 + $0xba0] sm:$0xff]
    %v492 = vld [vmem:[#allocation2 + $0xba8] sm:$0xff]
    %v493 = vld [vmem:[#allocation2 + $0xbb0] sm:$0xff]
    %v494 = vld [vmem:[#allocation2 + $0xbb8] sm:$0xff]
    %v495 = vld [vmem:[#allocation2 + $0xbc0] sm:$0xff]
    %v496 = vld [vmem:[#allocation2 + $0xbc8] sm:$0xff]
    %v497 = vld [vmem:[#allocation2 + $0xbd0] sm:$0xff]
    %v498 = vld [vmem:[#allocation2 + $0xbd8] sm:$0xff]
    %v499 = vld [vmem:[#allocation2 + $0xbe0] sm:$0xff]
    %v500 = vld [vmem:[#allocation2 + $0xbe8] sm:$0xff]
    %v501 = vld [vmem:[#allocation2 + $0xbf0] sm:$0xff]
    %v502 = vld [vmem:[#allocation2 + $0xbf8] sm:$0xff]
    %v503 = vld [vmem:[#allocation2 + $0xc00] sm:$0xff]
    %v504 = vld [vmem:[#allocation2 + $0xc08] sm:$0xff]
    %v505 = vld [vmem:[#allocation2 + $0xc10] sm:$0xff]
    %v506 = vld [vmem:[#allocation2 + $0xc18] sm:$0xff]
    %v507 = vld [vmem:[#allocation2 + $0xc20] sm:$0xff]
    %v508 = vld [vmem:[#allocation2 + $0xc28] sm:$0xff]
    %v509 = vld [vmem:[#allocation2 + $0xc30] sm:$0xff]
    %v510 = vld [vmem:[#allocation2 + $0xc38] sm:$0xff]
    %v511 = vld [vmem:[#allocation2 + $0xc40] sm:$0xff]
    %v512 = vld [vmem:[#allocation2 + $0xc48] sm:$0xff]
    %v513 = vld [vmem:[#allocation2 + $0xc50] sm:$0xff]
    %v514 = vld [vmem:[#allocation2 + $0xc58] sm:$0xff]
    %v515 = vld [vmem:[#allocation2 + $0xc60] sm:$0xff]
    %v516 = vld [vmem:[#allocation2 + $0xc68] sm:$0xff]
    %v517 = vld [vmem:[#allocation2 + $0xc70] sm:$0xff]
    %v518 = vld [vmem:[#allocation2 + $0xc78] sm:$0xff]
    %v519 = vld [vmem:[#allocation2 + $0xc80] sm:$0xff]
    %v520 = vld [vmem:[#allocation2 + $0xc88] sm:$0xff]
    %v521 = vld [vmem:[#allocation2 + $0xc90] sm:$0xff]
    %v522 = vld [vmem:[#allocation2 + $0xc98] sm:$0xff]
    %v523 = vld [vmem:[#allocation2 + $0xca0] sm:$0xff]
    %v524 = vld [vmem:[#allocation2 + $0xca8] sm:$0xff]
    %v525 = vld [vmem:[#allocation2 + $0xcb0] sm:$0xff]
    %v526 = vld [vmem:[#allocation2 + $0xcb8] sm:$0xff]
    %v527 = vld [vmem:[#allocation2 + $0xcc0] sm:$0xff]
    %v528 = vld [vmem:[#allocation2 + $0xcc8] sm:$0xff]
    %v529 = vld [vmem:[#allocation2 + $0xcd0] sm:$0xff]
    %v530 = vld [vmem:[#allocation2 + $0xcd8] sm:$0xff]
    %v531 = vld [vmem:[#allocation2 + $0xce0] sm:$0xff]
    %v532 = vld [vmem:[#allocation2 + $0xce8] sm:$0xff]
    %v533 = vld [vmem:[#allocation2 + $0xcf0] sm:$0xff]
    %v534 = vld [vmem:[#allocation2 + $0xcf8] sm:$0xff]
    %v535 = vld [vmem:[#allocation2 + $0xd00] sm:$0xff]
    %v536 = vld [vmem:[#allocation2 + $0xd08] sm:$0xff]
    %v537 = vld [vmem:[#allocation2 + $0xd10] sm:$0xff]
    %v538 = vld [vmem:[#allocation2 + $0xd18] sm:$0xff]
    %v539 = vld [vmem:[#allocation2 + $0xd20] sm:$0xff]
    %v540 = vld [vmem:[#allocation2 + $0xd28] sm:$0xff]
    %v541 = vld [vmem:[#allocation2 + $0xd30] sm:$0xff]
    %v542 = vld [vmem:[#allocation2 + $0xd38] sm:$0xff]
    %v543 = vld [vmem:[#allocation2 + $0xd40] sm:$0xff]
    %v544 = vld [vmem:[#allocation2 + $0xd48] sm:$0xff]
    %v545 = vld [vmem:[#allocation2 + $0xd50] sm:$0xff]
    %v546 = vld [vmem:[#allocation2 + $0xd58] sm:$0xff]
    %v547 = vld [vmem:[#allocation2 + $0xd60] sm:$0xff]
    %v548 = vld [vmem:[#allocation2 + $0xd68] sm:$0xff]
    %v549 = vld [vmem:[#allocation2 + $0xd70] sm:$0xff]
    %v550 = vld [vmem:[#allocation2 + $0xd78] sm:$0xff]
    %v551 = vld [vmem:[#allocation2 + $0xd80] sm:$0xff]
    %v552 = vld [vmem:[#allocation2 + $0xd88] sm:$0xff]
    %v553 = vld [vmem:[#allocation2 + $0xd90] sm:$0xff]
    %v554 = vld [vmem:[#allocation2 + $0xd98] sm:$0xff]
    %v555 = vld [vmem:[#allocation2 + $0xda0] sm:$0xff]
    %v556 = vld [vmem:[#allocation2 + $0xda8] sm:$0xff]
    %v557 = vld [vmem:[#allocation2 + $0xdb0] sm:$0xff]
    %v558 = vld [vmem:[#allocation2 + $0xdb8] sm:$0xff]
    %v559 = vld [vmem:[#allocation2 + $0xdc0] sm:$0xff]
    %v560 = vld [vmem:[#allocation2 + $0xdc8] sm:$0xff]
    %v561 = vld [vmem:[#allocation2 + $0xdd0] sm:$0xff]
    %v562 = vld [vmem:[#allocation2 + $0xdd8] sm:$0xff]
    %v563 = vld [vmem:[#allocation2 + $0xde0] sm:$0xff]
    %v564 = vld [vmem:[#allocation2 + $0xde8] sm:$0xff]
    %v565 = vld [vmem:[#allocation2 + $0xdf0] sm:$0xff]
    %v566 = vld [vmem:[#allocation2 + $0xdf8] sm:$0xff]
    %v567 = vld [vmem:[#allocation2 + $0xe00] sm:$0xff]
    %v568 = vld [vmem:[#allocation2 + $0xe08] sm:$0xff]
    %v569 = vld [vmem:[#allocation2 + $0xe10] sm:$0xff]
    %v570 = vld [vmem:[#allocation2 + $0xe18] sm:$0xff]
    %v571 = vld [vmem:[#allocation2 + $0xe20] sm:$0xff]
    %v572 = vld [vmem:[#allocation2 + $0xe28] sm:$0xff]
    %v573 = vld [vmem:[#allocation2 + $0xe30] sm:$0xff]
    %v574 = vld [vmem:[#allocation2 + $0xe38] sm:$0xff]
    %v575 = vld [vmem:[#allocation2 + $0xe40] sm:$0xff]
    %v576 = vld [vmem:[#allocation2 + $0xe48] sm:$0xff]
    %v577 = vld [vmem:[#allocation2 + $0xe50] sm:$0xff]
    %v578 = vld [vmem:[#allocation2 + $0xe58] sm:$0xff]
    %v579 = vld [vmem:[#allocation2 + $0xe60] sm:$0xff]
    %v580 = vld [vmem:[#allocation2 + $0xe68] sm:$0xff]
    %v581 = vld [vmem:[#allocation2 + $0xe70] sm:$0xff]
    %v582 = vld [vmem:[#allocation2 + $0xe78] sm:$0xff]
    %v583 = vld [vmem:[#allocation2 + $0xe80] sm:$0xff]
    %v584 = vld [vmem:[#allocation2 + $0xe88] sm:$0xff]
    %v585 = vld [vmem:[#allocation2 + $0xe90] sm:$0xff]
    %v586 = vld [vmem:[#allocation2 + $0xe98] sm:$0xff]
    %v587 = vld [vmem:[#allocation2 + $0xea0] sm:$0xff]
    %v588 = vld [vmem:[#allocation2 + $0xea8] sm:$0xff]
    %v589 = vld [vmem:[#allocation2 + $0xeb0] sm:$0xff]
    %v590 = vld [vmem:[#allocation2 + $0xeb8] sm:$0xff]
    %v591 = vld [vmem:[#allocation2 + $0xec0] sm:$0xff]
    %v592 = vld [vmem:[#allocation2 + $0xec8] sm:$0xff]
    %v593 = vld [vmem:[#allocation2 + $0xed0] sm:$0xff]
    %v594 = vld [vmem:[#allocation2 + $0xed8] sm:$0xff]
    %v595 = vld [vmem:[#allocation2 + $0xee0] sm:$0xff]
    %v596 = vld [vmem:[#allocation2 + $0xee8] sm:$0xff]
    %v597 = vld [vmem:[#allocation2 + $0xef0] sm:$0xff]
    %v598 = vld [vmem:[#allocation2 + $0xef8] sm:$0xff]
    %v599 = vld [vmem:[#allocation2 + $0xf00] sm:$0xff]
    %v600 = vld [vmem:[#allocation2 + $0xf08] sm:$0xff]
    %v601 = vld [vmem:[#allocation2 + $0xf10] sm:$0xff]
    %v602 = vld [vmem:[#allocation2 + $0xf18] sm:$0xff]
    %v603 = vld [vmem:[#allocation2 + $0xf20] sm:$0xff]
    %v604 = vld [vmem:[#allocation2 + $0xf28] sm:$0xff]
    %v605 = vld [vmem:[#allocation2 + $0xf30] sm:$0xff]
    %v606 = vld [vmem:[#allocation2 + $0xf38] sm:$0xff]
    %v607 = vld [vmem:[#allocation2 + $0xf40] sm:$0xff]
    %v608 = vld [vmem:[#allocation2 + $0xf48] sm:$0xff]
    %v609 = vld [vmem:[#allocation2 + $0xf50] sm:$0xff]
    %v610 = vld [vmem:[#allocation2 + $0xf58] sm:$0xff]
    %v611 = vld [vmem:[#allocation2 + $0xf60] sm:$0xff]
    %v612 = vld [vmem:[#allocation2 + $0xf68] sm:$0xff]
    %v613 = vld [vmem:[#allocation2 + $0xf70] sm:$0xff]
    %v614 = vld [vmem:[#allocation2 + $0xf78] sm:$0xff]
    %v615 = vld [vmem:[#allocation2 + $0xf80] sm:$0xff]
    %v616 = vld [vmem:[#allocation2 + $0xf88] sm:$0xff]
    %v617 = vld [vmem:[#allocation2 + $0xf90] sm:$0xff]
    %v618 = vld [vmem:[#allocation2 + $0xf98] sm:$0xff]
    %v619 = vld [vmem:[#allocation2 + $0xfa0] sm:$0xff]
    %v620 = vld [vmem:[#allocation2 + $0xfa8] sm:$0xff]
    %v621 = vld [vmem:[#allocation2 + $0xfb0] sm:$0xff]
    %v622 = vld [vmem:[#allocation2 + $0xfb8] sm:$0xff]
    %v623 = vld [vmem:[#allocation2 + $0xfc0] sm:$0xff]
    %v624 = vld [vmem:[#allocation2 + $0xfc8] sm:$0xff]
    %v625 = vld [vmem:[#allocation2 + $0xfd0] sm:$0xff]
    %v626 = vld [vmem:[#allocation2 + $0xfd8] sm:$0xff]
    %v627 = vld [vmem:[#allocation2 + $0xfe0] sm:$0xff]
    %v628 = vld [vmem:[#allocation2 + $0xfe8] sm:$0xff]
    %v629 = vld [vmem:[#allocation2 + $0xff0] sm:$0xff]
    %v630 = vld [vmem:[#allocation2 + $0xff8] sm:$0xff]
    %v631 = vld [vmem:[#allocation2 + $0x1000] sm:$0xff]
    %v632 = vld [vmem:[#allocation2 + $0x1008] sm:$0xff]
    %v633 = vld [vmem:[#allocation2 + $0x1010] sm:$0xff]
    %v634 = vld [vmem:[#allocation2 + $0x1018] sm:$0xff]
    %v635 = vld [vmem:[#allocation2 + $0x1020] sm:$0xff]
    %v636 = vld [vmem:[#allocation2 + $0x1028] sm:$0xff]
    %v637 = vld [vmem:[#allocation2 + $0x1030] sm:$0xff]
    %v638 = vld [vmem:[#allocation2 + $0x1038] sm:$0xff]
    %v639 = vld [vmem:[#allocation2 + $0x1040] sm:$0xff]
    %v640 = vld [vmem:[#allocation2 + $0x1048] sm:$0xff]
    %v641 = vld [vmem:[#allocation2 + $0x1050] sm:$0xff]
    %v642 = vld [vmem:[#allocation2 + $0x1058] sm:$0xff]
    %v643 = vld [vmem:[#allocation2 + $0x1060] sm:$0xff]
    %v644 = vld [vmem:[#allocation2 + $0x1068] sm:$0xff]
    %v645 = vld [vmem:[#allocation2 + $0x1070] sm:$0xff]
    %v646 = vld [vmem:[#allocation2 + $0x1078] sm:$0xff]
    %v647 = vld [vmem:[#allocation2 + $0x1080] sm:$0xff]
    %v648 = vld [vmem:[#allocation2 + $0x1088] sm:$0xff]
    %v649 = vld [vmem:[#allocation2 + $0x1090] sm:$0xff]
    %v650 = vld [vmem:[#allocation2 + $0x1098] sm:$0xff]
    %v651 = vld [vmem:[#allocation2 + $0x10a0] sm:$0xff]
    %v652 = vld [vmem:[#allocation2 + $0x10a8] sm:$0xff]
    %v653 = vld [vmem:[#allocation2 + $0x10b0] sm:$0xff]
    %v654 = vld [vmem:[#allocation2 + $0x10b8] sm:$0xff]
    %v655 = vld [vmem:[#allocation2 + $0x10c0] sm:$0xff]
    %v656 = vld [vmem:[#allocation2 + $0x10c8] sm:$0xff]
    %v657 = vld [vmem:[#allocation2 + $0x10d0] sm:$0xff]
    %v658 = vld [vmem:[#allocation2 + $0x10d8] sm:$0xff]
    %v659 = vld [vmem:[#allocation2 + $0x10e0] sm:$0xff]
    %v660 = vld [vmem:[#allocation2 + $0x10e8] sm:$0xff]
    %v661 = vld [vmem:[#allocation2 + $0x10f0] sm:$0xff]
    %v662 = vld [vmem:[#allocation2 + $0x10f8] sm:$0xff]
    %v663 = vld [vmem:[#allocation2 + $0x1100] sm:$0xff]
    %v664 = vld [vmem:[#allocation2 + $0x1108] sm:$0xff]
    %v665 = vld [vmem:[#allocation2 + $0x1110] sm:$0xff]
    %v666 = vld [vmem:[#allocation2 + $0x1118] sm:$0xff]
    %v667 = vld [vmem:[#allocation2 + $0x1120] sm:$0xff]
    %v668 = vld [vmem:[#allocation2 + $0x1128] sm:$0xff]
    %v669 = vld [vmem:[#allocation2 + $0x1130] sm:$0xff]
    %v670 = vld [vmem:[#allocation2 + $0x1138] sm:$0xff]
    %v671 = vld [vmem:[#allocation2 + $0x1140] sm:$0xff]
    %v672 = vld [vmem:[#allocation2 + $0x1148] sm:$0xff]
    %v673 = vld [vmem:[#allocation2 + $0x1150] sm:$0xff]
    %v674 = vld [vmem:[#allocation2 + $0x1158] sm:$0xff]
    %v675 = vld [vmem:[#allocation2 + $0x1160] sm:$0xff]
    %v676 = vld [vmem:[#allocation2 + $0x1168] sm:$0xff]
    %v677 = vld [vmem:[#allocation2 + $0x1170] sm:$0xff]
    %v678 = vld [vmem:[#allocation2 + $0x1178] sm:$0xff]
    %v679 = vld [vmem:[#allocation2 + $0x1180] sm:$0xff]
    %v680 = vld [vmem:[#allocation2 + $0x1188] sm:$0xff]
    %v681 = vld [vmem:[#allocation2 + $0x1190] sm:$0xff]
    %v682 = vld [vmem:[#allocation2 + $0x1198] sm:$0xff]
    %v683 = vld [vmem:[#allocation2 + $0x11a0] sm:$0xff]
    %v684 = vld [vmem:[#allocation2 + $0x11a8] sm:$0xff]
    %v685 = vld [vmem:[#allocation2 + $0x11b0] sm:$0xff]
    %v686 = vld [vmem:[#allocation2 + $0x11b8] sm:$0xff]
    %v687 = vld [vmem:[#allocation2 + $0x11c0] sm:$0xff]
    %v688 = vld [vmem:[#allocation2 + $0x11c8] sm:$0xff]
    %v689 = vld [vmem:[#allocation2 + $0x11d0] sm:$0xff]
    %v690 = vld [vmem:[#allocation2 + $0x11d8] sm:$0xff]
    %v691 = vld [vmem:[#allocation2 + $0x11e0] sm:$0xff]
    %v692 = vld [vmem:[#allocation2 + $0x11e8] sm:$0xff]
    %v693 = vld [vmem:[#allocation2 + $0x11f0] sm:$0xff]
    %v694 = vld [vmem:[#allocation2 + $0x11f8] sm:$0xff]
    %v695 = vld [vmem:[#allocation2 + $0x1200] sm:$0xff]
    %v696 = vld [vmem:[#allocation2 + $0x1208] sm:$0xff]
    %v697 = vld [vmem:[#allocation2 + $0x1210] sm:$0xff]
    %v698 = vld [vmem:[#allocation2 + $0x1218] sm:$0xff]
    %v699 = vld [vmem:[#allocation2 + $0x1220] sm:$0xff]
    %v700 = vld [vmem:[#allocation2 + $0x1228] sm:$0xff]
    %v701 = vld [vmem:[#allocation2 + $0x1230] sm:$0xff]
    %v702 = vld [vmem:[#allocation2 + $0x1238] sm:$0xff]
    %v703 = vld [vmem:[#allocation2 + $0x1240] sm:$0xff]
    %v704 = vld [vmem:[#allocation2 + $0x1248] sm:$0xff]
    %v705 = vld [vmem:[#allocation2 + $0x1250] sm:$0xff]
    %v706 = vld [vmem:[#allocation2 + $0x1258] sm:$0xff]
    %v707 = vld [vmem:[#allocation2 + $0x1260] sm:$0xff]
    %v708 = vld [vmem:[#allocation2 + $0x1268] sm:$0xff]
    %v709 = vld [vmem:[#allocation2 + $0x1270] sm:$0xff]
    %v710 = vld [vmem:[#allocation2 + $0x1278] sm:$0xff]
    %v711 = vld [vmem:[#allocation2 + $0x1280] sm:$0xff]
    %v712 = vld [vmem:[#allocation2 + $0x1288] sm:$0xff]
    %v713 = vld [vmem:[#allocation2 + $0x1290] sm:$0xff]
    %v714 = vld [vmem:[#allocation2 + $0x1298] sm:$0xff]
    %v715 = vld [vmem:[#allocation2 + $0x12a0] sm:$0xff]
    %v716 = vld [vmem:[#allocation2 + $0x12a8] sm:$0xff]
    %v717 = vld [vmem:[#allocation2 + $0x12b0] sm:$0xff]
    %v718 = vld [vmem:[#allocation2 + $0x12b8] sm:$0xff]
    %v719 = vld [vmem:[#allocation2 + $0x12c0] sm:$0xff]
    %v720 = vld [vmem:[#allocation2 + $0x12c8] sm:$0xff]
    %v721 = vld [vmem:[#allocation2 + $0x12d0] sm:$0xff]
    %v722 = vld [vmem:[#allocation2 + $0x12d8] sm:$0xff]
    %v723 = vld [vmem:[#allocation2 + $0x12e0] sm:$0xff]
    %v724 = vld [vmem:[#allocation2 + $0x12e8] sm:$0xff]
    %v725 = vld [vmem:[#allocation2 + $0x12f0] sm:$0xff]
    %v726 = vld [vmem:[#allocation2 + $0x12f8] sm:$0xff]
    %v727 = vld [vmem:[#allocation2 + $0x1300] sm:$0xff]
    %v728 = vld [vmem:[#allocation2 + $0x1308] sm:$0xff]
    %v729 = vld [vmem:[#allocation2 + $0x1310] sm:$0xff]
    %v730 = vld [vmem:[#allocation2 + $0x1318] sm:$0xff]
    %v731 = vld [vmem:[#allocation2 + $0x1320] sm:$0xff]
    %v732 = vld [vmem:[#allocation2 + $0x1328] sm:$0xff]
    %v733 = vld [vmem:[#allocation2 + $0x1330] sm:$0xff]
    %v734 = vld [vmem:[#allocation2 + $0x1338] sm:$0xff]
    %v735 = vld [vmem:[#allocation2 + $0x1340] sm:$0xff]
    %v736 = vld [vmem:[#allocation2 + $0x1348] sm:$0xff]
    %v737 = vld [vmem:[#allocation2 + $0x1350] sm:$0xff]
    %v738 = vld [vmem:[#allocation2 + $0x1358] sm:$0xff]
    %v739 = vld [vmem:[#allocation2 + $0x1360] sm:$0xff]
    %v740 = vld [vmem:[#allocation2 + $0x1368] sm:$0xff]
    %v741 = vld [vmem:[#allocation2 + $0x1370] sm:$0xff]
    %v742 = vld [vmem:[#allocation2 + $0x1378] sm:$0xff]
    %v743 = vld [vmem:[#allocation2 + $0x1380] sm:$0xff]
    %v744 = vld [vmem:[#allocation2 + $0x1388] sm:$0xff]
    %v745 = vld [vmem:[#allocation2 + $0x1390] sm:$0xff]
    %v746 = vld [vmem:[#allocation2 + $0x1398] sm:$0xff]
    %v747 = vld [vmem:[#allocation2 + $0x13a0] sm:$0xff]
    %v748 = vld [vmem:[#allocation2 + $0x13a8] sm:$0xff]
    %v749 = vld [vmem:[#allocation2 + $0x13b0] sm:$0xff]
    %v750 = vld [vmem:[#allocation2 + $0x13b8] sm:$0xff]
    %v751 = vld [vmem:[#allocation2 + $0x13c0] sm:$0xff]
    %v752 = vld [vmem:[#allocation2 + $0x13c8] sm:$0xff]
    %v753 = vld [vmem:[#allocation2 + $0x13d0] sm:$0xff]
    %v754 = vld [vmem:[#allocation2 + $0x13d8] sm:$0xff]
    %v755 = vld [vmem:[#allocation2 + $0x13e0] sm:$0xff]
    %v756 = vld [vmem:[#allocation2 + $0x13e8] sm:$0xff]
    %v757 = vld [vmem:[#allocation2 + $0x13f0] sm:$0xff]
    %v758 = vld [vmem:[#allocation2 + $0x13f8] sm:$0xff]
    %v759 = vld [vmem:[#allocation2 + $0x1400] sm:$0xff]
    %v760 = vld [vmem:[#allocation2 + $0x1408] sm:$0xff]
    %v761 = vld [vmem:[#allocation2 + $0x1410] sm:$0xff]
    %v762 = vld [vmem:[#allocation2 + $0x1418] sm:$0xff]
    %v763 = vld [vmem:[#allocation2 + $0x1420] sm:$0xff]
    %v764 = vld [vmem:[#allocation2 + $0x1428] sm:$0xff]
    %v765 = vld [vmem:[#allocation2 + $0x1430] sm:$0xff]
    %v766 = vld [vmem:[#allocation2 + $0x1438] sm:$0xff]
    %v767 = vld [vmem:[#allocation2 + $0x1440] sm:$0xff]
    %v768 = vld [vmem:[#allocation2 + $0x1448] sm:$0xff]
    %v769 = vld [vmem:[#allocation2 + $0x1450] sm:$0xff]
    %v770 = vld [vmem:[#allocation2 + $0x1458] sm:$0xff]
    %v771 = vld [vmem:[#allocation2 + $0x1460] sm:$0xff]
    %v772 = vld [vmem:[#allocation2 + $0x1468] sm:$0xff]
    %v773 = vld [vmem:[#allocation2 + $0x1470] sm:$0xff]
    %v774 = vld [vmem:[#allocation2 + $0x1478] sm:$0xff]
    %v775 = vld [vmem:[#allocation2 + $0x1480] sm:$0xff]
    %v776 = vld [vmem:[#allocation2 + $0x1488] sm:$0xff]
    %v777 = vld [vmem:[#allocation2 + $0x1490] sm:$0xff]
    %v778 = vld [vmem:[#allocation2 + $0x1498] sm:$0xff]
    %v779 = vld [vmem:[#allocation2 + $0x14a0] sm:$0xff]
    %v780 = vld [vmem:[#allocation2 + $0x14a8] sm:$0xff]
    %v781 = vld [vmem:[#allocation2 + $0x14b0] sm:$0xff]
    %v782 = vld [vmem:[#allocation2 + $0x14b8] sm:$0xff]
    %v783 = vld [vmem:[#allocation2 + $0x14c0] sm:$0xff]
    %v784 = vld [vmem:[#allocation2 + $0x14c8] sm:$0xff]
    %v785 = vld [vmem:[#allocation2 + $0x14d0] sm:$0xff]
    %v786 = vld [vmem:[#allocation2 + $0x14d8] sm:$0xff]
    %v787 = vld [vmem:[#allocation2 + $0x14e0] sm:$0xff]
    %v788 = vld [vmem:[#allocation2 + $0x14e8] sm:$0xff]
    %v789 = vld [vmem:[#allocation2 + $0x14f0] sm:$0xff]
    %v790 = vld [vmem:[#allocation2 + $0x14f8] sm:$0xff]
    %v791 = vld [vmem:[#allocation2 + $0x1500] sm:$0xff]
    %v792 = vld [vmem:[#allocation2 + $0x1508] sm:$0xff]
    %v793 = vld [vmem:[#allocation2 + $0x1510] sm:$0xff]
    %v794 = vld [vmem:[#allocation2 + $0x1518] sm:$0xff]
    %v795 = vld [vmem:[#allocation2 + $0x1520] sm:$0xff]
    %v796 = vld [vmem:[#allocation2 + $0x1528] sm:$0xff]
    %v797 = vld [vmem:[#allocation2 + $0x1530] sm:$0xff]
    %v798 = vld [vmem:[#allocation2 + $0x1538] sm:$0xff]
    %v799 = vld [vmem:[#allocation2 + $0x1540] sm:$0xff]
    %v800 = vld [vmem:[#allocation2 + $0x1548] sm:$0xff]
    %v801 = vld [vmem:[#allocation2 + $0x1550] sm:$0xff]
    %v802 = vld [vmem:[#allocation2 + $0x1558] sm:$0xff]
    %v803 = vld [vmem:[#allocation2 + $0x1560] sm:$0xff]
    %v804 = vld [vmem:[#allocation2 + $0x1568] sm:$0xff]
    %v805 = vld [vmem:[#allocation2 + $0x1570] sm:$0xff]
    %v806 = vld [vmem:[#allocation2 + $0x1578] sm:$0xff]
    %v807 = vld [vmem:[#allocation2 + $0x1580] sm:$0xff]
    %v808 = vld [vmem:[#allocation2 + $0x1588] sm:$0xff]
    %v809 = vld [vmem:[#allocation2 + $0x1590] sm:$0xff]
    %v810 = vld [vmem:[#allocation2 + $0x1598] sm:$0xff]
    %v811 = vld [vmem:[#allocation2 + $0x15a0] sm:$0xff]
    %v812 = vld [vmem:[#allocation2 + $0x15a8] sm:$0xff]
    %v813 = vld [vmem:[#allocation2 + $0x15b0] sm:$0xff]
    %v814 = vld [vmem:[#allocation2 + $0x15b8] sm:$0xff]
    %v815 = vld [vmem:[#allocation2 + $0x15c0] sm:$0xff]
    %v816 = vld [vmem:[#allocation2 + $0x15c8] sm:$0xff]
    %v817 = vld [vmem:[#allocation2 + $0x15d0] sm:$0xff]
    %v818 = vld [vmem:[#allocation2 + $0x15d8] sm:$0xff]
    %v819 = vld [vmem:[#allocation2 + $0x15e0] sm:$0xff]
    %v820 = vld [vmem:[#allocation2 + $0x15e8] sm:$0xff]
    %v821 = vld [vmem:[#allocation2 + $0x15f0] sm:$0xff]
    %v822 = vld [vmem:[#allocation2 + $0x15f8] sm:$0xff]
    %v823 = vld [vmem:[#allocation2 + $0x1600] sm:$0xff]
    %v824 = vld [vmem:[#allocation2 + $0x1608] sm:$0xff]
    %v825 = vld [vmem:[#allocation2 + $0x1610] sm:$0xff]
    %v826 = vld [vmem:[#allocation2 + $0x1618] sm:$0xff]
    %v827 = vld [vmem:[#allocation2 + $0x1620] sm:$0xff]
    %v828 = vld [vmem:[#allocation2 + $0x1628] sm:$0xff]
    %v829 = vld [vmem:[#allocation2 + $0x1630] sm:$0xff]
    %v830 = vld [vmem:[#allocation2 + $0x1638] sm:$0xff]
    %v831 = vld [vmem:[#allocation2 + $0x1640] sm:$0xff]
    %v832 = vld [vmem:[#allocation2 + $0x1648] sm:$0xff]
    %v833 = vld [vmem:[#allocation2 + $0x1650] sm:$0xff]
    %v834 = vld [vmem:[#allocation2 + $0x1658] sm:$0xff]
    %v835 = vld [vmem:[#allocation2 + $0x1660] sm:$0xff]
    %v836 = vld [vmem:[#allocation2 + $0x1668] sm:$0xff]
    %v837 = vld [vmem:[#allocation2 + $0x1670] sm:$0xff]
    %v838 = vld [vmem:[#allocation2 + $0x1678] sm:$0xff]
    %v839 = vld [vmem:[#allocation2 + $0x1680] sm:$0xff]
    %v840 = vld [vmem:[#allocation2 + $0x1688] sm:$0xff]
    %v841 = vld [vmem:[#allocation2 + $0x1690] sm:$0xff]
    %v842 = vld [vmem:[#allocation2 + $0x1698] sm:$0xff]
    %v843 = vld [vmem:[#allocation2 + $0x16a0] sm:$0xff]
    %v844 = vld [vmem:[#allocation2 + $0x16a8] sm:$0xff]
    %v845 = vld [vmem:[#allocation2 + $0x16b0] sm:$0xff]
    %v846 = vld [vmem:[#allocation2 + $0x16b8] sm:$0xff]
    %v847 = vld [vmem:[#allocation2 + $0x16c0] sm:$0xff]
    %v848 = vld [vmem:[#allocation2 + $0x16c8] sm:$0xff]
    %v849 = vld [vmem:[#allocation2 + $0x16d0] sm:$0xff]
    %v850 = vld [vmem:[#allocation2 + $0x16d8] sm:$0xff]
    %v851 = vld [vmem:[#allocation2 + $0x16e0] sm:$0xff]
    %v852 = vld [vmem:[#allocation2 + $0x16e8] sm:$0xff]
    %v853 = vld [vmem:[#allocation2 + $0x16f0] sm:$0xff]
    %v854 = vld [vmem:[#allocation2 + $0x16f8] sm:$0xff]
    %v855 = vld [vmem:[#allocation2 + $0x1700] sm:$0xff]
    %v856 = vld [vmem:[#allocation2 + $0x1708] sm:$0xff]
    %v857 = vld [vmem:[#allocation2 + $0x1710] sm:$0xff]
    %v858 = vld [vmem:[#allocation2 + $0x1718] sm:$0xff]
    %v859 = vld [vmem:[#allocation2 + $0x1720] sm:$0xff]
    %v860 = vld [vmem:[#allocation2 + $0x1728] sm:$0xff]
    %v861 = vld [vmem:[#allocation2 + $0x1730] sm:$0xff]
    %v862 = vld [vmem:[#allocation2 + $0x1738] sm:$0xff]
    %v863 = vld [vmem:[#allocation2 + $0x1740] sm:$0xff]
    %v864 = vld [vmem:[#allocation2 + $0x1748] sm:$0xff]
    %v865 = vld [vmem:[#allocation2 + $0x1750] sm:$0xff]
    %v866 = vld [vmem:[#allocation2 + $0x1758] sm:$0xff]
    %v867 = vld [vmem:[#allocation2 + $0x1760] sm:$0xff]
    %v868 = vld [vmem:[#allocation2 + $0x1768] sm:$0xff]
    %v869 = vld [vmem:[#allocation2 + $0x1770] sm:$0xff]
    %v870 = vld [vmem:[#allocation2 + $0x1778] sm:$0xff]
    %v871 = vld [vmem:[#allocation2 + $0x1780] sm:$0xff]
    %v872 = vld [vmem:[#allocation2 + $0x1788] sm:$0xff]
    %v873 = vld [vmem:[#allocation2 + $0x1790] sm:$0xff]
    %v874 = vld [vmem:[#allocation2 + $0x1798] sm:$0xff]
    %v875 = vld [vmem:[#allocation2 + $0x17a0] sm:$0xff]
    %v876 = vld [vmem:[#allocation2 + $0x17a8] sm:$0xff]
    %v877 = vld [vmem:[#allocation2 + $0x17b0] sm:$0xff]
    %v878 = vld [vmem:[#allocation2 + $0x17b8] sm:$0xff]
    %v879 = vld [vmem:[#allocation2 + $0x17c0] sm:$0xff]
    %v880 = vld [vmem:[#allocation2 + $0x17c8] sm:$0xff]
    %v881 = vld [vmem:[#allocation2 + $0x17d0] sm:$0xff]
    %v882 = vld [vmem:[#allocation2 + $0x17d8] sm:$0xff]
    %v883 = vld [vmem:[#allocation2 + $0x17e0] sm:$0xff]
    %v884 = vld [vmem:[#allocation2 + $0x17e8] sm:$0xff]
    %v885 = vld [vmem:[#allocation2 + $0x17f0] sm:$0xff]
    %v886 = vld [vmem:[#allocation2 + $0x17f8] sm:$0xff]
    %v887 = vld [vmem:[#allocation2 + $0x1800] sm:$0xff]
    %v888 = vld [vmem:[#allocation2 + $0x1808] sm:$0xff]
    %v889 = vld [vmem:[#allocation2 + $0x1810] sm:$0xff]
    %v890 = vld [vmem:[#allocation2 + $0x1818] sm:$0xff]
    %v891 = vld [vmem:[#allocation2 + $0x1820] sm:$0xff]
    %v892 = vld [vmem:[#allocation2 + $0x1828] sm:$0xff]
    %v893 = vld [vmem:[#allocation2 + $0x1830] sm:$0xff]
    %v894 = vld [vmem:[#allocation2 + $0x1838] sm:$0xff]
    %v895 = vld [vmem:[#allocation2 + $0x1840] sm:$0xff]
    %v896 = vld [vmem:[#allocation2 + $0x1848] sm:$0xff]
    %v897 = vld [vmem:[#allocation2 + $0x1850] sm:$0xff]
    %v898 = vld [vmem:[#allocation2 + $0x1858] sm:$0xff]
    %v899 = vld [vmem:[#allocation2 + $0x1860] sm:$0xff]
    %v900 = vld [vmem:[#allocation2 + $0x1868] sm:$0xff]
    %v901 = vld [vmem:[#allocation2 + $0x1870] sm:$0xff]
    %v902 = vld [vmem:[#allocation2 + $0x1878] sm:$0xff]
    %v903 = vld [vmem:[#allocation2 + $0x1880] sm:$0xff]
    %v904 = vld [vmem:[#allocation2 + $0x1888] sm:$0xff]
    %v905 = vld [vmem:[#allocation2 + $0x1890] sm:$0xff]
    %v906 = vld [vmem:[#allocation2 + $0x1898] sm:$0xff]
    %v907 = vld [vmem:[#allocation2 + $0x18a0] sm:$0xff]
    %v908 = vld [vmem:[#allocation2 + $0x18a8] sm:$0xff]
    %v909 = vld [vmem:[#allocation2 + $0x18b0] sm:$0xff]
    %v910 = vld [vmem:[#allocation2 + $0x18b8] sm:$0xff]
    %v911 = vld [vmem:[#allocation2 + $0x18c0] sm:$0xff]
    %v912 = vld [vmem:[#allocation2 + $0x18c8] sm:$0xff]
    %v913 = vld [vmem:[#allocation2 + $0x18d0] sm:$0xff]
    %v914 = vld [vmem:[#allocation2 + $0x18d8] sm:$0xff]
    %v915 = vld [vmem:[#allocation2 + $0x18e0] sm:$0xff]
    %v916 = vld [vmem:[#allocation2 + $0x18e8] sm:$0xff]
    %v917 = vld [vmem:[#allocation2 + $0x18f0] sm:$0xff]
    %v918 = vld [vmem:[#allocation2 + $0x18f8] sm:$0xff]
    %v919 = vld [vmem:[#allocation2 + $0x1900] sm:$0xff]
    %v920 = vld [vmem:[#allocation2 + $0x1908] sm:$0xff]
    %v921 = vld [vmem:[#allocation2 + $0x1910] sm:$0xff]
    %v922 = vld [vmem:[#allocation2 + $0x1918] sm:$0xff]
    %v923 = vld [vmem:[#allocation2 + $0x1920] sm:$0xff]
    %v924 = vld [vmem:[#allocation2 + $0x1928] sm:$0xff]
    %v925 = vld [vmem:[#allocation2 + $0x1930] sm:$0xff]
    %v926 = vld [vmem:[#allocation2 + $0x1938] sm:$0xff]
    %v927 = vld [vmem:[#allocation2 + $0x1940] sm:$0xff]
    %v928 = vld [vmem:[#allocation2 + $0x1948] sm:$0xff]
    %v929 = vld [vmem:[#allocation2 + $0x1950] sm:$0xff]
    %v930 = vld [vmem:[#allocation2 + $0x1958] sm:$0xff]
    %v931 = vld [vmem:[#allocation2 + $0x1960] sm:$0xff]
    %v932 = vld [vmem:[#allocation2 + $0x1968] sm:$0xff]
    %v933 = vld [vmem:[#allocation2 + $0x1970] sm:$0xff]
    %v934 = vld [vmem:[#allocation2 + $0x1978] sm:$0xff]
    %v935 = vld [vmem:[#allocation2 + $0x1980] sm:$0xff]
    %v936 = vld [vmem:[#allocation2 + $0x1988] sm:$0xff]
    %v937 = vld [vmem:[#allocation2 + $0x1990] sm:$0xff]
    %v938 = vld [vmem:[#allocation2 + $0x1998] sm:$0xff]
    %v939 = vld [vmem:[#allocation2 + $0x19a0] sm:$0xff]
    %v940 = vld [vmem:[#allocation2 + $0x19a8] sm:$0xff]
    %v941 = vld [vmem:[#allocation2 + $0x19b0] sm:$0xff]
    %v942 = vld [vmem:[#allocation2 + $0x19b8] sm:$0xff]
    %v943 = vld [vmem:[#allocation2 + $0x19c0] sm:$0xff]
    %v944 = vld [vmem:[#allocation2 + $0x19c8] sm:$0xff]
    %v945 = vld [vmem:[#allocation2 + $0x19d0] sm:$0xff]
    %v946 = vld [vmem:[#allocation2 + $0x19d8] sm:$0xff]
    %v947 = vld [vmem:[#allocation2 + $0x19e0] sm:$0xff]
    %v948 = vld [vmem:[#allocation2 + $0x19e8] sm:$0xff]
    %v949 = vld [vmem:[#allocation2 + $0x19f0] sm:$0xff]
    %v950 = vld [vmem:[#allocation2 + $0x19f8] sm:$0xff]
    %v951 = vld [vmem:[#allocation2 + $0x1a00] sm:$0xff]
    %v952 = vld [vmem:[#allocation2 + $0x1a08] sm:$0xff]
    %v953 = vld [vmem:[#allocation2 + $0x1a10] sm:$0xff]
    %v954 = vld [vmem:[#allocation2 + $0x1a18] sm:$0xff]
    %v955 = vld [vmem:[#allocation2 + $0x1a20] sm:$0xff]
    %v956 = vld [vmem:[#allocation2 + $0x1a28] sm:$0xff]
    %v957 = vld [vmem:[#allocation2 + $0x1a30] sm:$0xff]
    %v958 = vld [vmem:[#allocation2 + $0x1a38] sm:$0xff]
    %v959 = vld [vmem:[#allocation2 + $0x1a40] sm:$0xff]
    %v960 = vld [vmem:[#allocation2 + $0x1a48] sm:$0xff]
    %v961 = vld [vmem:[#allocation2 + $0x1a50] sm:$0xff]
    %v962 = vld [vmem:[#allocation2 + $0x1a58] sm:$0xff]
    %v963 = vld [vmem:[#allocation2 + $0x1a60] sm:$0xff]
    %v964 = vld [vmem:[#allocation2 + $0x1a68] sm:$0xff]
    %v965 = vld [vmem:[#allocation2 + $0x1a70] sm:$0xff]
    %v966 = vld [vmem:[#allocation2 + $0x1a78] sm:$0xff]
    %v967 = vld [vmem:[#allocation2 + $0x1a80] sm:$0xff]
    %v968 = vld [vmem:[#allocation2 + $0x1a88] sm:$0xff]
    %v969 = vld [vmem:[#allocation2 + $0x1a90] sm:$0xff]
    %v970 = vld [vmem:[#allocation2 + $0x1a98] sm:$0xff]
    %v971 = vld [vmem:[#allocation2 + $0x1aa0] sm:$0xff]
    %v972 = vld [vmem:[#allocation2 + $0x1aa8] sm:$0xff]
    %v973 = vld [vmem:[#allocation2 + $0x1ab0] sm:$0xff]
    %v974 = vld [vmem:[#allocation2 + $0x1ab8] sm:$0xff]
    %v975 = vld [vmem:[#allocation2 + $0x1ac0] sm:$0xff]
    %v976 = vld [vmem:[#allocation2 + $0x1ac8] sm:$0xff]
    %v977 = vld [vmem:[#allocation2 + $0x1ad0] sm:$0xff]
    %v978 = vld [vmem:[#allocation2 + $0x1ad8] sm:$0xff]
    %v979 = vld [vmem:[#allocation2 + $0x1ae0] sm:$0xff]
    %v980 = vld [vmem:[#allocation2 + $0x1ae8] sm:$0xff]
    %v981 = vld [vmem:[#allocation2 + $0x1af0] sm:$0xff]
    %v982 = vld [vmem:[#allocation2 + $0x1af8] sm:$0xff]
    %v983 = vld [vmem:[#allocation2 + $0x1b00] sm:$0xff]
    %v984 = vld [vmem:[#allocation2 + $0x1b08] sm:$0xff]
    %v985 = vld [vmem:[#allocation2 + $0x1b10] sm:$0xff]
    %v986 = vld [vmem:[#allocation2 + $0x1b18] sm:$0xff]
    %v987 = vld [vmem:[#allocation2 + $0x1b20] sm:$0xff]
    %v988 = vld [vmem:[#allocation2 + $0x1b28] sm:$0xff]
    %v989 = vld [vmem:[#allocation2 + $0x1b30] sm:$0xff]
    %v990 = vld [vmem:[#allocation2 + $0x1b38] sm:$0xff]
    %v991 = vld [vmem:[#allocation2 + $0x1b40] sm:$0xff]
    %v992 = vld [vmem:[#allocation2 + $0x1b48] sm:$0xff]
    %v993 = vld [vmem:[#allocation2 + $0x1b50] sm:$0xff]
    %v994 = vld [vmem:[#allocation2 + $0x1b58] sm:$0xff]
    %v995 = vld [vmem:[#allocation2 + $0x1b60] sm:$0xff]
    %v996 = vld [vmem:[#allocation2 + $0x1b68] sm:$0xff]
    %v997 = vld [vmem:[#allocation2 + $0x1b70] sm:$0xff]
    %v998 = vld [vmem:[#allocation2 + $0x1b78] sm:$0xff]
    %v999 = vld [vmem:[#allocation2 + $0x1b80] sm:$0xff]
    %v1000 = vld [vmem:[#allocation2 + $0x1b88] sm:$0xff]
    %v1001 = vld [vmem:[#allocation2 + $0x1b90] sm:$0xff]
    %v1002 = vld [vmem:[#allocation2 + $0x1b98] sm:$0xff]
    %v1003 = vld [vmem:[#allocation2 + $0x1ba0] sm:$0xff]
    %v1004 = vld [vmem:[#allocation2 + $0x1ba8] sm:$0xff]
    %v1005 = vld [vmem:[#allocation2 + $0x1bb0] sm:$0xff]
    %v1006 = vld [vmem:[#allocation2 + $0x1bb8] sm:$0xff]
    %v1007 = vld [vmem:[#allocation2 + $0x1bc0] sm:$0xff]
    %v1008 = vld [vmem:[#allocation2 + $0x1bc8] sm:$0xff]
    %v1009 = vld [vmem:[#allocation2 + $0x1bd0] sm:$0xff]
    %v1010 = vld [vmem:[#allocation2 + $0x1bd8] sm:$0xff]
    %v1011 = vld [vmem:[#allocation2 + $0x1be0] sm:$0xff]
    %v1012 = vld [vmem:[#allocation2 + $0x1be8] sm:$0xff]
    %v1013 = vld [vmem:[#allocation2 + $0x1bf0] sm:$0xff]
    %v1014 = vld [vmem:[#allocation2 + $0x1bf8] sm:$0xff]
    %v1015 = vld [vmem:[#allocation2 + $0x1c00] sm:$0xff]
    %v1016 = vld [vmem:[#allocation2 + $0x1c08] sm:$0xff]
    %v1017 = vld [vmem:[#allocation2 + $0x1c10] sm:$0xff]
    %v1018 = vld [vmem:[#allocation2 + $0x1c18] sm:$0xff]
    %v1019 = vld [vmem:[#allocation2 + $0x1c20] sm:$0xff]
    %v1020 = vld [vmem:[#allocation2 + $0x1c28] sm:$0xff]
    %v1021 = vld [vmem:[#allocation2 + $0x1c30] sm:$0xff]
    %v1022 = vld [vmem:[#allocation2 + $0x1c38] sm:$0xff]
    %v1023 = vld [vmem:[#allocation2 + $0x1c40] sm:$0xff]
    %v1024 = vld [vmem:[#allocation2 + $0x1c48] sm:$0xff]
    %v1025 = vld [vmem:[#allocation2 + $0x1c50] sm:$0xff]
    %v1026 = vld [vmem:[#allocation2 + $0x1c58] sm:$0xff]
    %v1027 = vld [vmem:[#allocation2 + $0x1c60] sm:$0xff]
    %v1028 = vld [vmem:[#allocation2 + $0x1c68] sm:$0xff]
    %v1029 = vld [vmem:[#allocation2 + $0x1c70] sm:$0xff]
    %v1030 = vld [vmem:[#allocation2 + $0x1c78] sm:$0xff]
    %v1031 = vld [vmem:[#allocation2 + $0x1c80] sm:$0xff]
    %v1032 = vld [vmem:[#allocation2 + $0x1c88] sm:$0xff]
    %v1033 = vld [vmem:[#allocation2 + $0x1c90] sm:$0xff]
    %v1034 = vld [vmem:[#allocation2 + $0x1c98] sm:$0xff]
    %v1035 = vld [vmem:[#allocation2 + $0x1ca0] sm:$0xff]
    %v1036 = vld [vmem:[#allocation2 + $0x1ca8] sm:$0xff]
    %v1037 = vld [vmem:[#allocation2 + $0x1cb0] sm:$0xff]
    %v1038 = vld [vmem:[#allocation2 + $0x1cb8] sm:$0xff]
    %v1039 = vld [vmem:[#allocation2 + $0x1cc0] sm:$0xff]
    %v1040 = vld [vmem:[#allocation2 + $0x1cc8] sm:$0xff]
    %v1041 = vld [vmem:[#allocation2 + $0x1cd0] sm:$0xff]
    %v1042 = vld [vmem:[#allocation2 + $0x1cd8] sm:$0xff]
    %v1043 = vld [vmem:[#allocation2 + $0x1ce0] sm:$0xff]
    %v1044 = vld [vmem:[#allocation2 + $0x1ce8] sm:$0xff]
    %v1045 = vld [vmem:[#allocation2 + $0x1cf0] sm:$0xff]
    %v1046 = vld [vmem:[#allocation2 + $0x1cf8] sm:$0xff]
    %v1047 = vld [vmem:[#allocation2 + $0x1d00] sm:$0xff]
    %v1048 = vld [vmem:[#allocation2 + $0x1d08] sm:$0xff]
    %v1049 = vld [vmem:[#allocation2 + $0x1d10] sm:$0xff]
    %v1050 = vld [vmem:[#allocation2 + $0x1d18] sm:$0xff]
    %v1051 = vld [vmem:[#allocation2 + $0x1d20] sm:$0xff]
    %v1052 = vld [vmem:[#allocation2 + $0x1d28] sm:$0xff]
    %v1053 = vld [vmem:[#allocation2 + $0x1d30] sm:$0xff]
    %v1054 = vld [vmem:[#allocation2 + $0x1d38] sm:$0xff]
    %v1055 = vld [vmem:[#allocation2 + $0x1d40] sm:$0xff]
    %v1056 = vld [vmem:[#allocation2 + $0x1d48] sm:$0xff]
    %v1057 = vld [vmem:[#allocation2 + $0x1d50] sm:$0xff]
    %v1058 = vld [vmem:[#allocation2 + $0x1d58] sm:$0xff]
    %v1059 = vld [vmem:[#allocation2 + $0x1d60] sm:$0xff]
    %v1060 = vld [vmem:[#allocation2 + $0x1d68] sm:$0xff]
    %v1061 = vld [vmem:[#allocation2 + $0x1d70] sm:$0xff]
    %v1062 = vld [vmem:[#allocation2 + $0x1d78] sm:$0xff]
    %v1063 = vld [vmem:[#allocation2 + $0x1d80] sm:$0xff]
    %v1064 = vld [vmem:[#allocation2 + $0x1d88] sm:$0xff]
    %v1065 = vld [vmem:[#allocation2 + $0x1d90] sm:$0xff]
    %v1066 = vld [vmem:[#allocation2 + $0x1d98] sm:$0xff]
    %v1067 = vld [vmem:[#allocation2 + $0x1da0] sm:$0xff]
    %v1068 = vld [vmem:[#allocation2 + $0x1da8] sm:$0xff]
    %v1069 = vld [vmem:[#allocation2 + $0x1db0] sm:$0xff]
    %v1070 = vld [vmem:[#allocation2 + $0x1db8] sm:$0xff]
    %v1071 = vld [vmem:[#allocation2 + $0x1dc0] sm:$0xff]
    %v1072 = vld [vmem:[#allocation2 + $0x1dc8] sm:$0xff]
    %v1073 = vld [vmem:[#allocation2 + $0x1dd0] sm:$0xff]
    %v1074 = vld [vmem:[#allocation2 + $0x1dd8] sm:$0xff]
    %v1075 = vld [vmem:[#allocation2 + $0x1de0] sm:$0xff]
    %v1076 = vld [vmem:[#allocation2 + $0x1de8] sm:$0xff]
    %v1077 = vld [vmem:[#allocation2 + $0x1df0] sm:$0xff]
    %v1078 = vld [vmem:[#allocation2 + $0x1df8] sm:$0xff]
    %v1079 = vld [vmem:[#allocation2 + $0x1e00] sm:$0xff]
    %v1080 = vld [vmem:[#allocation2 + $0x1e08] sm:$0xff]
    %v1081 = vld [vmem:[#allocation2 + $0x1e10] sm:$0xff]
    %v1082 = vld [vmem:[#allocation2 + $0x1e18] sm:$0xff]
    %v1083 = vld [vmem:[#allocation2 + $0x1e20] sm:$0xff]
    %v1084 = vld [vmem:[#allocation2 + $0x1e28] sm:$0xff]
    %v1085 = vld [vmem:[#allocation2 + $0x1e30] sm:$0xff]
    %v1086 = vld [vmem:[#allocation2 + $0x1e38] sm:$0xff]
    %v1087 = vld [vmem:[#allocation2 + $0x1e40] sm:$0xff]
    %v1088 = vld [vmem:[#allocation2 + $0x1e48] sm:$0xff]
    %v1089 = vld [vmem:[#allocation2 + $0x1e50] sm:$0xff]
    %v1090 = vld [vmem:[#allocation2 + $0x1e58] sm:$0xff]
    %v1091 = vld [vmem:[#allocation2 + $0x1e60] sm:$0xff]
    %v1092 = vld [vmem:[#allocation2 + $0x1e68] sm:$0xff]
    %v1093 = vld [vmem:[#allocation2 + $0x1e70] sm:$0xff]
    %v1094 = vld [vmem:[#allocation2 + $0x1e78] sm:$0xff]
    %v1095 = vld [vmem:[#allocation2 + $0x1e80] sm:$0xff]
    %v1096 = vld [vmem:[#allocation2 + $0x1e88] sm:$0xff]
    %v1097 = vld [vmem:[#allocation2 + $0x1e90] sm:$0xff]
    %v1098 = vld [vmem:[#allocation2 + $0x1e98] sm:$0xff]
    %v1099 = vld [vmem:[#allocation2 + $0x1ea0] sm:$0xff]
    %v1100 = vld [vmem:[#allocation2 + $0x1ea8] sm:$0xff]
    %v1101 = vld [vmem:[#allocation2 + $0x1eb0] sm:$0xff]
    %v1102 = vld [vmem:[#allocation2 + $0x1eb8] sm:$0xff]
    %v1103 = vld [vmem:[#allocation2 + $0x1ec0] sm:$0xff]
    %v1104 = vld [vmem:[#allocation2 + $0x1ec8] sm:$0xff]
    %v1105 = vld [vmem:[#allocation2 + $0x1ed0] sm:$0xff]
    %v1106 = vld [vmem:[#allocation2 + $0x1ed8] sm:$0xff]
    %v1107 = vld [vmem:[#allocation2 + $0x1ee0] sm:$0xff]
    %v1108 = vld [vmem:[#allocation2 + $0x1ee8] sm:$0xff]
    %v1109 = vld [vmem:[#allocation2 + $0x1ef0] sm:$0xff]
    %v1110 = vld [vmem:[#allocation2 + $0x1ef8] sm:$0xff]
    %v1111 = vld [vmem:[#allocation2 + $0x1f00] sm:$0xff]
    %v1112 = vld [vmem:[#allocation2 + $0x1f08] sm:$0xff]
    %v1113 = vld [vmem:[#allocation2 + $0x1f10] sm:$0xff]
    %v1114 = vld [vmem:[#allocation2 + $0x1f18] sm:$0xff]
    %v1115 = vld [vmem:[#allocation2 + $0x1f20] sm:$0xff]
    %v1116 = vld [vmem:[#allocation2 + $0x1f28] sm:$0xff]
    %v1117 = vld [vmem:[#allocation2 + $0x1f30] sm:$0xff]
    %v1118 = vld [vmem:[#allocation2 + $0x1f38] sm:$0xff]
    %v1119 = vld [vmem:[#allocation2 + $0x1f40] sm:$0xff]
    %v1120 = vld [vmem:[#allocation2 + $0x1f48] sm:$0xff]
    %v1121 = vld [vmem:[#allocation2 + $0x1f50] sm:$0xff]
    %v1122 = vld [vmem:[#allocation2 + $0x1f58] sm:$0xff]
    %v1123 = vld [vmem:[#allocation2 + $0x1f60] sm:$0xff]
    %v1124 = vld [vmem:[#allocation2 + $0x1f68] sm:$0xff]
    %v1125 = vld [vmem:[#allocation2 + $0x1f70] sm:$0xff]
    %v1126 = vld [vmem:[#allocation2 + $0x1f78] sm:$0xff]
    %v1127 = vld [vmem:[#allocation2 + $0x1f80] sm:$0xff]
    %v1128 = vld [vmem:[#allocation2 + $0x1f88] sm:$0xff]
    %v1129 = vld [vmem:[#allocation2 + $0x1f90] sm:$0xff]
    %v1130 = vld [vmem:[#allocation2 + $0x1f98] sm:$0xff]
    %v1131 = vld [vmem:[#allocation2 + $0x1fa0] sm:$0xff]
    %v1132 = vld [vmem:[#allocation2 + $0x1fa8] sm:$0xff]
    %v1133 = vld [vmem:[#allocation2 + $0x1fb0] sm:$0xff]
    %v1134 = vld [vmem:[#allocation2 + $0x1fb8] sm:$0xff]
    %v1135 = vld [vmem:[#allocation2 + $0x1fc0] sm:$0xff]
    %v1136 = vld [vmem:[#allocation2 + $0x1fc8] sm:$0xff]
    %v1137 = vld [vmem:[#allocation2 + $0x1fd0] sm:$0xff]
    %v1138 = vld [vmem:[#allocation2 + $0x1fd8] sm:$0xff]
    %v1139 = vld [vmem:[#allocation2 + $0x1fe0] sm:$0xff]
    %v1140 = vld [vmem:[#allocation2 + $0x1fe8] sm:$0xff]
    %v1141 = vld [vmem:[#allocation2 + $0x1ff0] sm:$0xff]
    %v1142 = vld [vmem:[#allocation2 + $0x1ff8] sm:$0xff]
    %v1143 = vld [vmem:[#allocation2 + $0x2000] sm:$0xff]
    %v1144 = vld [vmem:[#allocation2 + $0x2008] sm:$0xff]
    %v1145 = vld [vmem:[#allocation2 + $0x2010] sm:$0xff]
    %v1146 = vld [vmem:[#allocation2 + $0x2018] sm:$0xff]
    %v1147 = vld [vmem:[#allocation2 + $0x2020] sm:$0xff]
    %v1148 = vld [vmem:[#allocation2 + $0x2028] sm:$0xff]
    %v1149 = vld [vmem:[#allocation2 + $0x2030] sm:$0xff]
    %v1150 = vld [vmem:[#allocation2 + $0x2038] sm:$0xff]
    %v1151 = vld [vmem:[#allocation2 + $0x2040] sm:$0xff]
    %v1152 = vld [vmem:[#allocation2 + $0x2048] sm:$0xff]
    %v1153 = vld [vmem:[#allocation2 + $0x2050] sm:$0xff]
    %v1154 = vld [vmem:[#allocation2 + $0x2058] sm:$0xff]
    %v1155 = vld [vmem:[#allocation2 + $0x2060] sm:$0xff]
    %v1156 = vld [vmem:[#allocation2 + $0x2068] sm:$0xff]
    %v1157 = vld [vmem:[#allocation2 + $0x2070] sm:$0xff]
    %v1158 = vld [vmem:[#allocation2 + $0x2078] sm:$0xff]
    %v1159 = vld [vmem:[#allocation2 + $0x2080] sm:$0xff]
    %v1160 = vld [vmem:[#allocation2 + $0x2088] sm:$0xff]
    %v1161 = vld [vmem:[#allocation2 + $0x2090] sm:$0xff]
    %v1162 = vld [vmem:[#allocation2 + $0x2098] sm:$0xff]
    %v1163 = vld [vmem:[#allocation2 + $0x20a0] sm:$0xff]
    %v1164 = vld [vmem:[#allocation2 + $0x20a8] sm:$0xff]
    %v1165 = vld [vmem:[#allocation2 + $0x20b0] sm:$0xff]
    %v1166 = vld [vmem:[#allocation2 + $0x20b8] sm:$0xff]
    %v1167 = vld [vmem:[#allocation2 + $0x20c0] sm:$0xff]
    %v1168 = vld [vmem:[#allocation2 + $0x20c8] sm:$0xff]
    %v1169 = vld [vmem:[#allocation2 + $0x20d0] sm:$0xff]
    %v1170 = vld [vmem:[#allocation2 + $0x20d8] sm:$0xff]
    %v1171 = vld [vmem:[#allocation2 + $0x20e0] sm:$0xff]
    %v1172 = vld [vmem:[#allocation2 + $0x20e8] sm:$0xff]
    %v1173 = vld [vmem:[#allocation2 + $0x20f0] sm:$0xff]
    %v1174 = vld [vmem:[#allocation2 + $0x20f8] sm:$0xff]
    %v1175 = vld [vmem:[#allocation2 + $0x2100] sm:$0xff]
    %v1176 = vld [vmem:[#allocation2 + $0x2108] sm:$0xff]
    %v1177 = vld [vmem:[#allocation2 + $0x2110] sm:$0xff]
    %v1178 = vld [vmem:[#allocation2 + $0x2118] sm:$0xff]
    %v1179 = vld [vmem:[#allocation2 + $0x2120] sm:$0xff]
    %v1180 = vld [vmem:[#allocation2 + $0x2128] sm:$0xff]
    %v1181 = vld [vmem:[#allocation2 + $0x2130] sm:$0xff]
    %v1182 = vld [vmem:[#allocation2 + $0x2138] sm:$0xff]
    %v1183 = vld [vmem:[#allocation2 + $0x2140] sm:$0xff]
    %v1184 = vld [vmem:[#allocation2 + $0x2148] sm:$0xff]
    %v1185 = vld [vmem:[#allocation2 + $0x2150] sm:$0xff]
    %v1186 = vld [vmem:[#allocation2 + $0x2158] sm:$0xff]
    %v1187 = vld [vmem:[#allocation2 + $0x2160] sm:$0xff]
    %v1188 = vld [vmem:[#allocation2 + $0x2168] sm:$0xff]
    %v1189 = vld [vmem:[#allocation2 + $0x2170] sm:$0xff]
    %v1190 = vld [vmem:[#allocation2 + $0x2178] sm:$0xff]
    %v1191 = vld [vmem:[#allocation2 + $0x2180] sm:$0xff]
    %v1192 = vld [vmem:[#allocation2 + $0x2188] sm:$0xff]
    %v1193 = vld [vmem:[#allocation2 + $0x2190] sm:$0xff]
    %v1194 = vld [vmem:[#allocation2 + $0x2198] sm:$0xff]
    %v1195 = vld [vmem:[#allocation2 + $0x21a0] sm:$0xff]
    %v1196 = vld [vmem:[#allocation2 + $0x21a8] sm:$0xff]
    %v1197 = vld [vmem:[#allocation2 + $0x21b0] sm:$0xff]
    %v1198 = vld [vmem:[#allocation2 + $0x21b8] sm:$0xff]
    %v1199 = vld [vmem:[#allocation2 + $0x21c0] sm:$0xff]
    %v1200 = vld [vmem:[#allocation2 + $0x21c8] sm:$0xff]
    %v1201 = vld [vmem:[#allocation2 + $0x21d0] sm:$0xff]
    %v1202 = vld [vmem:[#allocation2 + $0x21d8] sm:$0xff]
    %v1203 = vld [vmem:[#allocation2 + $0x21e0] sm:$0xff]
    %v1204 = vld [vmem:[#allocation2 + $0x21e8] sm:$0xff]
    %v1205 = vld [vmem:[#allocation2 + $0x21f0] sm:$0xff]
    %v1206 = vld [vmem:[#allocation2 + $0x21f8] sm:$0xff]
    %v1207 = vld [vmem:[#allocation2 + $0x2200] sm:$0xff]
    %v1208 = vld [vmem:[#allocation2 + $0x2208] sm:$0xff]
    %v1209 = vld [vmem:[#allocation2 + $0x2210] sm:$0xff]
    %v1210 = vld [vmem:[#allocation2 + $0x2218] sm:$0xff]
    %v1211 = vld [vmem:[#allocation2 + $0x2220] sm:$0xff]
    %v1212 = vld [vmem:[#allocation2 + $0x2228] sm:$0xff]
    %v1213 = vld [vmem:[#allocation2 + $0x2230] sm:$0xff]
    %v1214 = vld [vmem:[#allocation2 + $0x2238] sm:$0xff]
    %v1215 = vld [vmem:[#allocation2 + $0x2240] sm:$0xff]
    %v1216 = vld [vmem:[#allocation2 + $0x2248] sm:$0xff]
    %v1217 = vld [vmem:[#allocation2 + $0x2250] sm:$0xff]
    %v1218 = vld [vmem:[#allocation2 + $0x2258] sm:$0xff]
    %v1219 = vld [vmem:[#allocation2 + $0x2260] sm:$0xff]
    %v1220 = vld [vmem:[#allocation2 + $0x2268] sm:$0xff]
    %v1221 = vld [vmem:[#allocation2 + $0x2270] sm:$0xff]
    %v1222 = vld [vmem:[#allocation2 + $0x2278] sm:$0xff]
    %v1223 = vld [vmem:[#allocation2 + $0x2280] sm:$0xff]
    %v1224 = vld [vmem:[#allocation2 + $0x2288] sm:$0xff]
    %v1225 = vld [vmem:[#allocation2 + $0x2290] sm:$0xff]
    %v1226 = vld [vmem:[#allocation2 + $0x2298] sm:$0xff]
    %v1227 = vld [vmem:[#allocation2 + $0x22a0] sm:$0xff]
    %v1228 = vld [vmem:[#allocation2 + $0x22a8] sm:$0xff]
    %v1229 = vld [vmem:[#allocation2 + $0x22b0] sm:$0xff]
    %v1230 = vld [vmem:[#allocation2 + $0x22b8] sm:$0xff]
    %v1231 = vld [vmem:[#allocation2 + $0x22c0] sm:$0xff]
    %v1232 = vld [vmem:[#allocation2 + $0x22c8] sm:$0xff]
    %v1233 = vld [vmem:[#allocation2 + $0x22d0] sm:$0xff]
    %v1234 = vld [vmem:[#allocation2 + $0x22d8] sm:$0xff]
    %v1235 = vld [vmem:[#allocation2 + $0x22e0] sm:$0xff]
    %v1236 = vld [vmem:[#allocation2 + $0x22e8] sm:$0xff]
    %v1237 = vld [vmem:[#allocation2 + $0x22f0] sm:$0xff]
    %v1238 = vld [vmem:[#allocation2 + $0x22f8] sm:$0xff]
    %v1239 = vld [vmem:[#allocation2 + $0x2300] sm:$0xff]
    %v1240 = vld [vmem:[#allocation2 + $0x2308] sm:$0xff]
    %v1241 = vld [vmem:[#allocation2 + $0x2310] sm:$0xff]
    %v1242 = vld [vmem:[#allocation2 + $0x2318] sm:$0xff]
    %v1243 = vld [vmem:[#allocation2 + $0x2320] sm:$0xff]
    %v1244 = vld [vmem:[#allocation2 + $0x2328] sm:$0xff]
    %v1245 = vld [vmem:[#allocation2 + $0x2330] sm:$0xff]
    %v1246 = vld [vmem:[#allocation2 + $0x2338] sm:$0xff]
    %v1247 = vld [vmem:[#allocation2 + $0x2340] sm:$0xff]
    %v1248 = vld [vmem:[#allocation2 + $0x2348] sm:$0xff]
    %v1249 = vld [vmem:[#allocation2 + $0x2350] sm:$0xff]
    %v1250 = vld [vmem:[#allocation2 + $0x2358] sm:$0xff]
    %v1251 = vld [vmem:[#allocation2 + $0x2360] sm:$0xff]
    %v1252 = vld [vmem:[#allocation2 + $0x2368] sm:$0xff]
    %v1253 = vld [vmem:[#allocation2 + $0x2370] sm:$0xff]
    %v1254 = vld [vmem:[#allocation2 + $0x2378] sm:$0xff]
    %v1255 = vld [vmem:[#allocation2 + $0x2380] sm:$0xff]
    %v1256 = vld [vmem:[#allocation2 + $0x2388] sm:$0xff]
    %v1257 = vld [vmem:[#allocation2 + $0x2390] sm:$0xff]
    %v1258 = vld [vmem:[#allocation2 + $0x2398] sm:$0xff]
    %v1259 = vld [vmem:[#allocation2 + $0x23a0] sm:$0xff]
    %v1260 = vld [vmem:[#allocation2 + $0x23a8] sm:$0xff]
    %v1261 = vld [vmem:[#allocation2 + $0x23b0] sm:$0xff]
    %v1262 = vld [vmem:[#allocation2 + $0x23b8] sm:$0xff]
    %v1263 = vld [vmem:[#allocation2 + $0x23c0] sm:$0xff]
    %v1264 = vld [vmem:[#allocation2 + $0x23c8] sm:$0xff]
    %v1265 = vld [vmem:[#allocation2 + $0x23d0] sm:$0xff]
    %v1266 = vld [vmem:[#allocation2 + $0x23d8] sm:$0xff]
    %v1267 = vld [vmem:[#allocation2 + $0x23e0] sm:$0xff]
    %v1268 = vld [vmem:[#allocation2 + $0x23e8] sm:$0xff]
    %v1269 = vld [vmem:[#allocation2 + $0x23f0] sm:$0xff]
    %v1270 = vld [vmem:[#allocation2 + $0x23f8] sm:$0xff]
    %v1271 = vld [vmem:[#allocation2 + $0x2400] sm:$0xff]
    %v1272 = vld [vmem:[#allocation2 + $0x2408] sm:$0xff]
    %v1273 = vld [vmem:[#allocation2 + $0x2410] sm:$0xff]
    %v1274 = vld [vmem:[#allocation2 + $0x2418] sm:$0xff]
    %v1275 = vld [vmem:[#allocation2 + $0x2420] sm:$0xff]
    %v1276 = vld [vmem:[#allocation2 + $0x2428] sm:$0xff]
    %v1277 = vld [vmem:[#allocation2 + $0x2430] sm:$0xff]
    %v1278 = vld [vmem:[#allocation2 + $0x2438] sm:$0xff]
    %v1279 = vld [vmem:[#allocation2 + $0x2440] sm:$0xff]
    %v1280 = vld [vmem:[#allocation2 + $0x2448] sm:$0xff]
    %v1281 = vld [vmem:[#allocation2 + $0x2450] sm:$0xff]
    %v1282 = vld [vmem:[#allocation2 + $0x2458] sm:$0xff]
    %v1283 = vld [vmem:[#allocation2 + $0x2460] sm:$0xff]
    %v1284 = vld [vmem:[#allocation2 + $0x2468] sm:$0xff]
    %v1285 = vld [vmem:[#allocation2 + $0x2470] sm:$0xff]
    %v1286 = vld [vmem:[#allocation2 + $0x2478] sm:$0xff]
    %v1287 = vld [vmem:[#allocation2 + $0x2480] sm:$0xff]
    %v1288 = vld [vmem:[#allocation2 + $0x2488] sm:$0xff]
    %v1289 = vld [vmem:[#allocation2 + $0x2490] sm:$0xff]
    %v1290 = vld [vmem:[#allocation2 + $0x2498] sm:$0xff]
    %v1291 = vld [vmem:[#allocation2 + $0x24a0] sm:$0xff]
    %v1292 = vld [vmem:[#allocation2 + $0x24a8] sm:$0xff]
    %v1293 = vld [vmem:[#allocation2 + $0x24b0] sm:$0xff]
    %v1294 = vld [vmem:[#allocation2 + $0x24b8] sm:$0xff]
    %v1295 = vld [vmem:[#allocation2 + $0x24c0] sm:$0xff]
    %v1296 = vld [vmem:[#allocation2 + $0x24c8] sm:$0xff]
    %v1297 = vld [vmem:[#allocation2 + $0x24d0] sm:$0xff]
    %v1298 = vld [vmem:[#allocation2 + $0x24d8] sm:$0xff]
    %v1299 = vld [vmem:[#allocation2 + $0x24e0] sm:$0xff]
    %v1300 = vld [vmem:[#allocation2 + $0x24e8] sm:$0xff]
    %v1301 = vld [vmem:[#allocation2 + $0x24f0] sm:$0xff]
    %v1302 = vld [vmem:[#allocation2 + $0x24f8] sm:$0xff]
    %v1303 = vld [vmem:[#allocation2 + $0x2500] sm:$0xff]
    %v1304 = vld [vmem:[#allocation2 + $0x2508] sm:$0xff]
    %v1305 = vld [vmem:[#allocation2 + $0x2510] sm:$0xff]
    %v1306 = vld [vmem:[#allocation2 + $0x2518] sm:$0xff]
    %v1307 = vld [vmem:[#allocation2 + $0x2520] sm:$0xff]
    %v1308 = vld [vmem:[#allocation2 + $0x2528] sm:$0xff]
    %v1309 = vld [vmem:[#allocation2 + $0x2530] sm:$0xff]
    %v1310 = vld [vmem:[#allocation2 + $0x2538] sm:$0xff]
    %v1311 = vld [vmem:[#allocation2 + $0x2540] sm:$0xff]
    %v1312 = vld [vmem:[#allocation2 + $0x2548] sm:$0xff]
    %v1313 = vld [vmem:[#allocation2 + $0x2550] sm:$0xff]
    %v1314 = vld [vmem:[#allocation2 + $0x2558] sm:$0xff]
    %v1315 = vld [vmem:[#allocation2 + $0x2560] sm:$0xff]
    %v1316 = vld [vmem:[#allocation2 + $0x2568] sm:$0xff]
    %v1317 = vld [vmem:[#allocation2 + $0x2570] sm:$0xff]
    %v1318 = vld [vmem:[#allocation2 + $0x2578] sm:$0xff]
    %v1319 = vld [vmem:[#allocation2 + $0x2580] sm:$0xff]
    %v1320 = vld [vmem:[#allocation2 + $0x2588] sm:$0xff]
    %v1321 = vld [vmem:[#allocation2 + $0x2590] sm:$0xff]
    %v1322 = vld [vmem:[#allocation2 + $0x2598] sm:$0xff]
    %v1323 = vld [vmem:[#allocation2 + $0x25a0] sm:$0xff]
    %v1324 = vld [vmem:[#allocation2 + $0x25a8] sm:$0xff]
    %v1325 = vld [vmem:[#allocation2 + $0x25b0] sm:$0xff]
    %v1326 = vld [vmem:[#allocation2 + $0x25b8] sm:$0xff]
    %v1327 = vld [vmem:[#allocation2 + $0x25c0] sm:$0xff]
    %v1328 = vld [vmem:[#allocation2 + $0x25c8] sm:$0xff]
    %v1329 = vld [vmem:[#allocation2 + $0x25d0] sm:$0xff]
    %v1330 = vld [vmem:[#allocation2 + $0x25d8] sm:$0xff]
    %v1331 = vld [vmem:[#allocation2 + $0x25e0] sm:$0xff]
    %v1332 = vld [vmem:[#allocation2 + $0x25e8] sm:$0xff]
    %v1333 = vld [vmem:[#allocation2 + $0x25f0] sm:$0xff]
    %v1334 = vld [vmem:[#allocation2 + $0x25f8] sm:$0xff]
    %v1335 = vld [vmem:[#allocation2 + $0x2600] sm:$0xff]
    %v1336 = vld [vmem:[#allocation2 + $0x2608] sm:$0xff]
    %v1337 = vld [vmem:[#allocation2 + $0x2610] sm:$0xff]
    %v1338 = vld [vmem:[#allocation2 + $0x2618] sm:$0xff]
    %v1339 = vld [vmem:[#allocation2 + $0x2620] sm:$0xff]
    %v1340 = vld [vmem:[#allocation2 + $0x2628] sm:$0xff]
    %v1341 = vld [vmem:[#allocation2 + $0x2630] sm:$0xff]
    %v1342 = vld [vmem:[#allocation2 + $0x2638] sm:$0xff]
    %v1343 = vld [vmem:[#allocation2 + $0x2640] sm:$0xff]
    %v1344 = vld [vmem:[#allocation2 + $0x2648] sm:$0xff]
    %v1345 = vld [vmem:[#allocation2 + $0x2650] sm:$0xff]
    %v1346 = vld [vmem:[#allocation2 + $0x2658] sm:$0xff]
    %v1347 = vld [vmem:[#allocation2 + $0x2660] sm:$0xff]
    %v1348 = vld [vmem:[#allocation2 + $0x2668] sm:$0xff]
    %v1349 = vld [vmem:[#allocation2 + $0x2670] sm:$0xff]
    %v1350 = vld [vmem:[#allocation2 + $0x2678] sm:$0xff]
    %v1351 = vld [vmem:[#allocation2 + $0x2680] sm:$0xff]
    %v1352 = vld [vmem:[#allocation2 + $0x2688] sm:$0xff]
    %v1353 = vld [vmem:[#allocation2 + $0x2690] sm:$0xff]
    %v1354 = vld [vmem:[#allocation2 + $0x2698] sm:$0xff]
    %v1355 = vld [vmem:[#allocation2 + $0x26a0] sm:$0xff]
    %v1356 = vld [vmem:[#allocation2 + $0x26a8] sm:$0xff]
    %v1357 = vld [vmem:[#allocation2 + $0x26b0] sm:$0xff]
    %v1358 = vld [vmem:[#allocation2 + $0x26b8] sm:$0xff]
    %v1359 = vld [vmem:[#allocation2 + $0x26c0] sm:$0xff]
    %v1360 = vld [vmem:[#allocation2 + $0x26c8] sm:$0xff]
    %v1361 = vld [vmem:[#allocation2 + $0x26d0] sm:$0xff]
    %v1362 = vld [vmem:[#allocation2 + $0x26d8] sm:$0xff]
    %v1363 = vld [vmem:[#allocation2 + $0x26e0] sm:$0xff]
    %v1364 = vld [vmem:[#allocation2 + $0x26e8] sm:$0xff]
    %v1365 = vld [vmem:[#allocation2 + $0x26f0] sm:$0xff]
    %v1366 = vld [vmem:[#allocation2 + $0x26f8] sm:$0xff]
    %v1367 = vld [vmem:[#allocation2 + $0x2700] sm:$0xff]
    %v1368 = vld [vmem:[#allocation2 + $0x2708] sm:$0xff]
    %v1369 = vld [vmem:[#allocation2 + $0x2710] sm:$0xff]
    %v1370 = vld [vmem:[#allocation2 + $0x2718] sm:$0xff]
    %v1371 = vld [vmem:[#allocation2 + $0x2720] sm:$0xff]
    %v1372 = vld [vmem:[#allocation2 + $0x2728] sm:$0xff]
    %v1373 = vld [vmem:[#allocation2 + $0x2730] sm:$0xff]
    %v1374 = vld [vmem:[#allocation2 + $0x2738] sm:$0xff]
    %v1375 = vld [vmem:[#allocation2 + $0x2740] sm:$0xff]
    %v1376 = vld [vmem:[#allocation2 + $0x2748] sm:$0xff]
    %v1377 = vld [vmem:[#allocation2 + $0x2750] sm:$0xff]
    %v1378 = vld [vmem:[#allocation2 + $0x2758] sm:$0xff]
    %v1379 = vld [vmem:[#allocation2 + $0x2760] sm:$0xff]
    %v1380 = vld [vmem:[#allocation2 + $0x2768] sm:$0xff]
    %v1381 = vld [vmem:[#allocation2 + $0x2770] sm:$0xff]
    %v1382 = vld [vmem:[#allocation2 + $0x2778] sm:$0xff]
    %v1383 = vld [vmem:[#allocation2 + $0x2780] sm:$0xff]
    %v1384 = vld [vmem:[#allocation2 + $0x2788] sm:$0xff]
    %v1385 = vld [vmem:[#allocation2 + $0x2790] sm:$0xff]
    %v1386 = vld [vmem:[#allocation2 + $0x2798] sm:$0xff]
    %v1387 = vld [vmem:[#allocation2 + $0x27a0] sm:$0xff]
    %v1388 = vld [vmem:[#allocation2 + $0x27a8] sm:$0xff]
    %v1389 = vld [vmem:[#allocation2 + $0x27b0] sm:$0xff]
    %v1390 = vld [vmem:[#allocation2 + $0x27b8] sm:$0xff]
    %v1391 = vld [vmem:[#allocation2 + $0x27c0] sm:$0xff]
    %v1392 = vld [vmem:[#allocation2 + $0x27c8] sm:$0xff]
    %v1393 = vld [vmem:[#allocation2 + $0x27d0] sm:$0xff]
    %v1394 = vld [vmem:[#allocation2 + $0x27d8] sm:$0xff]
    %v1395 = vld [vmem:[#allocation2 + $0x27e0] sm:$0xff]
    %v1396 = vld [vmem:[#allocation2 + $0x27e8] sm:$0xff]
    %v1397 = vld [vmem:[#allocation2 + $0x27f0] sm:$0xff]
    %v1398 = vld [vmem:[#allocation2 + $0x27f8] sm:$0xff]
    %v1399 = vld [vmem:[#allocation2 + $0x2800] sm:$0xff]
    %v1400 = vld [vmem:[#allocation2 + $0x2808] sm:$0xff]
    %v1401 = vld [vmem:[#allocation2 + $0x2810] sm:$0xff]
    %v1402 = vld [vmem:[#allocation2 + $0x2818] sm:$0xff]
    %v1403 = vld [vmem:[#allocation2 + $0x2820] sm:$0xff]
    %v1404 = vld [vmem:[#allocation2 + $0x2828] sm:$0xff]
    %v1405 = vld [vmem:[#allocation2 + $0x2830] sm:$0xff]
    %v1406 = vld [vmem:[#allocation2 + $0x2838] sm:$0xff]
    %v1407 = vld [vmem:[#allocation2 + $0x2840] sm:$0xff]
    %v1408 = vld [vmem:[#allocation2 + $0x2848] sm:$0xff]
    %v1409 = vld [vmem:[#allocation2 + $0x2850] sm:$0xff]
    %v1410 = vld [vmem:[#allocation2 + $0x2858] sm:$0xff]
    %v1411 = vld [vmem:[#allocation2 + $0x2860] sm:$0xff]
    %v1412 = vld [vmem:[#allocation2 + $0x2868] sm:$0xff]
    %v1413 = vld [vmem:[#allocation2 + $0x2870] sm:$0xff]
    %v1414 = vld [vmem:[#allocation2 + $0x2878] sm:$0xff]
    %v1415 = vld [vmem:[#allocation2 + $0x2880] sm:$0xff]
    %v1416 = vld [vmem:[#allocation2 + $0x2888] sm:$0xff]
    %v1417 = vld [vmem:[#allocation2 + $0x2890] sm:$0xff]
    %v1418 = vld [vmem:[#allocation2 + $0x2898] sm:$0xff]
    %v1419 = vld [vmem:[#allocation2 + $0x28a0] sm:$0xff]
    %v1420 = vld [vmem:[#allocation2 + $0x28a8] sm:$0xff]
    %v1421 = vld [vmem:[#allocation2 + $0x28b0] sm:$0xff]
    %v1422 = vld [vmem:[#allocation2 + $0x28b8] sm:$0xff]
    %v1423 = vld [vmem:[#allocation2 + $0x28c0] sm:$0xff]
    %v1424 = vld [vmem:[#allocation2 + $0x28c8] sm:$0xff]
    %v1425 = vld [vmem:[#allocation2 + $0x28d0] sm:$0xff]
    %v1426 = vld [vmem:[#allocation2 + $0x28d8] sm:$0xff]
    %v1427 = vld [vmem:[#allocation2 + $0x28e0] sm:$0xff]
    %v1428 = vld [vmem:[#allocation2 + $0x28e8] sm:$0xff]
    %v1429 = vld [vmem:[#allocation2 + $0x28f0] sm:$0xff]
    %v1430 = vld [vmem:[#allocation2 + $0x28f8] sm:$0xff]
    %v1431 = vld [vmem:[#allocation2 + $0x2900] sm:$0xff]
    %v1432 = vld [vmem:[#allocation2 + $0x2908] sm:$0xff]
    %v1433 = vld [vmem:[#allocation2 + $0x2910] sm:$0xff]
    %v1434 = vld [vmem:[#allocation2 + $0x2918] sm:$0xff]
    %v1435 = vld [vmem:[#allocation2 + $0x2920] sm:$0xff]
    %v1436 = vld [vmem:[#allocation2 + $0x2928] sm:$0xff]
    %v1437 = vld [vmem:[#allocation2 + $0x2930] sm:$0xff]
    %v1438 = vld [vmem:[#allocation2 + $0x2938] sm:$0xff]
    %v1439 = vld [vmem:[#allocation2 + $0x2940] sm:$0xff]
    %v1440 = vld [vmem:[#allocation2 + $0x2948] sm:$0xff]
    %v1441 = vld [vmem:[#allocation2 + $0x2950] sm:$0xff]
    %v1442 = vld [vmem:[#allocation2 + $0x2958] sm:$0xff]
    %v1443 = vld [vmem:[#allocation2 + $0x2960] sm:$0xff]
    %v1444 = vld [vmem:[#allocation2 + $0x2968] sm:$0xff]
    %v1445 = vld [vmem:[#allocation2 + $0x2970] sm:$0xff]
    %v1446 = vld [vmem:[#allocation2 + $0x2978] sm:$0xff]
    %v1447 = vld [vmem:[#allocation2 + $0x2980] sm:$0xff]
    %v1448 = vld [vmem:[#allocation2 + $0x2988] sm:$0xff]
    %v1449 = vld [vmem:[#allocation2 + $0x2990] sm:$0xff]
    %v1450 = vld [vmem:[#allocation2 + $0x2998] sm:$0xff]
    %v1451 = vld [vmem:[#allocation2 + $0x29a0] sm:$0xff]
    %v1452 = vld [vmem:[#allocation2 + $0x29a8] sm:$0xff]
    %v1453 = vld [vmem:[#allocation2 + $0x29b0] sm:$0xff]
    %v1454 = vld [vmem:[#allocation2 + $0x29b8] sm:$0xff]
    %v1455 = vld [vmem:[#allocation2 + $0x29c0] sm:$0xff]
    %v1456 = vld [vmem:[#allocation2 + $0x29c8] sm:$0xff]
    %v1457 = vld [vmem:[#allocation2 + $0x29d0] sm:$0xff]
    %v1458 = vld [vmem:[#allocation2 + $0x29d8] sm:$0xff]
    %v1459 = vld [vmem:[#allocation2 + $0x29e0] sm:$0xff]
    %v1460 = vld [vmem:[#allocation2 + $0x29e8] sm:$0xff]
    %v1461 = vld [vmem:[#allocation2 + $0x29f0] sm:$0xff]
    %v1462 = vld [vmem:[#allocation2 + $0x29f8] sm:$0xff]
    %v1463 = vld [vmem:[#allocation2 + $0x2a00] sm:$0xff]
    %v1464 = vld [vmem:[#allocation2 + $0x2a08] sm:$0xff]
    %v1465 = vld [vmem:[#allocation2 + $0x2a10] sm:$0xff]
    %v1466 = vld [vmem:[#allocation2 + $0x2a18] sm:$0xff]
    %v1467 = vld [vmem:[#allocation2 + $0x2a20] sm:$0xff]
    %v1468 = vld [vmem:[#allocation2 + $0x2a28] sm:$0xff]
    %v1469 = vld [vmem:[#allocation2 + $0x2a30] sm:$0xff]
    %v1470 = vld [vmem:[#allocation2 + $0x2a38] sm:$0xff]
    %v1471 = vld [vmem:[#allocation2 + $0x2a40] sm:$0xff]
    %v1472 = vld [vmem:[#allocation2 + $0x2a48] sm:$0xff]
    %v1473 = vld [vmem:[#allocation2 + $0x2a50] sm:$0xff]
    %v1474 = vld [vmem:[#allocation2 + $0x2a58] sm:$0xff]
    %v1475 = vld [vmem:[#allocation2 + $0x2a60] sm:$0xff]
    %v1476 = vld [vmem:[#allocation2 + $0x2a68] sm:$0xff]
    %v1477 = vld [vmem:[#allocation2 + $0x2a70] sm:$0xff]
    %v1478 = vld [vmem:[#allocation2 + $0x2a78] sm:$0xff]
    %v1479 = vld [vmem:[#allocation2 + $0x2a80] sm:$0xff]
    %v1480 = vld [vmem:[#allocation2 + $0x2a88] sm:$0xff]
    %v1481 = vld [vmem:[#allocation2 + $0x2a90] sm:$0xff]
    %v1482 = vld [vmem:[#allocation2 + $0x2a98] sm:$0xff]
    %v1483 = vld [vmem:[#allocation2 + $0x2aa0] sm:$0xff]
    %v1484 = vld [vmem:[#allocation2 + $0x2aa8] sm:$0xff]
    %v1485 = vld [vmem:[#allocation2 + $0x2ab0] sm:$0xff]
    %v1486 = vld [vmem:[#allocation2 + $0x2ab8] sm:$0xff]
    %v1487 = vld [vmem:[#allocation2 + $0x2ac0] sm:$0xff]
    %v1488 = vld [vmem:[#allocation2 + $0x2ac8] sm:$0xff]
    %v1489 = vld [vmem:[#allocation2 + $0x2ad0] sm:$0xff]
    %v1490 = vld [vmem:[#allocation2 + $0x2ad8] sm:$0xff]
    %v1491 = vld [vmem:[#allocation2 + $0x2ae0] sm:$0xff]
    %v1492 = vld [vmem:[#allocation2 + $0x2ae8] sm:$0xff]
    %v1493 = vld [vmem:[#allocation2 + $0x2af0] sm:$0xff]
    %v1494 = vld [vmem:[#allocation2 + $0x2af8] sm:$0xff]
    %v1495 = vld [vmem:[#allocation2 + $0x2b00] sm:$0xff]
    %v1496 = vld [vmem:[#allocation2 + $0x2b08] sm:$0xff]
    %v1497 = vld [vmem:[#allocation2 + $0x2b10] sm:$0xff]
    %v1498 = vld [vmem:[#allocation2 + $0x2b18] sm:$0xff]
    %v1499 = vld [vmem:[#allocation2 + $0x2b20] sm:$0xff]
    %v1500 = vld [vmem:[#allocation2 + $0x2b28] sm:$0xff]
    %v1501 = vld [vmem:[#allocation2 + $0x2b30] sm:$0xff]
    %v1502 = vld [vmem:[#allocation2 + $0x2b38] sm:$0xff]
    %v1503 = vld [vmem:[#allocation2 + $0x2b40] sm:$0xff]
    %v1504 = vld [vmem:[#allocation2 + $0x2b48] sm:$0xff]
    %v1505 = vld [vmem:[#allocation2 + $0x2b50] sm:$0xff]
    %v1506 = vld [vmem:[#allocation2 + $0x2b58] sm:$0xff]
    %v1507 = vld [vmem:[#allocation2 + $0x2b60] sm:$0xff]
    %v1508 = vld [vmem:[#allocation2 + $0x2b68] sm:$0xff]
    %v1509 = vld [vmem:[#allocation2 + $0x2b70] sm:$0xff]
    %v1510 = vld [vmem:[#allocation2 + $0x2b78] sm:$0xff]
    %v1511 = vld [vmem:[#allocation2 + $0x2b80] sm:$0xff]
    %v1512 = vld [vmem:[#allocation2 + $0x2b88] sm:$0xff]
    %v1513 = vld [vmem:[#allocation2 + $0x2b90] sm:$0xff]
    %v1514 = vld [vmem:[#allocation2 + $0x2b98] sm:$0xff]
    %v1515 = vld [vmem:[#allocation2 + $0x2ba0] sm:$0xff]
    %v1516 = vld [vmem:[#allocation2 + $0x2ba8] sm:$0xff]
    %v1517 = vld [vmem:[#allocation2 + $0x2bb0] sm:$0xff]
    %v1518 = vld [vmem:[#allocation2 + $0x2bb8] sm:$0xff]
    %v1519 = vld [vmem:[#allocation2 + $0x2bc0] sm:$0xff]
    %v1520 = vld [vmem:[#allocation2 + $0x2bc8] sm:$0xff]
    %v1521 = vld [vmem:[#allocation2 + $0x2bd0] sm:$0xff]
    %v1522 = vld [vmem:[#allocation2 + $0x2bd8] sm:$0xff]
    %v1523 = vld [vmem:[#allocation2 + $0x2be0] sm:$0xff]
    %v1524 = vld [vmem:[#allocation2 + $0x2be8] sm:$0xff]
    %v1525 = vld [vmem:[#allocation2 + $0x2bf0] sm:$0xff]
    %v1526 = vld [vmem:[#allocation2 + $0x2bf8] sm:$0xff]
    %v1527 = vld [vmem:[#allocation2 + $0x2c00] sm:$0xff]
    %v1528 = vld [vmem:[#allocation2 + $0x2c08] sm:$0xff]
    %v1529 = vld [vmem:[#allocation2 + $0x2c10] sm:$0xff]
    %v1530 = vld [vmem:[#allocation2 + $0x2c18] sm:$0xff]
    %v1531 = vld [vmem:[#allocation2 + $0x2c20] sm:$0xff]
    %v1532 = vld [vmem:[#allocation2 + $0x2c28] sm:$0xff]
    %v1533 = vld [vmem:[#allocation2 + $0x2c30] sm:$0xff]
    %v1534 = vld [vmem:[#allocation2 + $0x2c38] sm:$0xff]
    %v1535 = vld [vmem:[#allocation2 + $0x2c40] sm:$0xff]
    %v1536 = vld [vmem:[#allocation2 + $0x2c48] sm:$0xff]
    %v1537 = vld [vmem:[#allocation2 + $0x2c50] sm:$0xff]
    %v1538 = vld [vmem:[#allocation2 + $0x2c58] sm:$0xff]
    %v1539 = vld [vmem:[#allocation2 + $0x2c60] sm:$0xff]
    %v1540 = vld [vmem:[#allocation2 + $0x2c68] sm:$0xff]
    %v1541 = vld [vmem:[#allocation2 + $0x2c70] sm:$0xff]
    %v1542 = vld [vmem:[#allocation2 + $0x2c78] sm:$0xff]
    %v1543 = vld [vmem:[#allocation2 + $0x2c80] sm:$0xff]
    %v1544 = vld [vmem:[#allocation2 + $0x2c88] sm:$0xff]
    %v1545 = vld [vmem:[#allocation2 + $0x2c90] sm:$0xff]
    %v1546 = vld [vmem:[#allocation2 + $0x2c98] sm:$0xff]
    %v1547 = vld [vmem:[#allocation2 + $0x2ca0] sm:$0xff]
    %v1548 = vld [vmem:[#allocation2 + $0x2ca8] sm:$0xff]
    %v1549 = vld [vmem:[#allocation2 + $0x2cb0] sm:$0xff]
    %v1550 = vld [vmem:[#allocation2 + $0x2cb8] sm:$0xff]
    %v1551 = vld [vmem:[#allocation2 + $0x2cc0] sm:$0xff]
    %v1552 = vld [vmem:[#allocation2 + $0x2cc8] sm:$0xff]
    %v1553 = vld [vmem:[#allocation2 + $0x2cd0] sm:$0xff]
    %v1554 = vld [vmem:[#allocation2 + $0x2cd8] sm:$0xff]
    %v1555 = vld [vmem:[#allocation2 + $0x2ce0] sm:$0xff]
    %v1556 = vld [vmem:[#allocation2 + $0x2ce8] sm:$0xff]
    %v1557 = vld [vmem:[#allocation2 + $0x2cf0] sm:$0xff]
    %v1558 = vld [vmem:[#allocation2 + $0x2cf8] sm:$0xff]
    %v1559 = vld [vmem:[#allocation2 + $0x2d00] sm:$0xff]
    %v1560 = vld [vmem:[#allocation2 + $0x2d08] sm:$0xff]
    %v1561 = vld [vmem:[#allocation2 + $0x2d10] sm:$0xff]
    %v1562 = vld [vmem:[#allocation2 + $0x2d18] sm:$0xff]
    %v1563 = vld [vmem:[#allocation2 + $0x2d20] sm:$0xff]
    %v1564 = vld [vmem:[#allocation2 + $0x2d28] sm:$0xff]
    %v1565 = vld [vmem:[#allocation2 + $0x2d30] sm:$0xff]
    %v1566 = vld [vmem:[#allocation2 + $0x2d38] sm:$0xff]
    %v1567 = vld [vmem:[#allocation2 + $0x2d40] sm:$0xff]
    %v1568 = vld [vmem:[#allocation2 + $0x2d48] sm:$0xff]
    %v1569 = vld [vmem:[#allocation2 + $0x2d50] sm:$0xff]
    %v1570 = vld [vmem:[#allocation2 + $0x2d58] sm:$0xff]
    %v1571 = vld [vmem:[#allocation2 + $0x2d60] sm:$0xff]
    %v1572 = vld [vmem:[#allocation2 + $0x2d68] sm:$0xff]
    %v1573 = vld [vmem:[#allocation2 + $0x2d70] sm:$0xff]
    %v1574 = vld [vmem:[#allocation2 + $0x2d78] sm:$0xff]
    %v1575 = vld [vmem:[#allocation2 + $0x2d80] sm:$0xff]
    %v1576 = vld [vmem:[#allocation2 + $0x2d88] sm:$0xff]
    %v1577 = vld [vmem:[#allocation2 + $0x2d90] sm:$0xff]
    %v1578 = vld [vmem:[#allocation2 + $0x2d98] sm:$0xff]
    %v1579 = vld [vmem:[#allocation2 + $0x2da0] sm:$0xff]
    %v1580 = vld [vmem:[#allocation2 + $0x2da8] sm:$0xff]
    %v1581 = vld [vmem:[#allocation2 + $0x2db0] sm:$0xff]
    %v1582 = vld [vmem:[#allocation2 + $0x2db8] sm:$0xff]
    %v1583 = vld [vmem:[#allocation2 + $0x2dc0] sm:$0xff]
    %v1584 = vld [vmem:[#allocation2 + $0x2dc8] sm:$0xff]
    %v1585 = vld [vmem:[#allocation2 + $0x2dd0] sm:$0xff]
    %v1586 = vld [vmem:[#allocation2 + $0x2dd8] sm:$0xff]
    %v1587 = vld [vmem:[#allocation2 + $0x2de0] sm:$0xff]
    %v1588 = vld [vmem:[#allocation2 + $0x2de8] sm:$0xff]
    %v1589 = vld [vmem:[#allocation2 + $0x2df0] sm:$0xff]
    %v1590 = vld [vmem:[#allocation2 + $0x2df8] sm:$0xff]
    %v1591 = vld [vmem:[#allocation2 + $0x2e00] sm:$0xff]
    %v1592 = vld [vmem:[#allocation2 + $0x2e08] sm:$0xff]
    %v1593 = vld [vmem:[#allocation2 + $0x2e10] sm:$0xff]
    %v1594 = vld [vmem:[#allocation2 + $0x2e18] sm:$0xff]
    %v1595 = vld [vmem:[#allocation2 + $0x2e20] sm:$0xff]
    %v1596 = vld [vmem:[#allocation2 + $0x2e28] sm:$0xff]
    %v1597 = vld [vmem:[#allocation2 + $0x2e30] sm:$0xff]
    %v1598 = vld [vmem:[#allocation2 + $0x2e38] sm:$0xff]
    %v1599 = vld [vmem:[#allocation2 + $0x2e40] sm:$0xff]
    %v1600 = vld [vmem:[#allocation2 + $0x2e48] sm:$0xff]
    %v1601 = vld [vmem:[#allocation2 + $0x2e50] sm:$0xff]
    %v1602 = vld [vmem:[#allocation2 + $0x2e58] sm:$0xff]
    %v1603 = vld [vmem:[#allocation2 + $0x2e60] sm:$0xff]
    %v1604 = vld [vmem:[#allocation2 + $0x2e68] sm:$0xff]
    %v1605 = vld [vmem:[#allocation2 + $0x2e70] sm:$0xff]
    %v1606 = vld [vmem:[#allocation2 + $0x2e78] sm:$0xff]
    %v1607 = vld [vmem:[#allocation2 + $0x2e80] sm:$0xff]
    %v1608 = vld [vmem:[#allocation2 + $0x2e88] sm:$0xff]
    %v1609 = vld [vmem:[#allocation2 + $0x2e90] sm:$0xff]
    %v1610 = vld [vmem:[#allocation2 + $0x2e98] sm:$0xff]
    %v1611 = vld [vmem:[#allocation2 + $0x2ea0] sm:$0xff]
    %v1612 = vld [vmem:[#allocation2 + $0x2ea8] sm:$0xff]
    %v1613 = vld [vmem:[#allocation2 + $0x2eb0] sm:$0xff]
    %v1614 = vld [vmem:[#allocation2 + $0x2eb8] sm:$0xff]
    %v1615 = vld [vmem:[#allocation2 + $0x2ec0] sm:$0xff]
    %v1616 = vld [vmem:[#allocation2 + $0x2ec8] sm:$0xff]
    %v1617 = vld [vmem:[#allocation2 + $0x2ed0] sm:$0xff]
    %v1618 = vld [vmem:[#allocation2 + $0x2ed8] sm:$0xff]
    %v1619 = vld [vmem:[#allocation2 + $0x2ee0] sm:$0xff]
    %v1620 = vld [vmem:[#allocation2 + $0x2ee8] sm:$0xff]
    %v1621 = vld [vmem:[#allocation2 + $0x2ef0] sm:$0xff]
    %v1622 = vld [vmem:[#allocation2 + $0x2ef8] sm:$0xff]
    %v1623 = vld [vmem:[#allocation2 + $0x2f00] sm:$0xff]
    %v1624 = vld [vmem:[#allocation2 + $0x2f08] sm:$0xff]
    %v1625 = vld [vmem:[#allocation2 + $0x2f10] sm:$0xff]
    %v1626 = vld [vmem:[#allocation2 + $0x2f18] sm:$0xff]
    %v1627 = vld [vmem:[#allocation2 + $0x2f20] sm:$0xff]
    %v1628 = vld [vmem:[#allocation2 + $0x2f28] sm:$0xff]
    %v1629 = vld [vmem:[#allocation2 + $0x2f30] sm:$0xff]
    %v1630 = vld [vmem:[#allocation2 + $0x2f38] sm:$0xff]
    %v1631 = vld [vmem:[#allocation2 + $0x2f40] sm:$0xff]
    %v1632 = vld [vmem:[#allocation2 + $0x2f48] sm:$0xff]
    %v1633 = vld [vmem:[#allocation2 + $0x2f50] sm:$0xff]
    %v1634 = vld [vmem:[#allocation2 + $0x2f58] sm:$0xff]
    %v1635 = vld [vmem:[#allocation2 + $0x2f60] sm:$0xff]
    %v1636 = vld [vmem:[#allocation2 + $0x2f68] sm:$0xff]
    %v1637 = vld [vmem:[#allocation2 + $0x2f70] sm:$0xff]
    %v1638 = vld [vmem:[#allocation2 + $0x2f78] sm:$0xff]
    %v1639 = vld [vmem:[#allocation2 + $0x2f80] sm:$0xff]
    %v1640 = vld [vmem:[#allocation2 + $0x2f88] sm:$0xff]
    %v1641 = vld [vmem:[#allocation2 + $0x2f90] sm:$0xff]
    %v1642 = vld [vmem:[#allocation2 + $0x2f98] sm:$0xff]
    %v1643 = vld [vmem:[#allocation2 + $0x2fa0] sm:$0xff]
    %v1644 = vld [vmem:[#allocation2 + $0x2fa8] sm:$0xff]
    %v1645 = vld [vmem:[#allocation2 + $0x2fb0] sm:$0xff]
    %v1646 = vld [vmem:[#allocation2 + $0x2fb8] sm:$0xff]
    %v1647 = vld [vmem:[#allocation2 + $0x2fc0] sm:$0xff]
    %v1648 = vld [vmem:[#allocation2 + $0x2fc8] sm:$0xff]
    %v1649 = vld [vmem:[#allocation2 + $0x2fd0] sm:$0xff]
    %v1650 = vld [vmem:[#allocation2 + $0x2fd8] sm:$0xff]
    %v1651 = vld [vmem:[#allocation2 + $0x2fe0] sm:$0xff]
    %v1652 = vld [vmem:[#allocation2 + $0x2fe8] sm:$0xff]
    %v1653 = vld [vmem:[#allocation2 + $0x2ff0] sm:$0xff]
    %v1654 = vld [vmem:[#allocation2 + $0x2ff8] sm:$0xff]
    %v1655 = vld [vmem:[#allocation5] sm:$0xf]
    %v1657 = vlaneseq
    %v1658 = vshrl.u32 %v1657, 7
    %v1659 = vsub.s32 0, %v1658
    %v1660 = vrot.slane %v1655, %v1659
    %v1661 = vlaneseq
    %v1662 = vshrl.u32 %v1661, 7
    %v1663 = vsub.s32 1, %v1662
    %v1664 = vrot.slane %v1655, %v1663
    %v1665 = vlaneseq
    %v1666 = vshrl.u32 %v1665, 7
    %v1667 = vsub.s32 2, %v1666
    %v1668 = vrot.slane %v1655, %v1667
    %v1669 = vlaneseq
    %v1670 = vshrl.u32 %v1669, 7
    %v1671 = vsub.s32 3, %v1670
    %v1672 = vrot.slane %v1655, %v1671
    %v1701 = vcombine.low %v95, %v101
    %v1702 = vcombine.high %v95, %v101
    %v1703 = vcombine.low %v107, %v113
    %v1704 = vcombine.high %v107, %v113
    %v1706 = vunpack.c.l.s4 1983009808
    %v1707 = vunpack.c.0.s8 %v1706
    %v1708 = vlaneseq
    %v1709 = vshrl.u32 %v1708, 7
    %v1710 = vsub.s32 %v1707, %v1709
    %v1711 = vrot.slane %v1701, %v1710
    %v1713 = vunpack.c.l.s4 1983009808
    %v1714 = vunpack.c.0.s8 %v1713
    %v1715 = vlaneseq
    %v1716 = vshrl.u32 %v1715, 7
    %v1717 = vsub.s32 %v1714, %v1716
    %v1718 = vrot.slane %v1702, %v1717
    %v1720 = vunpack.c.l.s4 1983009808
    %v1721 = vunpack.c.0.s8 %v1720
    %v1722 = vlaneseq
    %v1723 = vshrl.u32 %v1722, 7
    %v1724 = vsub.s32 %v1721, %v1723
    %v1725 = vrot.slane %v1703, %v1724
    %v1727 = vunpack.c.l.s4 1983009808
    %v1728 = vunpack.c.0.s8 %v1727
    %v1729 = vlaneseq
    %v1730 = vshrl.u32 %v1729, 7
    %v1731 = vsub.s32 %v1728, %v1730
    %v1732 = vrot.slane %v1704, %v1731
    %v1733 = vcombine.low %v1711, %v1725
    %v1734 = vcombine.high %v1711, %v1725
    %v1735 = vcombine.low %v1718, %v1732
    %v1736 = vcombine.high %v1718, %v1732
    %v1737 = vcombine.low %v96, %v102
    %v1738 = vcombine.high %v96, %v102
    %v1739 = vcombine.low %v108, %v114
    %v1740 = vcombine.high %v108, %v114
    %v1742 = vunpack.c.l.s4 1983009808
    %v1743 = vunpack.c.0.s8 %v1742
    %v1744 = vlaneseq
    %v1745 = vshrl.u32 %v1744, 7
    %v1746 = vsub.s32 %v1743, %v1745
    %v1747 = vrot.slane %v1737, %v1746
    %v1749 = vunpack.c.l.s4 1983009808
    %v1750 = vunpack.c.0.s8 %v1749
    %v1751 = vlaneseq
    %v1752 = vshrl.u32 %v1751, 7
    %v1753 = vsub.s32 %v1750, %v1752
    %v1754 = vrot.slane %v1738, %v1753
    %v1756 = vunpack.c.l.s4 1983009808
    %v1757 = vunpack.c.0.s8 %v1756
    %v1758 = vlaneseq
    %v1759 = vshrl.u32 %v1758, 7
    %v1760 = vsub.s32 %v1757, %v1759
    %v1761 = vrot.slane %v1739, %v1760
    %v1763 = vunpack.c.l.s4 1983009808
    %v1764 = vunpack.c.0.s8 %v1763
    %v1765 = vlaneseq
    %v1766 = vshrl.u32 %v1765, 7
    %v1767 = vsub.s32 %v1764, %v1766
    %v1768 = vrot.slane %v1740, %v1767
    %v1769 = vcombine.low %v1747, %v1761
    %v1770 = vcombine.high %v1747, %v1761
    %v1771 = vcombine.low %v1754, %v1768
    %v1772 = vcombine.high %v1754, %v1768
    %v1773 = vcombine.low %v97, %v103
    %v1774 = vcombine.high %v97, %v103
    %v1775 = vcombine.low %v109, %v115
    %v1776 = vcombine.high %v109, %v115
    %v1778 = vunpack.c.l.s4 1983009808
    %v1779 = vunpack.c.0.s8 %v1778
    %v1780 = vlaneseq
    %v1781 = vshrl.u32 %v1780, 7
    %v1782 = vsub.s32 %v1779, %v1781
    %v1783 = vrot.slane %v1773, %v1782
    %v1785 = vunpack.c.l.s4 1983009808
    %v1786 = vunpack.c.0.s8 %v1785
    %v1787 = vlaneseq
    %v1788 = vshrl.u32 %v1787, 7
    %v1789 = vsub.s32 %v1786, %v1788
    %v1790 = vrot.slane %v1774, %v1789
    %v1792 = vunpack.c.l.s4 1983009808
    %v1793 = vunpack.c.0.s8 %v1792
    %v1794 = vlaneseq
    %v1795 = vshrl.u32 %v1794, 7
    %v1796 = vsub.s32 %v1793, %v1795
    %v1797 = vrot.slane %v1775, %v1796
    %v1799 = vunpack.c.l.s4 1983009808
    %v1800 = vunpack.c.0.s8 %v1799
    %v1801 = vlaneseq
    %v1802 = vshrl.u32 %v1801, 7
    %v1803 = vsub.s32 %v1800, %v1802
    %v1804 = vrot.slane %v1776, %v1803
    %v1805 = vcombine.low %v1783, %v1797
    %v1806 = vcombine.high %v1783, %v1797
    %v1807 = vcombine.low %v1790, %v1804
    %v1808 = vcombine.high %v1790, %v1804
    %v1809 = vcombine.low %v98, %v104
    %v1810 = vcombine.high %v98, %v104
    %v1811 = vcombine.low %v110, %v116
    %v1812 = vcombine.high %v110, %v116
    %v1814 = vunpack.c.l.s4 1983009808
    %v1815 = vunpack.c.0.s8 %v1814
    %v1816 = vlaneseq
    %v1817 = vshrl.u32 %v1816, 7
    %v1818 = vsub.s32 %v1815, %v1817
    %v1819 = vrot.slane %v1809, %v1818
    %v1821 = vunpack.c.l.s4 1983009808
    %v1822 = vunpack.c.0.s8 %v1821
    %v1823 = vlaneseq
    %v1824 = vshrl.u32 %v1823, 7
    %v1825 = vsub.s32 %v1822, %v1824
    %v1826 = vrot.slane %v1810, %v1825
    %v1828 = vunpack.c.l.s4 1983009808
    %v1829 = vunpack.c.0.s8 %v1828
    %v1830 = vlaneseq
    %v1831 = vshrl.u32 %v1830, 7
    %v1832 = vsub.s32 %v1829, %v1831
    %v1833 = vrot.slane %v1811, %v1832
    %v1835 = vunpack.c.l.s4 1983009808
    %v1836 = vunpack.c.0.s8 %v1835
    %v1837 = vlaneseq
    %v1838 = vshrl.u32 %v1837, 7
    %v1839 = vsub.s32 %v1836, %v1838
    %v1840 = vrot.slane %v1812, %v1839
    %v1841 = vcombine.low %v1819, %v1833
    %v1842 = vcombine.high %v1819, %v1833
    %v1843 = vcombine.low %v1826, %v1840
    %v1844 = vcombine.high %v1826, %v1840
    %v1845 = vcombine.low %v99, %v105
    %v1846 = vcombine.high %v99, %v105
    %v1847 = vcombine.low %v111, %v117
    %v1848 = vcombine.high %v111, %v117
    %v1850 = vunpack.c.l.s4 1983009808
    %v1851 = vunpack.c.0.s8 %v1850
    %v1852 = vlaneseq
    %v1853 = vshrl.u32 %v1852, 7
    %v1854 = vsub.s32 %v1851, %v1853
    %v1855 = vrot.slane %v1845, %v1854
    %v1857 = vunpack.c.l.s4 1983009808
    %v1858 = vunpack.c.0.s8 %v1857
    %v1859 = vlaneseq
    %v1860 = vshrl.u32 %v1859, 7
    %v1861 = vsub.s32 %v1858, %v1860
    %v1862 = vrot.slane %v1846, %v1861
    %v1864 = vunpack.c.l.s4 1983009808
    %v1865 = vunpack.c.0.s8 %v1864
    %v1866 = vlaneseq
    %v1867 = vshrl.u32 %v1866, 7
    %v1868 = vsub.s32 %v1865, %v1867
    %v1869 = vrot.slane %v1847, %v1868
    %v1871 = vunpack.c.l.s4 1983009808
    %v1872 = vunpack.c.0.s8 %v1871
    %v1873 = vlaneseq
    %v1874 = vshrl.u32 %v1873, 7
    %v1875 = vsub.s32 %v1872, %v1874
    %v1876 = vrot.slane %v1848, %v1875
    %v1877 = vcombine.low %v1855, %v1869
    %v1878 = vcombine.high %v1855, %v1869
    %v1879 = vcombine.low %v1862, %v1876
    %v1880 = vcombine.high %v1862, %v1876
    %v1881 = vcombine.low %v100, %v106
    %v1882 = vcombine.high %v100, %v106
    %v1883 = vcombine.low %v112, %v118
    %v1884 = vcombine.high %v112, %v118
    %v1886 = vunpack.c.l.s4 1983009808
    %v1887 = vunpack.c.0.s8 %v1886
    %v1888 = vlaneseq
    %v1889 = vshrl.u32 %v1888, 7
    %v1890 = vsub.s32 %v1887, %v1889
    %v1891 = vrot.slane %v1881, %v1890
    %v1893 = vunpack.c.l.s4 1983009808
    %v1894 = vunpack.c.0.s8 %v1893
    %v1895 = vlaneseq
    %v1896 = vshrl.u32 %v1895, 7
    %v1897 = vsub.s32 %v1894, %v1896
    %v1898 = vrot.slane %v1882, %v1897
    %v1900 = vunpack.c.l.s4 1983009808
    %v1901 = vunpack.c.0.s8 %v1900
    %v1902 = vlaneseq
    %v1903 = vshrl.u32 %v1902, 7
    %v1904 = vsub.s32 %v1901, %v1903
    %v1905 = vrot.slane %v1883, %v1904
    %v1907 = vunpack.c.l.s4 1983009808
    %v1908 = vunpack.c.0.s8 %v1907
    %v1909 = vlaneseq
    %v1910 = vshrl.u32 %v1909, 7
    %v1911 = vsub.s32 %v1908, %v1910
    %v1912 = vrot.slane %v1884, %v1911
    %v1913 = vcombine.low %v1891, %v1905
    %v1914 = vcombine.high %v1891, %v1905
    %v1915 = vcombine.low %v1898, %v1912
    %v1916 = vcombine.high %v1898, %v1912
    %1941 = vmatprep.subr.mxu0 %v120
    %1942 = vmatpush1.msra.mxu0 %v119
    %1943 = vmatprep.subr.mxu0 %v124
    %1944 = vmatpush1.msra.mxu0 %v123
    %1945 = vmatprep.subr.mxu0 %v128
    %1946 = vmatpush1.msra.mxu0 %v127
    %1947 = vmatprep.subr.mxu0 %v132
    %1948 = vmatpush1.msra.mxu0 %v131
    %1949 = vmatprep.subr.mxu0 %v136
    %1950 = vmatpush1.msra.mxu0 %v135
    %1951 = vmatprep.subr.mxu0 %v140
    %1952 = vmatpush1.msra.mxu0 %v139
    %1953 = vmatprep.subr.mxu0 %v144
    %1954 = vmatpush1.msra.mxu0 %v143
    %1955 = vmatprep.subr.mxu0 %v148
    %1956 = vmatpush1.msra.mxu0 %v147
    %1957 = vmatprep.subr.mxu0 %v152
    %1958 = vmatpush1.msra.mxu0 %v151
    %1959 = vmatprep.subr.mxu0 %v156
    %1960 = vmatpush1.msra.mxu0 %v155
    %1961 = vmatprep.subr.mxu0 %v160
    %1962 = vmatpush1.msra.mxu0 %v159
    %1963 = vmatprep.subr.mxu0 %v164
    %1964 = vmatpush1.msra.mxu0 %v163
    %1965 = vmatprep.subr.mxu0 %v168
    %1966 = vmatpush1.msra.mxu0 %v167
    %1967 = vmatprep.subr.mxu0 %v172
    %1968 = vmatpush1.msra.mxu0 %v171
    %1969 = vmatprep.subr.mxu0 %v176
    %1970 = vmatpush1.msra.mxu0 %v175
    %1971 = vmatprep.subr.mxu0 %v180
    %1972 = vmatpush1.msra.mxu0 %v179
    %1973 = vmatprep.subr.mxu0 %v184
    %1974 = vmatpush1.msra.mxu0 %v183
    %1975 = vmatprep.subr.mxu0 %v188
    %1976 = vmatpush1.msra.mxu0 %v187
    %1977 = vmatprep.subr.mxu0 %v192
    %1978 = vmatpush1.msra.mxu0 %v191
    %1979 = vmatprep.subr.mxu0 %v196
    %1980 = vmatpush1.msra.mxu0 %v195
    %1981 = vmatprep.subr.mxu0 %v200
    %1982 = vmatpush1.msra.mxu0 %v199
    %1983 = vmatprep.subr.mxu0 %v204
    %1984 = vmatpush1.msra.mxu0 %v203
    %1985 = vmatprep.subr.mxu0 %v208
    %1986 = vmatpush1.msra.mxu0 %v207
    %1987 = vmatprep.subr.mxu0 %v212
    %1988 = vmatpush1.msra.mxu0 %v211
    %1989 = vmatprep.subr.mxu0 %v216
    %1990 = vmatpush1.msra.mxu0 %v215
    %1991 = vmatprep.subr.mxu0 %v220
    %1992 = vmatpush1.msra.mxu0 %v219
    %1993 = vmatprep.subr.mxu0 %v224
    %1994 = vmatpush1.msra.mxu0 %v223
    %1995 = vmatprep.subr.mxu0 %v228
    %1996 = vmatpush1.msra.mxu0 %v227
    %1997 = vmatprep.subr.mxu0 %v232
    %1998 = vmatpush1.msra.mxu0 %v231
    %1999 = vmatprep.subr.mxu0 %v236
    %2000 = vmatpush1.msra.mxu0 %v235
    %2001 = vmatprep.subr.mxu0 %v240
    %2002 = vmatpush1.msra.mxu0 %v239
    %2003 = vmatprep.subr.mxu0 %v244
    %2004 = vmatpush1.msra.mxu0 %v243
    %2005 = vmatprep.mubr.f32.mxu0 %v1734
    %2006 = vmatmul.mubr.f32.gmra.mrb[0].mxu0 %v1733
    %v2007 = vpop.f32.mrb[0].mxu0
    %v2008 = vadd.f32 %v1660, %v2007
    %v2009 = vpop.f32.mrb[0].mxu0
    %v2010 = vadd.f32 %v1664, %v2009
    %2011 = vdwg.mxu0
    %2012 = vmatprep.subr.mxu0 %v248
    %2013 = vmatpush1.msra.mxu0 %v247
    %2014 = vmatprep.subr.mxu0 %v252
    %2015 = vmatpush1.msra.mxu0 %v251
    %2016 = vmatprep.subr.mxu0 %v256
    %2017 = vmatpush1.msra.mxu0 %v255
    %2018 = vmatprep.subr.mxu0 %v260
    %2019 = vmatpush1.msra.mxu0 %v259
    %2020 = vmatprep.subr.mxu0 %v264
    %2021 = vmatpush1.msra.mxu0 %v263
    %2022 = vmatprep.subr.mxu0 %v268
    %2023 = vmatpush1.msra.mxu0 %v267
    %2024 = vmatprep.subr.mxu0 %v272
    %2025 = vmatpush1.msra.mxu0 %v271
    %2026 = vmatprep.subr.mxu0 %v276
    %2027 = vmatpush1.msra.mxu0 %v275
    %2028 = vmatprep.subr.mxu0 %v280
    %2029 = vmatpush1.msra.mxu0 %v279
    %2030 = vmatprep.subr.mxu0 %v284
    %2031 = vmatpush1.msra.mxu0 %v283
    %2032 = vmatprep.subr.mxu0 %v288
    %2033 = vmatpush1.msra.mxu0 %v287
    %2034 = vmatprep.subr.mxu0 %v292
    %2035 = vmatpush1.msra.mxu0 %v291
    %2036 = vmatprep.subr.mxu0 %v296
    %2037 = vmatpush1.msra.mxu0 %v295
    %2038 = vmatprep.subr.mxu0 %v300
    %2039 = vmatpush1.msra.mxu0 %v299
    %2040 = vmatprep.subr.mxu0 %v304
    %2041 = vmatpush1.msra.mxu0 %v303
    %2042 = vmatprep.subr.mxu0 %v308
    %2043 = vmatpush1.msra.mxu0 %v307
    %2044 = vmatprep.subr.mxu0 %v312
    %2045 = vmatpush1.msra.mxu0 %v311
    %2046 = vmatprep.subr.mxu0 %v316
    %2047 = vmatpush1.msra.mxu0 %v315
    %2048 = vmatprep.subr.mxu0 %v320
    %2049 = vmatpush1.msra.mxu0 %v319
    %2050 = vmatprep.subr.mxu0 %v324
    %2051 = vmatpush1.msra.mxu0 %v323
    %2052 = vmatprep.subr.mxu0 %v328
    %2053 = vmatpush1.msra.mxu0 %v327
    %2054 = vmatprep.subr.mxu0 %v332
    %2055 = vmatpush1.msra.mxu0 %v331
    %2056 = vmatprep.subr.mxu0 %v336
    %2057 = vmatpush1.msra.mxu0 %v335
    %2058 = vmatprep.subr.mxu0 %v340
    %2059 = vmatpush1.msra.mxu0 %v339
    %2060 = vmatprep.subr.mxu0 %v344
    %2061 = vmatpush1.msra.mxu0 %v343
    %2062 = vmatprep.subr.mxu0 %v348
    %2063 = vmatpush1.msra.mxu0 %v347
    %2064 = vmatprep.subr.mxu0 %v352
    %2065 = vmatpush1.msra.mxu0 %v351
    %2066 = vmatprep.subr.mxu0 %v356
    %2067 = vmatpush1.msra.mxu0 %v355
    %2068 = vmatprep.subr.mxu0 %v360
    %2069 = vmatpush1.msra.mxu0 %v359
    %2070 = vmatprep.subr.mxu0 %v364
    %2071 = vmatpush1.msra.mxu0 %v363
    %2072 = vmatprep.subr.mxu0 %v368
    %2073 = vmatpush1.msra.mxu0 %v367
    %2074 = vmatprep.subr.mxu0 %v372
    %2075 = vmatpush1.msra.mxu0 %v371
    %2076 = vmatprep.mubr.f32.mxu0 %v1736
    %2077 = vmatmul.mubr.f32.gmra.mrb[0].mxu0 %v1735
    %v2078 = vpop.f32.mrb[0].mxu0
    %v2079 = vadd.f32 %v2008, %v2078
    %v2080 = vpop.f32.mrb[0].mxu0
    %v2081 = vadd.f32 %v2010, %v2080
    %2082 = vdwg.mxu0
    %2083 = vmatprep.subr.mxu0 %v376
    %2084 = vmatpush1.msra.mxu0 %v375
    %2085 = vmatprep.subr.mxu0 %v380
    %2086 = vmatpush1.msra.mxu0 %v379
    %2087 = vmatprep.subr.mxu0 %v384
    %2088 = vmatpush1.msra.mxu0 %v383
    %2089 = vmatprep.subr.mxu0 %v388
    %2090 = vmatpush1.msra.mxu0 %v387
    %2091 = vmatprep.subr.mxu0 %v392
    %2092 = vmatpush1.msra.mxu0 %v391
    %2093 = vmatprep.subr.mxu0 %v396
    %2094 = vmatpush1.msra.mxu0 %v395
    %2095 = vmatprep.subr.mxu0 %v400
    %2096 = vmatpush1.msra.mxu0 %v399
    %2097 = vmatprep.subr.mxu0 %v404
    %2098 = vmatpush1.msra.mxu0 %v403
    %2099 = vmatprep.subr.mxu0 %v408
    %2100 = vmatpush1.msra.mxu0 %v407
    %2101 = vmatprep.subr.mxu0 %v412
    %2102 = vmatpush1.msra.mxu0 %v411
    %2103 = vmatprep.subr.mxu0 %v416
    %2104 = vmatpush1.msra.mxu0 %v415
    %2105 = vmatprep.subr.mxu0 %v420
    %2106 = vmatpush1.msra.mxu0 %v419
    %2107 = vmatprep.subr.mxu0 %v424
    %2108 = vmatpush1.msra.mxu0 %v423
    %2109 = vmatprep.subr.mxu0 %v428
    %2110 = vmatpush1.msra.mxu0 %v427
    %2111 = vmatprep.subr.mxu0 %v432
    %2112 = vmatpush1.msra.mxu0 %v431
    %2113 = vmatprep.subr.mxu0 %v436
    %2114 = vmatpush1.msra.mxu0 %v435
    %2115 = vmatprep.subr.mxu0 %v440
    %2116 = vmatpush1.msra.mxu0 %v439
    %2117 = vmatprep.subr.mxu0 %v444
    %2118 = vmatpush1.msra.mxu0 %v443
    %2119 = vmatprep.subr.mxu0 %v448
    %2120 = vmatpush1.msra.mxu0 %v447
    %2121 = vmatprep.subr.mxu0 %v452
    %2122 = vmatpush1.msra.mxu0 %v451
    %2123 = vmatprep.subr.mxu0 %v456
    %2124 = vmatpush1.msra.mxu0 %v455
    %2125 = vmatprep.subr.mxu0 %v460
    %2126 = vmatpush1.msra.mxu0 %v459
    %2127 = vmatprep.subr.mxu0 %v464
    %2128 = vmatpush1.msra.mxu0 %v463
    %2129 = vmatprep.subr.mxu0 %v468
    %2130 = vmatpush1.msra.mxu0 %v467
    %2131 = vmatprep.subr.mxu0 %v472
    %2132 = vmatpush1.msra.mxu0 %v471
    %2133 = vmatprep.subr.mxu0 %v476
    %2134 = vmatpush1.msra.mxu0 %v475
    %2135 = vmatprep.subr.mxu0 %v480
    %2136 = vmatpush1.msra.mxu0 %v479
    %2137 = vmatprep.subr.mxu0 %v484
    %2138 = vmatpush1.msra.mxu0 %v483
    %2139 = vmatprep.subr.mxu0 %v488
    %2140 = vmatpush1.msra.mxu0 %v487
    %2141 = vmatprep.subr.mxu0 %v492
    %2142 = vmatpush1.msra.mxu0 %v491
    %2143 = vmatprep.subr.mxu0 %v496
    %2144 = vmatpush1.msra.mxu0 %v495
    %2145 = vmatprep.subr.mxu0 %v500
    %2146 = vmatpush1.msra.mxu0 %v499
    %2147 = vmatprep.mubr.f32.mxu0 %v1770
    %2148 = vmatmul.mubr.f32.gmra.mrb[0].mxu0 %v1769
    %v2149 = vpop.f32.mrb[0].mxu0
    %v2150 = vadd.f32 %v2079, %v2149
    %v2151 = vpop.f32.mrb[0].mxu0
    %v2152 = vadd.f32 %v2081, %v2151
    %2153 = vdwg.mxu0
    %2154 = vmatprep.subr.mxu0 %v504
    %2155 = vmatpush1.msra.mxu0 %v503
    %2156 = vmatprep.subr.mxu0 %v508
    %2157 = vmatpush1.msra.mxu0 %v507
    %2158 = vmatprep.subr.mxu0 %v512
    %2159 = vmatpush1.msra.mxu0 %v511
    %2160 = vmatprep.subr.mxu0 %v516
    %2161 = vmatpush1.msra.mxu0 %v515
    %2162 = vmatprep.subr.mxu0 %v520
    %2163 = vmatpush1.msra.mxu0 %v519
    %2164 = vmatprep.subr.mxu0 %v524
    %2165 = vmatpush1.msra.mxu0 %v523
    %2166 = vmatprep.subr.mxu0 %v528
    %2167 = vmatpush1.msra.mxu0 %v527
    %2168 = vmatprep.subr.mxu0 %v532
    %2169 = vmatpush1.msra.mxu0 %v531
    %2170 = vmatprep.subr.mxu0 %v536
    %2171 = vmatpush1.msra.mxu0 %v535
    %2172 = vmatprep.subr.mxu0 %v540
    %2173 = vmatpush1.msra.mxu0 %v539
    %2174 = vmatprep.subr.mxu0 %v544
    %2175 = vmatpush1.msra.mxu0 %v543
    %2176 = vmatprep.subr.mxu0 %v548
    %2177 = vmatpush1.msra.mxu0 %v547
    %2178 = vmatprep.subr.mxu0 %v552
    %2179 = vmatpush1.msra.mxu0 %v551
    %2180 = vmatprep.subr.mxu0 %v556
    %2181 = vmatpush1.msra.mxu0 %v555
    %2182 = vmatprep.subr.mxu0 %v560
    %2183 = vmatpush1.msra.mxu0 %v559
    %2184 = vmatprep.subr.mxu0 %v564
    %2185 = vmatpush1.msra.mxu0 %v563
    %2186 = vmatprep.subr.mxu0 %v568
    %2187 = vmatpush1.msra.mxu0 %v567
    %2188 = vmatprep.subr.mxu0 %v572
    %2189 = vmatpush1.msra.mxu0 %v571
    %2190 = vmatprep.subr.mxu0 %v576
    %2191 = vmatpush1.msra.mxu0 %v575
    %2192 = vmatprep.subr.mxu0 %v580
    %2193 = vmatpush1.msra.mxu0 %v579
    %2194 = vmatprep.subr.mxu0 %v584
    %2195 = vmatpush1.msra.mxu0 %v583
    %2196 = vmatprep.subr.mxu0 %v588
    %2197 = vmatpush1.msra.mxu0 %v587
    %2198 = vmatprep.subr.mxu0 %v592
    %2199 = vmatpush1.msra.mxu0 %v591
    %2200 = vmatprep.subr.mxu0 %v596
    %2201 = vmatpush1.msra.mxu0 %v595
    %2202 = vmatprep.subr.mxu0 %v600
    %2203 = vmatpush1.msra.mxu0 %v599
    %2204 = vmatprep.subr.mxu0 %v604
    %2205 = vmatpush1.msra.mxu0 %v603
    %2206 = vmatprep.subr.mxu0 %v608
    %2207 = vmatpush1.msra.mxu0 %v607
    %2208 = vmatprep.subr.mxu0 %v612
    %2209 = vmatpush1.msra.mxu0 %v611
    %2210 = vmatprep.subr.mxu0 %v616
    %2211 = vmatpush1.msra.mxu0 %v615
    %2212 = vmatprep.subr.mxu0 %v620
    %2213 = vmatpush1.msra.mxu0 %v619
    %2214 = vmatprep.subr.mxu0 %v624
    %2215 = vmatpush1.msra.mxu0 %v623
    %2216 = vmatprep.subr.mxu0 %v628
    %2217 = vmatpush1.msra.mxu0 %v627
    %2218 = vmatprep.mubr.f32.mxu0 %v1772
    %2219 = vmatmul.mubr.f32.gmra.mrb[0].mxu0 %v1771
    %v2220 = vpop.f32.mrb[0].mxu0
    %v2221 = vadd.f32 %v2150, %v2220
    %v2222 = vpop.f32.mrb[0].mxu0
    %v2223 = vadd.f32 %v2152, %v2222
    %2224 = vdwg.mxu0
    %2225 = vmatprep.subr.mxu0 %v632
    %2226 = vmatpush1.msra.mxu0 %v631
    %2227 = vmatprep.subr.mxu0 %v636
    %2228 = vmatpush1.msra.mxu0 %v635
    %2229 = vmatprep.subr.mxu0 %v640
    %2230 = vmatpush1.msra.mxu0 %v639
    %2231 = vmatprep.subr.mxu0 %v644
    %2232 = vmatpush1.msra.mxu0 %v643
    %2233 = vmatprep.subr.mxu0 %v648
    %2234 = vmatpush1.msra.mxu0 %v647
    %2235 = vmatprep.subr.mxu0 %v652
    %2236 = vmatpush1.msra.mxu0 %v651
    %2237 = vmatprep.subr.mxu0 %v656
    %2238 = vmatpush1.msra.mxu0 %v655
    %2239 = vmatprep.subr.mxu0 %v660
    %2240 = vmatpush1.msra.mxu0 %v659
    %2241 = vmatprep.subr.mxu0 %v664
    %2242 = vmatpush1.msra.mxu0 %v663
    %2243 = vmatprep.subr.mxu0 %v668
    %2244 = vmatpush1.msra.mxu0 %v667
    %2245 = vmatprep.subr.mxu0 %v672
    %2246 = vmatpush1.msra.mxu0 %v671
    %2247 = vmatprep.subr.mxu0 %v676
    %2248 = vmatpush1.msra.mxu0 %v675
    %2249 = vmatprep.subr.mxu0 %v680
    %2250 = vmatpush1.msra.mxu0 %v679
    %2251 = vmatprep.subr.mxu0 %v684
    %2252 = vmatpush1.msra.mxu0 %v683
    %2253 = vmatprep.subr.mxu0 %v688
    %2254 = vmatpush1.msra.mxu0 %v687
    %2255 = vmatprep.subr.mxu0 %v692
    %2256 = vmatpush1.msra.mxu0 %v691
    %2257 = vmatprep.subr.mxu0 %v696
    %2258 = vmatpush1.msra.mxu0 %v695
    %2259 = vmatprep.subr.mxu0 %v700
    %2260 = vmatpush1.msra.mxu0 %v699
    %2261 = vmatprep.subr.mxu0 %v704
    %2262 = vmatpush1.msra.mxu0 %v703
    %2263 = vmatprep.subr.mxu0 %v708
    %2264 = vmatpush1.msra.mxu0 %v707
    %2265 = vmatprep.subr.mxu0 %v712
    %2266 = vmatpush1.msra.mxu0 %v711
    %2267 = vmatprep.subr.mxu0 %v716
    %2268 = vmatpush1.msra.mxu0 %v715
    %2269 = vmatprep.subr.mxu0 %v720
    %2270 = vmatpush1.msra.mxu0 %v719
    %2271 = vmatprep.subr.mxu0 %v724
    %2272 = vmatpush1.msra.mxu0 %v723
    %2273 = vmatprep.subr.mxu0 %v728
    %2274 = vmatpush1.msra.mxu0 %v727
    %2275 = vmatprep.subr.mxu0 %v732
    %2276 = vmatpush1.msra.mxu0 %v731
    %2277 = vmatprep.subr.mxu0 %v736
    %2278 = vmatpush1.msra.mxu0 %v735
    %2279 = vmatprep.subr.mxu0 %v740
    %2280 = vmatpush1.msra.mxu0 %v739
    %2281 = vmatprep.subr.mxu0 %v744
    %2282 = vmatpush1.msra.mxu0 %v743
    %2283 = vmatprep.subr.mxu0 %v748
    %2284 = vmatpush1.msra.mxu0 %v747
    %2285 = vmatprep.subr.mxu0 %v752
    %2286 = vmatpush1.msra.mxu0 %v751
    %2287 = vmatprep.subr.mxu0 %v756
    %2288 = vmatpush1.msra.mxu0 %v755
    %2289 = vmatprep.mubr.f32.mxu0 %v1806
    %2290 = vmatmul.mubr.f32.gmra.mrb[0].mxu0 %v1805
    %v2291 = vpop.f32.mrb[0].mxu0
    %v2292 = vadd.f32 %v2221, %v2291
    %v2293 = vpop.f32.mrb[0].mxu0
    %v2294 = vadd.f32 %v2223, %v2293
    %2295 = vdwg.mxu0
    %2296 = vmatprep.subr.mxu0 %v760
    %2297 = vmatpush1.msra.mxu0 %v759
    %2298 = vmatprep.subr.mxu0 %v764
    %2299 = vmatpush1.msra.mxu0 %v763
    %2300 = vmatprep.subr.mxu0 %v768
    %2301 = vmatpush1.msra.mxu0 %v767
    %2302 = vmatprep.subr.mxu0 %v772
    %2303 = vmatpush1.msra.mxu0 %v771
    %2304 = vmatprep.subr.mxu0 %v776
    %2305 = vmatpush1.msra.mxu0 %v775
    %2306 = vmatprep.subr.mxu0 %v780
    %2307 = vmatpush1.msra.mxu0 %v779
    %2308 = vmatprep.subr.mxu0 %v784
    %2309 = vmatpush1.msra.mxu0 %v783
    %2310 = vmatprep.subr.mxu0 %v788
    %2311 = vmatpush1.msra.mxu0 %v787
    %2312 = vmatprep.subr.mxu0 %v792
    %2313 = vmatpush1.msra.mxu0 %v791
    %2314 = vmatprep.subr.mxu0 %v796
    %2315 = vmatpush1.msra.mxu0 %v795
    %2316 = vmatprep.subr.mxu0 %v800
    %2317 = vmatpush1.msra.mxu0 %v799
    %2318 = vmatprep.subr.mxu0 %v804
    %2319 = vmatpush1.msra.mxu0 %v803
    %2320 = vmatprep.subr.mxu0 %v808
    %2321 = vmatpush1.msra.mxu0 %v807
    %2322 = vmatprep.subr.mxu0 %v812
    %2323 = vmatpush1.msra.mxu0 %v811
    %2324 = vmatprep.subr.mxu0 %v816
    %2325 = vmatpush1.msra.mxu0 %v815
    %2326 = vmatprep.subr.mxu0 %v820
    %2327 = vmatpush1.msra.mxu0 %v819
    %2328 = vmatprep.subr.mxu0 %v824
    %2329 = vmatpush1.msra.mxu0 %v823
    %2330 = vmatprep.subr.mxu0 %v828
    %2331 = vmatpush1.msra.mxu0 %v827
    %2332 = vmatprep.subr.mxu0 %v832
    %2333 = vmatpush1.msra.mxu0 %v831
    %2334 = vmatprep.subr.mxu0 %v836
    %2335 = vmatpush1.msra.mxu0 %v835
    %2336 = vmatprep.subr.mxu0 %v840
    %2337 = vmatpush1.msra.mxu0 %v839
    %2338 = vmatprep.subr.mxu0 %v844
    %2339 = vmatpush1.msra.mxu0 %v843
    %2340 = vmatprep.subr.mxu0 %v848
    %2341 = vmatpush1.msra.mxu0 %v847
    %2342 = vmatprep.subr.mxu0 %v852
    %2343 = vmatpush1.msra.mxu0 %v851
    %2344 = vmatprep.subr.mxu0 %v856
    %2345 = vmatpush1.msra.mxu0 %v855
    %2346 = vmatprep.subr.mxu0 %v860
    %2347 = vmatpush1.msra.mxu0 %v859
    %2348 = vmatprep.subr.mxu0 %v864
    %2349 = vmatpush1.msra.mxu0 %v863
    %2350 = vmatprep.subr.mxu0 %v868
    %2351 = vmatpush1.msra.mxu0 %v867
    %2352 = vmatprep.subr.mxu0 %v872
    %2353 = vmatpush1.msra.mxu0 %v871
    %2354 = vmatprep.subr.mxu0 %v876
    %2355 = vmatpush1.msra.mxu0 %v875
    %2356 = vmatprep.subr.mxu0 %v880
    %2357 = vmatpush1.msra.mxu0 %v879
    %2358 = vmatprep.subr.mxu0 %v884
    %2359 = vmatpush1.msra.mxu0 %v883
    %2360 = vmatprep.mubr.f32.mxu0 %v1808
    %2361 = vmatmul.mubr.f32.gmra.mrb[0].mxu0 %v1807
    %v2362 = vpop.f32.mrb[0].mxu0
    %v2363 = vadd.f32 %v2292, %v2362
    %v2364 = vpop.f32.mrb[0].mxu0
    %v2365 = vadd.f32 %v2294, %v2364
    %2366 = vdwg.mxu0
    %2367 = vmatprep.subr.mxu0 %v888
    %2368 = vmatpush1.msra.mxu0 %v887
    %2369 = vmatprep.subr.mxu0 %v892
    %2370 = vmatpush1.msra.mxu0 %v891
    %2371 = vmatprep.subr.mxu0 %v896
    %2372 = vmatpush1.msra.mxu0 %v895
    %2373 = vmatprep.subr.mxu0 %v900
    %2374 = vmatpush1.msra.mxu0 %v899
    %2375 = vmatprep.subr.mxu0 %v904
    %2376 = vmatpush1.msra.mxu0 %v903
    %2377 = vmatprep.subr.mxu0 %v908
    %2378 = vmatpush1.msra.mxu0 %v907
    %2379 = vmatprep.subr.mxu0 %v912
    %2380 = vmatpush1.msra.mxu0 %v911
    %2381 = vmatprep.subr.mxu0 %v916
    %2382 = vmatpush1.msra.mxu0 %v915
    %2383 = vmatprep.subr.mxu0 %v920
    %2384 = vmatpush1.msra.mxu0 %v919
    %2385 = vmatprep.subr.mxu0 %v924
    %2386 = vmatpush1.msra.mxu0 %v923
    %2387 = vmatprep.subr.mxu0 %v928
    %2388 = vmatpush1.msra.mxu0 %v927
    %2389 = vmatprep.subr.mxu0 %v932
    %2390 = vmatpush1.msra.mxu0 %v931
    %2391 = vmatprep.subr.mxu0 %v936
    %2392 = vmatpush1.msra.mxu0 %v935
    %2393 = vmatprep.subr.mxu0 %v940
    %2394 = vmatpush1.msra.mxu0 %v939
    %2395 = vmatprep.subr.mxu0 %v944
    %2396 = vmatpush1.msra.mxu0 %v943
    %2397 = vmatprep.subr.mxu0 %v948
    %2398 = vmatpush1.msra.mxu0 %v947
    %2399 = vmatprep.subr.mxu0 %v952
    %2400 = vmatpush1.msra.mxu0 %v951
    %2401 = vmatprep.subr.mxu0 %v956
    %2402 = vmatpush1.msra.mxu0 %v955
    %2403 = vmatprep.subr.mxu0 %v960
    %2404 = vmatpush1.msra.mxu0 %v959
    %2405 = vmatprep.subr.mxu0 %v964
    %2406 = vmatpush1.msra.mxu0 %v963
    %2407 = vmatprep.subr.mxu0 %v968
    %2408 = vmatpush1.msra.mxu0 %v967
    %2409 = vmatprep.subr.mxu0 %v972
    %2410 = vmatpush1.msra.mxu0 %v971
    %2411 = vmatprep.subr.mxu0 %v976
    %2412 = vmatpush1.msra.mxu0 %v975
    %2413 = vmatprep.subr.mxu0 %v980
    %2414 = vmatpush1.msra.mxu0 %v979
    %2415 = vmatprep.subr.mxu0 %v984
    %2416 = vmatpush1.msra.mxu0 %v983
    %2417 = vmatprep.subr.mxu0 %v988
    %2418 = vmatpush1.msra.mxu0 %v987
    %2419 = vmatprep.subr.mxu0 %v992
    %2420 = vmatpush1.msra.mxu0 %v991
    %2421 = vmatprep.subr.mxu0 %v996
    %2422 = vmatpush1.msra.mxu0 %v995
    %2423 = vmatprep.subr.mxu0 %v1000
    %2424 = vmatpush1.msra.mxu0 %v999
    %2425 = vmatprep.subr.mxu0 %v1004
    %2426 = vmatpush1.msra.mxu0 %v1003
    %2427 = vmatprep.subr.mxu0 %v1008
    %2428 = vmatpush1.msra.mxu0 %v1007
    %2429 = vmatprep.subr.mxu0 %v1012
    %2430 = vmatpush1.msra.mxu0 %v1011
    %2431 = vmatprep.mubr.f32.mxu0 %v1842
    %2432 = vmatmul.mubr.f32.gmra.mrb[0].mxu0 %v1841
    %v2433 = vpop.f32.mrb[0].mxu0
    %v2434 = vadd.f32 %v2363, %v2433
    %v2435 = vpop.f32.mrb[0].mxu0
    %v2436 = vadd.f32 %v2365, %v2435
    %2437 = vdwg.mxu0
    %2438 = vmatprep.subr.mxu0 %v1016
    %2439 = vmatpush1.msra.mxu0 %v1015
    %2440 = vmatprep.subr.mxu0 %v1020
    %2441 = vmatpush1.msra.mxu0 %v1019
    %2442 = vmatprep.subr.mxu0 %v1024
    %2443 = vmatpush1.msra.mxu0 %v1023
    %2444 = vmatprep.subr.mxu0 %v1028
    %2445 = vmatpush1.msra.mxu0 %v1027
    %2446 = vmatprep.subr.mxu0 %v1032
    %2447 = vmatpush1.msra.mxu0 %v1031
    %2448 = vmatprep.subr.mxu0 %v1036
    %2449 = vmatpush1.msra.mxu0 %v1035
    %2450 = vmatprep.subr.mxu0 %v1040
    %2451 = vmatpush1.msra.mxu0 %v1039
    %2452 = vmatprep.subr.mxu0 %v1044
    %2453 = vmatpush1.msra.mxu0 %v1043
    %2454 = vmatprep.subr.mxu0 %v1048
    %2455 = vmatpush1.msra.mxu0 %v1047
    %2456 = vmatprep.subr.mxu0 %v1052
    %2457 = vmatpush1.msra.mxu0 %v1051
    %2458 = vmatprep.subr.mxu0 %v1056
    %2459 = vmatpush1.msra.mxu0 %v1055
    %2460 = vmatprep.subr.mxu0 %v1060
    %2461 = vmatpush1.msra.mxu0 %v1059
    %2462 = vmatprep.subr.mxu0 %v1064
    %2463 = vmatpush1.msra.mxu0 %v1063
    %2464 = vmatprep.subr.mxu0 %v1068
    %2465 = vmatpush1.msra.mxu0 %v1067
    %2466 = vmatprep.subr.mxu0 %v1072
    %2467 = vmatpush1.msra.mxu0 %v1071
    %2468 = vmatprep.subr.mxu0 %v1076
    %2469 = vmatpush1.msra.mxu0 %v1075
    %2470 = vmatprep.subr.mxu0 %v1080
    %2471 = vmatpush1.msra.mxu0 %v1079
    %2472 = vmatprep.subr.mxu0 %v1084
    %2473 = vmatpush1.msra.mxu0 %v1083
    %2474 = vmatprep.subr.mxu0 %v1088
    %2475 = vmatpush1.msra.mxu0 %v1087
    %2476 = vmatprep.subr.mxu0 %v1092
    %2477 = vmatpush1.msra.mxu0 %v1091
    %2478 = vmatprep.subr.mxu0 %v1096
    %2479 = vmatpush1.msra.mxu0 %v1095
    %2480 = vmatprep.subr.mxu0 %v1100
    %2481 = vmatpush1.msra.mxu0 %v1099
    %2482 = vmatprep.subr.mxu0 %v1104
    %2483 = vmatpush1.msra.mxu0 %v1103
    %2484 = vmatprep.subr.mxu0 %v1108
    %2485 = vmatpush1.msra.mxu0 %v1107
    %2486 = vmatprep.subr.mxu0 %v1112
    %2487 = vmatpush1.msra.mxu0 %v1111
    %2488 = vmatprep.subr.mxu0 %v1116
    %2489 = vmatpush1.msra.mxu0 %v1115
    %2490 = vmatprep.subr.mxu0 %v1120
    %2491 = vmatpush1.msra.mxu0 %v1119
    %2492 = vmatprep.subr.mxu0 %v1124
    %2493 = vmatpush1.msra.mxu0 %v1123
    %2494 = vmatprep.subr.mxu0 %v1128
    %2495 = vmatpush1.msra.mxu0 %v1127
    %2496 = vmatprep.subr.mxu0 %v1132
    %2497 = vmatpush1.msra.mxu0 %v1131
    %2498 = vmatprep.subr.mxu0 %v1136
    %2499 = vmatpush1.msra.mxu0 %v1135
    %2500 = vmatprep.subr.mxu0 %v1140
    %2501 = vmatpush1.msra.mxu0 %v1139
    %2502 = vmatprep.mubr.f32.mxu0 %v1844
    %2503 = vmatmul.mubr.f32.gmra.mrb[0].mxu0 %v1843
    %v2504 = vpop.f32.mrb[0].mxu0
    %v2505 = vadd.f32 %v2434, %v2504
    %v2506 = vpop.f32.mrb[0].mxu0
    %v2507 = vadd.f32 %v2436, %v2506
    %2508 = vdwg.mxu0
    %2509 = vmatprep.subr.mxu0 %v1144
    %2510 = vmatpush1.msra.mxu0 %v1143
    %2511 = vmatprep.subr.mxu0 %v1148
    %2512 = vmatpush1.msra.mxu0 %v1147
    %2513 = vmatprep.subr.mxu0 %v1152
    %2514 = vmatpush1.msra.mxu0 %v1151
    %2515 = vmatprep.subr.mxu0 %v1156
    %2516 = vmatpush1.msra.mxu0 %v1155
    %2517 = vmatprep.subr.mxu0 %v1160
    %2518 = vmatpush1.msra.mxu0 %v1159
    %2519 = vmatprep.subr.mxu0 %v1164
    %2520 = vmatpush1.msra.mxu0 %v1163
    %2521 = vmatprep.subr.mxu0 %v1168
    %2522 = vmatpush1.msra.mxu0 %v1167
    %2523 = vmatprep.subr.mxu0 %v1172
    %2524 = vmatpush1.msra.mxu0 %v1171
    %2525 = vmatprep.subr.mxu0 %v1176
    %2526 = vmatpush1.msra.mxu0 %v1175
    %2527 = vmatprep.subr.mxu0 %v1180
    %2528 = vmatpush1.msra.mxu0 %v1179
    %2529 = vmatprep.subr.mxu0 %v1184
    %2530 = vmatpush1.msra.mxu0 %v1183
    %2531 = vmatprep.subr.mxu0 %v1188
    %2532 = vmatpush1.msra.mxu0 %v1187
    %2533 = vmatprep.subr.mxu0 %v1192
    %2534 = vmatpush1.msra.mxu0 %v1191
    %2535 = vmatprep.subr.mxu0 %v1196
    %2536 = vmatpush1.msra.mxu0 %v1195
    %2537 = vmatprep.subr.mxu0 %v1200
    %2538 = vmatpush1.msra.mxu0 %v1199
    %2539 = vmatprep.subr.mxu0 %v1204
    %2540 = vmatpush1.msra.mxu0 %v1203
    %2541 = vmatprep.subr.mxu0 %v1208
    %2542 = vmatpush1.msra.mxu0 %v1207
    %2543 = vmatprep.subr.mxu0 %v1212
    %2544 = vmatpush1.msra.mxu0 %v1211
    %2545 = vmatprep.subr.mxu0 %v1216
    %2546 = vmatpush1.msra.mxu0 %v1215
    %2547 = vmatprep.subr.mxu0 %v1220
    %2548 = vmatpush1.msra.mxu0 %v1219
    %2549 = vmatprep.subr.mxu0 %v1224
    %2550 = vmatpush1.msra.mxu0 %v1223
    %2551 = vmatprep.subr.mxu0 %v1228
    %2552 = vmatpush1.msra.mxu0 %v1227
    %2553 = vmatprep.subr.mxu0 %v1232
    %2554 = vmatpush1.msra.mxu0 %v1231
    %2555 = vmatprep.subr.mxu0 %v1236
    %2556 = vmatpush1.msra.mxu0 %v1235
    %2557 = vmatprep.subr.mxu0 %v1240
    %2558 = vmatpush1.msra.mxu0 %v1239
    %2559 = vmatprep.subr.mxu0 %v1244
    %2560 = vmatpush1.msra.mxu0 %v1243
    %2561 = vmatprep.subr.mxu0 %v1248
    %2562 = vmatpush1.msra.mxu0 %v1247
    %2563 = vmatprep.subr.mxu0 %v1252
    %2564 = vmatpush1.msra.mxu0 %v1251
    %2565 = vmatprep.subr.mxu0 %v1256
    %2566 = vmatpush1.msra.mxu0 %v1255
    %2567 = vmatprep.subr.mxu0 %v1260
    %2568 = vmatpush1.msra.mxu0 %v1259
    %2569 = vmatprep.subr.mxu0 %v1264
    %2570 = vmatpush1.msra.mxu0 %v1263
    %2571 = vmatprep.subr.mxu0 %v1268
    %2572 = vmatpush1.msra.mxu0 %v1267
    %2573 = vmatprep.mubr.f32.mxu0 %v1878
    %2574 = vmatmul.mubr.f32.gmra.mrb[0].mxu0 %v1877
    %v2575 = vpop.f32.mrb[0].mxu0
    %v2576 = vadd.f32 %v2505, %v2575
    %v2577 = vpop.f32.mrb[0].mxu0
    %v2578 = vadd.f32 %v2507, %v2577
    %2579 = vdwg.mxu0
    %2580 = vmatprep.subr.mxu0 %v1272
    %2581 = vmatpush1.msra.mxu0 %v1271
    %2582 = vmatprep.subr.mxu0 %v1276
    %2583 = vmatpush1.msra.mxu0 %v1275
    %2584 = vmatprep.subr.mxu0 %v1280
    %2585 = vmatpush1.msra.mxu0 %v1279
    %2586 = vmatprep.subr.mxu0 %v1284
    %2587 = vmatpush1.msra.mxu0 %v1283
    %2588 = vmatprep.subr.mxu0 %v1288
    %2589 = vmatpush1.msra.mxu0 %v1287
    %2590 = vmatprep.subr.mxu0 %v1292
    %2591 = vmatpush1.msra.mxu0 %v1291
    %2592 = vmatprep.subr.mxu0 %v1296
    %2593 = vmatpush1.msra.mxu0 %v1295
    %2594 = vmatprep.subr.mxu0 %v1300
    %2595 = vmatpush1.msra.mxu0 %v1299
    %2596 = vmatprep.subr.mxu0 %v1304
    %2597 = vmatpush1.msra.mxu0 %v1303
    %2598 = vmatprep.subr.mxu0 %v1308
    %2599 = vmatpush1.msra.mxu0 %v1307
    %2600 = vmatprep.subr.mxu0 %v1312
    %2601 = vmatpush1.msra.mxu0 %v1311
    %2602 = vmatprep.subr.mxu0 %v1316
    %2603 = vmatpush1.msra.mxu0 %v1315
    %2604 = vmatprep.subr.mxu0 %v1320
    %2605 = vmatpush1.msra.mxu0 %v1319
    %2606 = vmatprep.subr.mxu0 %v1324
    %2607 = vmatpush1.msra.mxu0 %v1323
    %2608 = vmatprep.subr.mxu0 %v1328
    %2609 = vmatpush1.msra.mxu0 %v1327
    %2610 = vmatprep.subr.mxu0 %v1332
    %2611 = vmatpush1.msra.mxu0 %v1331
    %2612 = vmatprep.subr.mxu0 %v1336
    %2613 = vmatpush1.msra.mxu0 %v1335
    %2614 = vmatprep.subr.mxu0 %v1340
    %2615 = vmatpush1.msra.mxu0 %v1339
    %2616 = vmatprep.subr.mxu0 %v1344
    %2617 = vmatpush1.msra.mxu0 %v1343
    %2618 = vmatprep.subr.mxu0 %v1348
    %2619 = vmatpush1.msra.mxu0 %v1347
    %2620 = vmatprep.subr.mxu0 %v1352
    %2621 = vmatpush1.msra.mxu0 %v1351
    %2622 = vmatprep.subr.mxu0 %v1356
    %2623 = vmatpush1.msra.mxu0 %v1355
    %2624 = vmatprep.subr.mxu0 %v1360
    %2625 = vmatpush1.msra.mxu0 %v1359
    %2626 = vmatprep.subr.mxu0 %v1364
    %2627 = vmatpush1.msra.mxu0 %v1363
    %2628 = vmatprep.subr.mxu0 %v1368
    %2629 = vmatpush1.msra.mxu0 %v1367
    %2630 = vmatprep.subr.mxu0 %v1372
    %2631 = vmatpush1.msra.mxu0 %v1371
    %2632 = vmatprep.subr.mxu0 %v1376
    %2633 = vmatpush1.msra.mxu0 %v1375
    %2634 = vmatprep.subr.mxu0 %v1380
    %2635 = vmatpush1.msra.mxu0 %v1379
    %2636 = vmatprep.subr.mxu0 %v1384
    %2637 = vmatpush1.msra.mxu0 %v1383
    %2638 = vmatprep.subr.mxu0 %v1388
    %2639 = vmatpush1.msra.mxu0 %v1387
    %2640 = vmatprep.subr.mxu0 %v1392
    %2641 = vmatpush1.msra.mxu0 %v1391
    %2642 = vmatprep.subr.mxu0 %v1396
    %2643 = vmatpush1.msra.mxu0 %v1395
    %2644 = vmatprep.mubr.f32.mxu0 %v1880
    %2645 = vmatmul.mubr.f32.gmra.mrb[0].mxu0 %v1879
    %v2646 = vpop.f32.mrb[0].mxu0
    %v2647 = vadd.f32 %v2576, %v2646
    %v2648 = vpop.f32.mrb[0].mxu0
    %v2649 = vadd.f32 %v2578, %v2648
    %2650 = vdwg.mxu0
    %2651 = vmatprep.subr.mxu0 %v1400
    %2652 = vmatpush1.msra.mxu0 %v1399
    %2653 = vmatprep.subr.mxu0 %v1404
    %2654 = vmatpush1.msra.mxu0 %v1403
    %2655 = vmatprep.subr.mxu0 %v1408
    %2656 = vmatpush1.msra.mxu0 %v1407
    %2657 = vmatprep.subr.mxu0 %v1412
    %2658 = vmatpush1.msra.mxu0 %v1411
    %2659 = vmatprep.subr.mxu0 %v1416
    %2660 = vmatpush1.msra.mxu0 %v1415
    %2661 = vmatprep.subr.mxu0 %v1420
    %2662 = vmatpush1.msra.mxu0 %v1419
    %2663 = vmatprep.subr.mxu0 %v1424
    %2664 = vmatpush1.msra.mxu0 %v1423
    %2665 = vmatprep.subr.mxu0 %v1428
    %2666 = vmatpush1.msra.mxu0 %v1427
    %2667 = vmatprep.subr.mxu0 %v1432
    %2668 = vmatpush1.msra.mxu0 %v1431
    %2669 = vmatprep.subr.mxu0 %v1436
    %2670 = vmatpush1.msra.mxu0 %v1435
    %2671 = vmatprep.subr.mxu0 %v1440
    %2672 = vmatpush1.msra.mxu0 %v1439
    %2673 = vmatprep.subr.mxu0 %v1444
    %2674 = vmatpush1.msra.mxu0 %v1443
    %2675 = vmatprep.subr.mxu0 %v1448
    %2676 = vmatpush1.msra.mxu0 %v1447
    %2677 = vmatprep.subr.mxu0 %v1452
    %2678 = vmatpush1.msra.mxu0 %v1451
    %2679 = vmatprep.subr.mxu0 %v1456
    %2680 = vmatpush1.msra.mxu0 %v1455
    %2681 = vmatprep.subr.mxu0 %v1460
    %2682 = vmatpush1.msra.mxu0 %v1459
    %2683 = vmatprep.subr.mxu0 %v1464
    %2684 = vmatpush1.msra.mxu0 %v1463
    %2685 = vmatprep.subr.mxu0 %v1468
    %2686 = vmatpush1.msra.mxu0 %v1467
    %2687 = vmatprep.subr.mxu0 %v1472
    %2688 = vmatpush1.msra.mxu0 %v1471
    %2689 = vmatprep.subr.mxu0 %v1476
    %2690 = vmatpush1.msra.mxu0 %v1475
    %2691 = vmatprep.subr.mxu0 %v1480
    %2692 = vmatpush1.msra.mxu0 %v1479
    %2693 = vmatprep.subr.mxu0 %v1484
    %2694 = vmatpush1.msra.mxu0 %v1483
    %2695 = vmatprep.subr.mxu0 %v1488
    %2696 = vmatpush1.msra.mxu0 %v1487
    %2697 = vmatprep.subr.mxu0 %v1492
    %2698 = vmatpush1.msra.mxu0 %v1491
    %2699 = vmatprep.subr.mxu0 %v1496
    %2700 = vmatpush1.msra.mxu0 %v1495
    %2701 = vmatprep.subr.mxu0 %v1500
    %2702 = vmatpush1.msra.mxu0 %v1499
    %2703 = vmatprep.subr.mxu0 %v1504
    %2704 = vmatpush1.msra.mxu0 %v1503
    %2705 = vmatprep.subr.mxu0 %v1508
    %2706 = vmatpush1.msra.mxu0 %v1507
    %2707 = vmatprep.subr.mxu0 %v1512
    %2708 = vmatpush1.msra.mxu0 %v1511
    %2709 = vmatprep.subr.mxu0 %v1516
    %2710 = vmatpush1.msra.mxu0 %v1515
    %2711 = vmatprep.subr.mxu0 %v1520
    %2712 = vmatpush1.msra.mxu0 %v1519
    %2713 = vmatprep.subr.mxu0 %v1524
    %2714 = vmatpush1.msra.mxu0 %v1523
    %2715 = vmatprep.mubr.f32.mxu0 %v1914
    %2716 = vmatmul.mubr.f32.gmra.mrb[0].mxu0 %v1913
    %v2717 = vpop.f32.mrb[0].mxu0
    %v2718 = vadd.f32 %v2647, %v2717
    %v2719 = vpop.f32.mrb[0].mxu0
    %v2720 = vadd.f32 %v2649, %v2719
    %2721 = vdwg.mxu0
    %2722 = vmatprep.subr.mxu0 %v1528
    %2723 = vmatpush1.msra.mxu0 %v1527
    %2724 = vmatprep.subr.mxu0 %v1532
    %2725 = vmatpush1.msra.mxu0 %v1531
    %2726 = vmatprep.subr.mxu0 %v1536
    %2727 = vmatpush1.msra.mxu0 %v1535
    %2728 = vmatprep.subr.mxu0 %v1540
    %2729 = vmatpush1.msra.mxu0 %v1539
    %2730 = vmatprep.subr.mxu0 %v1544
    %2731 = vmatpush1.msra.mxu0 %v1543
    %2732 = vmatprep.subr.mxu0 %v1548
    %2733 = vmatpush1.msra.mxu0 %v1547
    %2734 = vmatprep.subr.mxu0 %v1552
    %2735 = vmatpush1.msra.mxu0 %v1551
    %2736 = vmatprep.subr.mxu0 %v1556
    %2737 = vmatpush1.msra.mxu0 %v1555
    %2738 = vmatprep.subr.mxu0 %v1560
    %2739 = vmatpush1.msra.mxu0 %v1559
    %2740 = vmatprep.subr.mxu0 %v1564
    %2741 = vmatpush1.msra.mxu0 %v1563
    %2742 = vmatprep.subr.mxu0 %v1568
    %2743 = vmatpush1.msra.mxu0 %v1567
    %2744 = vmatprep.subr.mxu0 %v1572
    %2745 = vmatpush1.msra.mxu0 %v1571
    %2746 = vmatprep.subr.mxu0 %v1576
    %2747 = vmatpush1.msra.mxu0 %v1575
    %2748 = vmatprep.subr.mxu0 %v1580
    %2749 = vmatpush1.msra.mxu0 %v1579
    %2750 = vmatprep.subr.mxu0 %v1584
    %2751 = vmatpush1.msra.mxu0 %v1583
    %2752 = vmatprep.subr.mxu0 %v1588
    %2753 = vmatpush1.msra.mxu0 %v1587
    %2754 = vmatprep.subr.mxu0 %v1592
    %2755 = vmatpush1.msra.mxu0 %v1591
    %2756 = vmatprep.subr.mxu0 %v1596
    %2757 = vmatpush1.msra.mxu0 %v1595
    %2758 = vmatprep.subr.mxu0 %v1600
    %2759 = vmatpush1.msra.mxu0 %v1599
    %2760 = vmatprep.subr.mxu0 %v1604
    %2761 = vmatpush1.msra.mxu0 %v1603
    %2762 = vmatprep.subr.mxu0 %v1608
    %2763 = vmatpush1.msra.mxu0 %v1607
    %2764 = vmatprep.subr.mxu0 %v1612
    %2765 = vmatpush1.msra.mxu0 %v1611
    %2766 = vmatprep.subr.mxu0 %v1616
    %2767 = vmatpush1.msra.mxu0 %v1615
    %2768 = vmatprep.subr.mxu0 %v1620
    %2769 = vmatpush1.msra.mxu0 %v1619
    %2770 = vmatprep.subr.mxu0 %v1624
    %2771 = vmatpush1.msra.mxu0 %v1623
    %2772 = vmatprep.subr.mxu0 %v1628
    %2773 = vmatpush1.msra.mxu0 %v1627
    %2774 = vmatprep.subr.mxu0 %v1632
    %2775 = vmatpush1.msra.mxu0 %v1631
    %2776 = vmatprep.subr.mxu0 %v1636
    %2777 = vmatpush1.msra.mxu0 %v1635
    %2778 = vmatprep.subr.mxu0 %v1640
    %2779 = vmatpush1.msra.mxu0 %v1639
    %2780 = vmatprep.subr.mxu0 %v1644
    %2781 = vmatpush1.msra.mxu0 %v1643
    %2782 = vmatprep.subr.mxu0 %v1648
    %2783 = vmatpush1.msra.mxu0 %v1647
    %2784 = vmatprep.subr.mxu0 %v1652
    %2785 = vmatpush1.msra.mxu0 %v1651
    %2786 = vmatprep.mubr.f32.mxu0 %v1916
    %2787 = vmatmul.mubr.f32.gmra.mrb[0].mxu0 %v1915
    %v2788 = vpop.f32.mrb[0].mxu0
    %v2789 = vadd.f32 %v2718, %v2788
    %v2790 = vpop.f32.mrb[0].mxu0
    %v2791 = vadd.f32 %v2720, %v2790
    %2792 = vdwg.mxu0
    %2793 = vmatprep.subr.mxu0 %v122
    %2794 = vmatpush1.msra.mxu0 %v121
    %2795 = vmatprep.subr.mxu0 %v126
    %2796 = vmatpush1.msra.mxu0 %v125
    %2797 = vmatprep.subr.mxu0 %v130
    %2798 = vmatpush1.msra.mxu0 %v129
    %2799 = vmatprep.subr.mxu0 %v134
    %2800 = vmatpush1.msra.mxu0 %v133
    %2801 = vmatprep.subr.mxu0 %v138
    %2802 = vmatpush1.msra.mxu0 %v137
    %2803 = vmatprep.subr.mxu0 %v142
    %2804 = vmatpush1.msra.mxu0 %v141
    %2805 = vmatprep.subr.mxu0 %v146
    %2806 = vmatpush1.msra.mxu0 %v145
    %2807 = vmatprep.subr.mxu0 %v150
    %2808 = vmatpush1.msra.mxu0 %v149
    %2809 = vmatprep.subr.mxu0 %v154
    %2810 = vmatpush1.msra.mxu0 %v153
    %2811 = vmatprep.subr.mxu0 %v158
    %2812 = vmatpush1.msra.mxu0 %v157
    %2813 = vmatprep.subr.mxu0 %v162
    %2814 = vmatpush1.msra.mxu0 %v161
    %2815 = vmatprep.subr.mxu0 %v166
    %2816 = vmatpush1.msra.mxu0 %v165
    %2817 = vmatprep.subr.mxu0 %v170
    %2818 = vmatpush1.msra.mxu0 %v169
    %2819 = vmatprep.subr.mxu0 %v174
    %2820 = vmatpush1.msra.mxu0 %v173
    %2821 = vmatprep.subr.mxu0 %v178
    %2822 = vmatpush1.msra.mxu0 %v177
    %2823 = vmatprep.subr.mxu0 %v182
    %2824 = vmatpush1.msra.mxu0 %v181
    %2825 = vmatprep.subr.mxu0 %v186
    %2826 = vmatpush1.msra.mxu0 %v185
    %2827 = vmatprep.subr.mxu0 %v190
    %2828 = vmatpush1.msra.mxu0 %v189
    %2829 = vmatprep.subr.mxu0 %v194
    %2830 = vmatpush1.msra.mxu0 %v193
    %2831 = vmatprep.subr.mxu0 %v198
    %2832 = vmatpush1.msra.mxu0 %v197
    %2833 = vmatprep.subr.mxu0 %v202
    %2834 = vmatpush1.msra.mxu0 %v201
    %2835 = vmatprep.subr.mxu0 %v206
    %2836 = vmatpush1.msra.mxu0 %v205
    %2837 = vmatprep.subr.mxu0 %v210
    %2838 = vmatpush1.msra.mxu0 %v209
    %2839 = vmatprep.subr.mxu0 %v214
    %2840 = vmatpush1.msra.mxu0 %v213
    %2841 = vmatprep.subr.mxu0 %v218
    %2842 = vmatpush1.msra.mxu0 %v217
    %2843 = vmatprep.subr.mxu0 %v222
    %2844 = vmatpush1.msra.mxu0 %v221
    %2845 = vmatprep.subr.mxu0 %v226
    %2846 = vmatpush1.msra.mxu0 %v225
    %2847 = vmatprep.subr.mxu0 %v230
    %2848 = vmatpush1.msra.mxu0 %v229
    %2849 = vmatprep.subr.mxu0 %v234
    %2850 = vmatpush1.msra.mxu0 %v233
    %2851 = vmatprep.subr.mxu0 %v238
    %2852 = vmatpush1.msra.mxu0 %v237
    %2853 = vmatprep.subr.mxu0 %v242
    %2854 = vmatpush1.msra.mxu0 %v241
    %2855 = vmatprep.subr.mxu0 %v246
    %2856 = vmatpush1.msra.mxu0 %v245
    %2857 = vmatprep.mubr.f32.mxu0 %v1734
    %2858 = vmatmul.mubr.f32.gmra.mrb[0].mxu0 %v1733
    %v2859 = vpop.f32.mrb[0].mxu0
    %v2860 = vadd.f32 %v1668, %v2859
    %v2861 = vpop.f32.mrb[0].mxu0
    %v2862 = vadd.f32 %v1672, %v2861
    %2863 = vdwg.mxu0
    %2864 = vmatprep.subr.mxu0 %v250
    %2865 = vmatpush1.msra.mxu0 %v249
    %2866 = vmatprep.subr.mxu0 %v254
    %2867 = vmatpush1.msra.mxu0 %v253
    %2868 = vmatprep.subr.mxu0 %v258
    %2869 = vmatpush1.msra.mxu0 %v257
    %2870 = vmatprep.subr.mxu0 %v262
    %2871 = vmatpush1.msra.mxu0 %v261
    %2872 = vmatprep.subr.mxu0 %v266
    %2873 = vmatpush1.msra.mxu0 %v265
    %2874 = vmatprep.subr.mxu0 %v270
    %2875 = vmatpush1.msra.mxu0 %v269
    %2876 = vmatprep.subr.mxu0 %v274
    %2877 = vmatpush1.msra.mxu0 %v273
    %2878 = vmatprep.subr.mxu0 %v278
    %2879 = vmatpush1.msra.mxu0 %v277
    %2880 = vmatprep.subr.mxu0 %v282
    %2881 = vmatpush1.msra.mxu0 %v281
    %2882 = vmatprep.subr.mxu0 %v286
    %2883 = vmatpush1.msra.mxu0 %v285
    %2884 = vmatprep.subr.mxu0 %v290
    %2885 = vmatpush1.msra.mxu0 %v289
    %2886 = vmatprep.subr.mxu0 %v294
    %2887 = vmatpush1.msra.mxu0 %v293
    %2888 = vmatprep.subr.mxu0 %v298
    %2889 = vmatpush1.msra.mxu0 %v297
    %2890 = vmatprep.subr.mxu0 %v302
    %2891 = vmatpush1.msra.mxu0 %v301
    %2892 = vmatprep.subr.mxu0 %v306
    %2893 = vmatpush1.msra.mxu0 %v305
    %2894 = vmatprep.subr.mxu0 %v310
    %2895 = vmatpush1.msra.mxu0 %v309
    %2896 = vmatprep.subr.mxu0 %v314
    %2897 = vmatpush1.msra.mxu0 %v313
    %2898 = vmatprep.subr.mxu0 %v318
    %2899 = vmatpush1.msra.mxu0 %v317
    %2900 = vmatprep.subr.mxu0 %v322
    %2901 = vmatpush1.msra.mxu0 %v321
    %2902 = vmatprep.subr.mxu0 %v326
    %2903 = vmatpush1.msra.mxu0 %v325
    %2904 = vmatprep.subr.mxu0 %v330
    %2905 = vmatpush1.msra.mxu0 %v329
    %2906 = vmatprep.subr.mxu0 %v334
    %2907 = vmatpush1.msra.mxu0 %v333
    %2908 = vmatprep.subr.mxu0 %v338
    %2909 = vmatpush1.msra.mxu0 %v337
    %2910 = vmatprep.subr.mxu0 %v342
    %2911 = vmatpush1.msra.mxu0 %v341
    %2912 = vmatprep.subr.mxu0 %v346
    %2913 = vmatpush1.msra.mxu0 %v345
    %2914 = vmatprep.subr.mxu0 %v350
    %2915 = vmatpush1.msra.mxu0 %v349
    %2916 = vmatprep.subr.mxu0 %v354
    %2917 = vmatpush1.msra.mxu0 %v353
    %2918 = vmatprep.subr.mxu0 %v358
    %2919 = vmatpush1.msra.mxu0 %v357
    %2920 = vmatprep.subr.mxu0 %v362
    %2921 = vmatpush1.msra.mxu0 %v361
    %2922 = vmatprep.subr.mxu0 %v366
    %2923 = vmatpush1.msra.mxu0 %v365
    %2924 = vmatprep.subr.mxu0 %v370
    %2925 = vmatpush1.msra.mxu0 %v369
    %2926 = vmatprep.subr.mxu0 %v374
    %2927 = vmatpush1.msra.mxu0 %v373
    %2928 = vmatprep.mubr.f32.mxu0 %v1736
    %2929 = vmatmul.mubr.f32.gmra.mrb[0].mxu0 %v1735
    %v2930 = vpop.f32.mrb[0].mxu0
    %v2931 = vadd.f32 %v2860, %v2930
    %v2932 = vpop.f32.mrb[0].mxu0
    %v2933 = vadd.f32 %v2862, %v2932
    %2934 = vdwg.mxu0
    %2935 = vmatprep.subr.mxu0 %v378
    %2936 = vmatpush1.msra.mxu0 %v377
    %2937 = vmatprep.subr.mxu0 %v382
    %2938 = vmatpush1.msra.mxu0 %v381
    %2939 = vmatprep.subr.mxu0 %v386
    %2940 = vmatpush1.msra.mxu0 %v385
    %2941 = vmatprep.subr.mxu0 %v390
    %2942 = vmatpush1.msra.mxu0 %v389
    %2943 = vmatprep.subr.mxu0 %v394
    %2944 = vmatpush1.msra.mxu0 %v393
    %2945 = vmatprep.subr.mxu0 %v398
    %2946 = vmatpush1.msra.mxu0 %v397
    %2947 = vmatprep.subr.mxu0 %v402
    %2948 = vmatpush1.msra.mxu0 %v401
    %2949 = vmatprep.subr.mxu0 %v406
    %2950 = vmatpush1.msra.mxu0 %v405
    %2951 = vmatprep.subr.mxu0 %v410
    %2952 = vmatpush1.msra.mxu0 %v409
    %2953 = vmatprep.subr.mxu0 %v414
    %2954 = vmatpush1.msra.mxu0 %v413
    %2955 = vmatprep.subr.mxu0 %v418
    %2956 = vmatpush1.msra.mxu0 %v417
    %2957 = vmatprep.subr.mxu0 %v422
    %2958 = vmatpush1.msra.mxu0 %v421
    %2959 = vmatprep.subr.mxu0 %v426
    %2960 = vmatpush1.msra.mxu0 %v425
    %2961 = vmatprep.subr.mxu0 %v430
    %2962 = vmatpush1.msra.mxu0 %v429
    %2963 = vmatprep.subr.mxu0 %v434
    %2964 = vmatpush1.msra.mxu0 %v433
    %2965 = vmatprep.subr.mxu0 %v438
    %2966 = vmatpush1.msra.mxu0 %v437
    %2967 = vmatprep.subr.mxu0 %v442
    %2968 = vmatpush1.msra.mxu0 %v441
    %2969 = vmatprep.subr.mxu0 %v446
    %2970 = vmatpush1.msra.mxu0 %v445
    %2971 = vmatprep.subr.mxu0 %v450
    %2972 = vmatpush1.msra.mxu0 %v449
    %2973 = vmatprep.subr.mxu0 %v454
    %2974 = vmatpush1.msra.mxu0 %v453
    %2975 = vmatprep.subr.mxu0 %v458
    %2976 = vmatpush1.msra.mxu0 %v457
    %2977 = vmatprep.subr.mxu0 %v462
    %2978 = vmatpush1.msra.mxu0 %v461
    %2979 = vmatprep.subr.mxu0 %v466
    %2980 = vmatpush1.msra.mxu0 %v465
    %2981 = vmatprep.subr.mxu0 %v470
    %2982 = vmatpush1.msra.mxu0 %v469
    %2983 = vmatprep.subr.mxu0 %v474
    %2984 = vmatpush1.msra.mxu0 %v473
    %2985 = vmatprep.subr.mxu0 %v478
    %2986 = vmatpush1.msra.mxu0 %v477
    %2987 = vmatprep.subr.mxu0 %v482
    %2988 = vmatpush1.msra.mxu0 %v481
    %2989 = vmatprep.subr.mxu0 %v486
    %2990 = vmatpush1.msra.mxu0 %v485
    %2991 = vmatprep.subr.mxu0 %v490
    %2992 = vmatpush1.msra.mxu0 %v489
    %2993 = vmatprep.subr.mxu0 %v494
    %2994 = vmatpush1.msra.mxu0 %v493
    %2995 = vmatprep.subr.mxu0 %v498
    %2996 = vmatpush1.msra.mxu0 %v497
    %2997 = vmatprep.subr.mxu0 %v502
    %2998 = vmatpush1.msra.mxu0 %v501
    %2999 = vmatprep.mubr.f32.mxu0 %v1770
    %3000 = vmatmul.mubr.f32.gmra.mrb[0].mxu0 %v1769
    %v3001 = vpop.f32.mrb[0].mxu0
    %v3002 = vadd.f32 %v2931, %v3001
    %v3003 = vpop.f32.mrb[0].mxu0
    %v3004 = vadd.f32 %v2933, %v3003
    %3005 = vdwg.mxu0
    %3006 = vmatprep.subr.mxu0 %v506
    %3007 = vmatpush1.msra.mxu0 %v505
    %3008 = vmatprep.subr.mxu0 %v510
    %3009 = vmatpush1.msra.mxu0 %v509
    %3010 = vmatprep.subr.mxu0 %v514
    %3011 = vmatpush1.msra.mxu0 %v513
    %3012 = vmatprep.subr.mxu0 %v518
    %3013 = vmatpush1.msra.mxu0 %v517
    %3014 = vmatprep.subr.mxu0 %v522
    %3015 = vmatpush1.msra.mxu0 %v521
    %3016 = vmatprep.subr.mxu0 %v526
    %3017 = vmatpush1.msra.mxu0 %v525
    %3018 = vmatprep.subr.mxu0 %v530
    %3019 = vmatpush1.msra.mxu0 %v529
    %3020 = vmatprep.subr.mxu0 %v534
    %3021 = vmatpush1.msra.mxu0 %v533
    %3022 = vmatprep.subr.mxu0 %v538
    %3023 = vmatpush1.msra.mxu0 %v537
    %3024 = vmatprep.subr.mxu0 %v542
    %3025 = vmatpush1.msra.mxu0 %v541
    %3026 = vmatprep.subr.mxu0 %v546
    %3027 = vmatpush1.msra.mxu0 %v545
    %3028 = vmatprep.subr.mxu0 %v550
    %3029 = vmatpush1.msra.mxu0 %v549
    %3030 = vmatprep.subr.mxu0 %v554
    %3031 = vmatpush1.msra.mxu0 %v553
    %3032 = vmatprep.subr.mxu0 %v558
    %3033 = vmatpush1.msra.mxu0 %v557
    %3034 = vmatprep.subr.mxu0 %v562
    %3035 = vmatpush1.msra.mxu0 %v561
    %3036 = vmatprep.subr.mxu0 %v566
    %3037 = vmatpush1.msra.mxu0 %v565
    %3038 = vmatprep.subr.mxu0 %v570
    %3039 = vmatpush1.msra.mxu0 %v569
    %3040 = vmatprep.subr.mxu0 %v574
    %3041 = vmatpush1.msra.mxu0 %v573
    %3042 = vmatprep.subr.mxu0 %v578
    %3043 = vmatpush1.msra.mxu0 %v577
    %3044 = vmatprep.subr.mxu0 %v582
    %3045 = vmatpush1.msra.mxu0 %v581
    %3046 = vmatprep.subr.mxu0 %v586
    %3047 = vmatpush1.msra.mxu0 %v585
    %3048 = vmatprep.subr.mxu0 %v590
    %3049 = vmatpush1.msra.mxu0 %v589
    %3050 = vmatprep.subr.mxu0 %v594
    %3051 = vmatpush1.msra.mxu0 %v593
    %3052 = vmatprep.subr.mxu0 %v598
    %3053 = vmatpush1.msra.mxu0 %v597
    %3054 = vmatprep.subr.mxu0 %v602
    %3055 = vmatpush1.msra.mxu0 %v601
    %3056 = vmatprep.subr.mxu0 %v606
    %3057 = vmatpush1.msra.mxu0 %v605
    %3058 = vmatprep.subr.mxu0 %v610
    %3059 = vmatpush1.msra.mxu0 %v609
    %3060 = vmatprep.subr.mxu0 %v614
    %3061 = vmatpush1.msra.mxu0 %v613
    %3062 = vmatprep.subr.mxu0 %v618
    %3063 = vmatpush1.msra.mxu0 %v617
    %3064 = vmatprep.subr.mxu0 %v622
    %3065 = vmatpush1.msra.mxu0 %v621
    %3066 = vmatprep.subr.mxu0 %v626
    %3067 = vmatpush1.msra.mxu0 %v625
    %3068 = vmatprep.subr.mxu0 %v630
    %3069 = vmatpush1.msra.mxu0 %v629
    %3070 = vmatprep.mubr.f32.mxu0 %v1772
    %3071 = vmatmul.mubr.f32.gmra.mrb[0].mxu0 %v1771
    %v3072 = vpop.f32.mrb[0].mxu0
    %v3073 = vadd.f32 %v3002, %v3072
    %v3074 = vpop.f32.mrb[0].mxu0
    %v3075 = vadd.f32 %v3004, %v3074
    %3076 = vdwg.mxu0
    %3077 = vmatprep.subr.mxu0 %v634
    %3078 = vmatpush1.msra.mxu0 %v633
    %3079 = vmatprep.subr.mxu0 %v638
    %3080 = vmatpush1.msra.mxu0 %v637
    %3081 = vmatprep.subr.mxu0 %v642
    %3082 = vmatpush1.msra.mxu0 %v641
    %3083 = vmatprep.subr.mxu0 %v646
    %3084 = vmatpush1.msra.mxu0 %v645
    %3085 = vmatprep.subr.mxu0 %v650
    %3086 = vmatpush1.msra.mxu0 %v649
    %3087 = vmatprep.subr.mxu0 %v654
    %3088 = vmatpush1.msra.mxu0 %v653
    %3089 = vmatprep.subr.mxu0 %v658
    %3090 = vmatpush1.msra.mxu0 %v657
    %3091 = vmatprep.subr.mxu0 %v662
    %3092 = vmatpush1.msra.mxu0 %v661
    %3093 = vmatprep.subr.mxu0 %v666
    %3094 = vmatpush1.msra.mxu0 %v665
    %3095 = vmatprep.subr.mxu0 %v670
    %3096 = vmatpush1.msra.mxu0 %v669
    %3097 = vmatprep.subr.mxu0 %v674
    %3098 = vmatpush1.msra.mxu0 %v673
    %3099 = vmatprep.subr.mxu0 %v678
    %3100 = vmatpush1.msra.mxu0 %v677
    %3101 = vmatprep.subr.mxu0 %v682
    %3102 = vmatpush1.msra.mxu0 %v681
    %3103 = vmatprep.subr.mxu0 %v686
    %3104 = vmatpush1.msra.mxu0 %v685
    %3105 = vmatprep.subr.mxu0 %v690
    %3106 = vmatpush1.msra.mxu0 %v689
    %3107 = vmatprep.subr.mxu0 %v694
    %3108 = vmatpush1.msra.mxu0 %v693
    %3109 = vmatprep.subr.mxu0 %v698
    %3110 = vmatpush1.msra.mxu0 %v697
    %3111 = vmatprep.subr.mxu0 %v702
    %3112 = vmatpush1.msra.mxu0 %v701
    %3113 = vmatprep.subr.mxu0 %v706
    %3114 = vmatpush1.msra.mxu0 %v705
    %3115 = vmatprep.subr.mxu0 %v710
    %3116 = vmatpush1.msra.mxu0 %v709
    %3117 = vmatprep.subr.mxu0 %v714
    %3118 = vmatpush1.msra.mxu0 %v713
    %3119 = vmatprep.subr.mxu0 %v718
    %3120 = vmatpush1.msra.mxu0 %v717
    %3121 = vmatprep.subr.mxu0 %v722
    %3122 = vmatpush1.msra.mxu0 %v721
    %3123 = vmatprep.subr.mxu0 %v726
    %3124 = vmatpush1.msra.mxu0 %v725
    %3125 = vmatprep.subr.mxu0 %v730
    %3126 = vmatpush1.msra.mxu0 %v729
    %3127 = vmatprep.subr.mxu0 %v734
    %3128 = vmatpush1.msra.mxu0 %v733
    %3129 = vmatprep.subr.mxu0 %v738
    %3130 = vmatpush1.msra.mxu0 %v737
    %3131 = vmatprep.subr.mxu0 %v742
    %3132 = vmatpush1.msra.mxu0 %v741
    %3133 = vmatprep.subr.mxu0 %v746
    %3134 = vmatpush1.msra.mxu0 %v745
    %3135 = vmatprep.subr.mxu0 %v750
    %3136 = vmatpush1.msra.mxu0 %v749
    %3137 = vmatprep.subr.mxu0 %v754
    %3138 = vmatpush1.msra.mxu0 %v753
    %3139 = vmatprep.subr.mxu0 %v758
    %3140 = vmatpush1.msra.mxu0 %v757
    %3141 = vmatprep.mubr.f32.mxu0 %v1806
    %3142 = vmatmul.mubr.f32.gmra.mrb[0].mxu0 %v1805
    %v3143 = vpop.f32.mrb[0].mxu0
    %v3144 = vadd.f32 %v3073, %v3143
    %v3145 = vpop.f32.mrb[0].mxu0
    %v3146 = vadd.f32 %v3075, %v3145
    %3147 = vdwg.mxu0
    %3148 = vmatprep.subr.mxu0 %v762
    %3149 = vmatpush1.msra.mxu0 %v761
    %3150 = vmatprep.subr.mxu0 %v766
    %3151 = vmatpush1.msra.mxu0 %v765
    %3152 = vmatprep.subr.mxu0 %v770
    %3153 = vmatpush1.msra.mxu0 %v769
    %3154 = vmatprep.subr.mxu0 %v774
    %3155 = vmatpush1.msra.mxu0 %v773
    %3156 = vmatprep.subr.mxu0 %v778
    %3157 = vmatpush1.msra.mxu0 %v777
    %3158 = vmatprep.subr.mxu0 %v782
    %3159 = vmatpush1.msra.mxu0 %v781
    %3160 = vmatprep.subr.mxu0 %v786
    %3161 = vmatpush1.msra.mxu0 %v785
    %3162 = vmatprep.subr.mxu0 %v790
    %3163 = vmatpush1.msra.mxu0 %v789
    %3164 = vmatprep.subr.mxu0 %v794
    %3165 = vmatpush1.msra.mxu0 %v793
    %3166 = vmatprep.subr.mxu0 %v798
    %3167 = vmatpush1.msra.mxu0 %v797
    %3168 = vmatprep.subr.mxu0 %v802
    %3169 = vmatpush1.msra.mxu0 %v801
    %3170 = vmatprep.subr.mxu0 %v806
    %3171 = vmatpush1.msra.mxu0 %v805
    %3172 = vmatprep.subr.mxu0 %v810
    %3173 = vmatpush1.msra.mxu0 %v809
    %3174 = vmatprep.subr.mxu0 %v814
    %3175 = vmatpush1.msra.mxu0 %v813
    %3176 = vmatprep.subr.mxu0 %v818
    %3177 = vmatpush1.msra.mxu0 %v817
    %3178 = vmatprep.subr.mxu0 %v822
    %3179 = vmatpush1.msra.mxu0 %v821
    %3180 = vmatprep.subr.mxu0 %v826
    %3181 = vmatpush1.msra.mxu0 %v825
    %3182 = vmatprep.subr.mxu0 %v830
    %3183 = vmatpush1.msra.mxu0 %v829
    %3184 = vmatprep.subr.mxu0 %v834
    %3185 = vmatpush1.msra.mxu0 %v833
    %3186 = vmatprep.subr.mxu0 %v838
    %3187 = vmatpush1.msra.mxu0 %v837
    %3188 = vmatprep.subr.mxu0 %v842
    %3189 = vmatpush1.msra.mxu0 %v841
    %3190 = vmatprep.subr.mxu0 %v846
    %3191 = vmatpush1.msra.mxu0 %v845
    %3192 = vmatprep.subr.mxu0 %v850
    %3193 = vmatpush1.msra.mxu0 %v849
    %3194 = vmatprep.subr.mxu0 %v854
    %3195 = vmatpush1.msra.mxu0 %v853
    %3196 = vmatprep.subr.mxu0 %v858
    %3197 = vmatpush1.msra.mxu0 %v857
    %3198 = vmatprep.subr.mxu0 %v862
    %3199 = vmatpush1.msra.mxu0 %v861
    %3200 = vmatprep.subr.mxu0 %v866
    %3201 = vmatpush1.msra.mxu0 %v865
    %3202 = vmatprep.subr.mxu0 %v870
    %3203 = vmatpush1.msra.mxu0 %v869
    %3204 = vmatprep.subr.mxu0 %v874
    %3205 = vmatpush1.msra.mxu0 %v873
    %3206 = vmatprep.subr.mxu0 %v878
    %3207 = vmatpush1.msra.mxu0 %v877
    %3208 = vmatprep.subr.mxu0 %v882
    %3209 = vmatpush1.msra.mxu0 %v881
    %3210 = vmatprep.subr.mxu0 %v886
    %3211 = vmatpush1.msra.mxu0 %v885
    %3212 = vmatprep.mubr.f32.mxu0 %v1808
    %3213 = vmatmul.mubr.f32.gmra.mrb[0].mxu0 %v1807
    %v3214 = vpop.f32.mrb[0].mxu0
    %v3215 = vadd.f32 %v3144, %v3214
    %v3216 = vpop.f32.mrb[0].mxu0
    %v3217 = vadd.f32 %v3146, %v3216
    %3218 = vdwg.mxu0
    %3219 = vmatprep.subr.mxu0 %v890
    %3220 = vmatpush1.msra.mxu0 %v889
    %3221 = vmatprep.subr.mxu0 %v894
    %3222 = vmatpush1.msra.mxu0 %v893
    %3223 = vmatprep.subr.mxu0 %v898
    %3224 = vmatpush1.msra.mxu0 %v897
    %3225 = vmatprep.subr.mxu0 %v902
    %3226 = vmatpush1.msra.mxu0 %v901
    %3227 = vmatprep.subr.mxu0 %v906
    %3228 = vmatpush1.msra.mxu0 %v905
    %3229 = vmatprep.subr.mxu0 %v910
    %3230 = vmatpush1.msra.mxu0 %v909
    %3231 = vmatprep.subr.mxu0 %v914
    %3232 = vmatpush1.msra.mxu0 %v913
    %3233 = vmatprep.subr.mxu0 %v918
    %3234 = vmatpush1.msra.mxu0 %v917
    %3235 = vmatprep.subr.mxu0 %v922
    %3236 = vmatpush1.msra.mxu0 %v921
    %3237 = vmatprep.subr.mxu0 %v926
    %3238 = vmatpush1.msra.mxu0 %v925
    %3239 = vmatprep.subr.mxu0 %v930
    %3240 = vmatpush1.msra.mxu0 %v929
    %3241 = vmatprep.subr.mxu0 %v934
    %3242 = vmatpush1.msra.mxu0 %v933
    %3243 = vmatprep.subr.mxu0 %v938
    %3244 = vmatpush1.msra.mxu0 %v937
    %3245 = vmatprep.subr.mxu0 %v942
    %3246 = vmatpush1.msra.mxu0 %v941
    %3247 = vmatprep.subr.mxu0 %v946
    %3248 = vmatpush1.msra.mxu0 %v945
    %3249 = vmatprep.subr.mxu0 %v950
    %3250 = vmatpush1.msra.mxu0 %v949
    %3251 = vmatprep.subr.mxu0 %v954
    %3252 = vmatpush1.msra.mxu0 %v953
    %3253 = vmatprep.subr.mxu0 %v958
    %3254 = vmatpush1.msra.mxu0 %v957
    %3255 = vmatprep.subr.mxu0 %v962
    %3256 = vmatpush1.msra.mxu0 %v961
    %3257 = vmatprep.subr.mxu0 %v966
    %3258 = vmatpush1.msra.mxu0 %v965
    %3259 = vmatprep.subr.mxu0 %v970
    %3260 = vmatpush1.msra.mxu0 %v969
    %3261 = vmatprep.subr.mxu0 %v974
    %3262 = vmatpush1.msra.mxu0 %v973
    %3263 = vmatprep.subr.mxu0 %v978
    %3264 = vmatpush1.msra.mxu0 %v977
    %3265 = vmatprep.subr.mxu0 %v982
    %3266 = vmatpush1.msra.mxu0 %v981
    %3267 = vmatprep.subr.mxu0 %v986
    %3268 = vmatpush1.msra.mxu0 %v985
    %3269 = vmatprep.subr.mxu0 %v990
    %3270 = vmatpush1.msra.mxu0 %v989
    %3271 = vmatprep.subr.mxu0 %v994
    %3272 = vmatpush1.msra.mxu0 %v993
    %3273 = vmatprep.subr.mxu0 %v998
    %3274 = vmatpush1.msra.mxu0 %v997
    %3275 = vmatprep.subr.mxu0 %v1002
    %3276 = vmatpush1.msra.mxu0 %v1001
    %3277 = vmatprep.subr.mxu0 %v1006
    %3278 = vmatpush1.msra.mxu0 %v1005
    %3279 = vmatprep.subr.mxu0 %v1010
    %3280 = vmatpush1.msra.mxu0 %v1009
    %3281 = vmatprep.subr.mxu0 %v1014
    %3282 = vmatpush1.msra.mxu0 %v1013
    %3283 = vmatprep.mubr.f32.mxu0 %v1842
    %3284 = vmatmul.mubr.f32.gmra.mrb[0].mxu0 %v1841
    %v3285 = vpop.f32.mrb[0].mxu0
    %v3286 = vadd.f32 %v3215, %v3285
    %v3287 = vpop.f32.mrb[0].mxu0
    %v3288 = vadd.f32 %v3217, %v3287
    %3289 = vdwg.mxu0
    %3290 = vmatprep.subr.mxu0 %v1018
    %3291 = vmatpush1.msra.mxu0 %v1017
    %3292 = vmatprep.subr.mxu0 %v1022
    %3293 = vmatpush1.msra.mxu0 %v1021
    %3294 = vmatprep.subr.mxu0 %v1026
    %3295 = vmatpush1.msra.mxu0 %v1025
    %3296 = vmatprep.subr.mxu0 %v1030
    %3297 = vmatpush1.msra.mxu0 %v1029
    %3298 = vmatprep.subr.mxu0 %v1034
    %3299 = vmatpush1.msra.mxu0 %v1033
    %3300 = vmatprep.subr.mxu0 %v1038
    %3301 = vmatpush1.msra.mxu0 %v1037
    %3302 = vmatprep.subr.mxu0 %v1042
    %3303 = vmatpush1.msra.mxu0 %v1041
    %3304 = vmatprep.subr.mxu0 %v1046
    %3305 = vmatpush1.msra.mxu0 %v1045
    %3306 = vmatprep.subr.mxu0 %v1050
    %3307 = vmatpush1.msra.mxu0 %v1049
    %3308 = vmatprep.subr.mxu0 %v1054
    %3309 = vmatpush1.msra.mxu0 %v1053
    %3310 = vmatprep.subr.mxu0 %v1058
    %3311 = vmatpush1.msra.mxu0 %v1057
    %3312 = vmatprep.subr.mxu0 %v1062
    %3313 = vmatpush1.msra.mxu0 %v1061
    %3314 = vmatprep.subr.mxu0 %v1066
    %3315 = vmatpush1.msra.mxu0 %v1065
    %3316 = vmatprep.subr.mxu0 %v1070
    %3317 = vmatpush1.msra.mxu0 %v1069
    %3318 = vmatprep.subr.mxu0 %v1074
    %3319 = vmatpush1.msra.mxu0 %v1073
    %3320 = vmatprep.subr.mxu0 %v1078
    %3321 = vmatpush1.msra.mxu0 %v1077
    %3322 = vmatprep.subr.mxu0 %v1082
    %3323 = vmatpush1.msra.mxu0 %v1081
    %3324 = vmatprep.subr.mxu0 %v1086
    %3325 = vmatpush1.msra.mxu0 %v1085
    %3326 = vmatprep.subr.mxu0 %v1090
    %3327 = vmatpush1.msra.mxu0 %v1089
    %3328 = vmatprep.subr.mxu0 %v1094
    %3329 = vmatpush1.msra.mxu0 %v1093
    %3330 = vmatprep.subr.mxu0 %v1098
    %3331 = vmatpush1.msra.mxu0 %v1097
    %3332 = vmatprep.subr.mxu0 %v1102
    %3333 = vmatpush1.msra.mxu0 %v1101
    %3334 = vmatprep.subr.mxu0 %v1106
    %3335 = vmatpush1.msra.mxu0 %v1105
    %3336 = vmatprep.subr.mxu0 %v1110
    %3337 = vmatpush1.msra.mxu0 %v1109
    %3338 = vmatprep.subr.mxu0 %v1114
    %3339 = vmatpush1.msra.mxu0 %v1113
    %3340 = vmatprep.subr.mxu0 %v1118
    %3341 = vmatpush1.msra.mxu0 %v1117
    %3342 = vmatprep.subr.mxu0 %v1122
    %3343 = vmatpush1.msra.mxu0 %v1121
    %3344 = vmatprep.subr.mxu0 %v1126
    %3345 = vmatpush1.msra.mxu0 %v1125
    %3346 = vmatprep.subr.mxu0 %v1130
    %3347 = vmatpush1.msra.mxu0 %v1129
    %3348 = vmatprep.subr.mxu0 %v1134
    %3349 = vmatpush1.msra.mxu0 %v1133
    %3350 = vmatprep.subr.mxu0 %v1138
    %3351 = vmatpush1.msra.mxu0 %v1137
    %3352 = vmatprep.subr.mxu0 %v1142
    %3353 = vmatpush1.msra.mxu0 %v1141
    %3354 = vmatprep.mubr.f32.mxu0 %v1844
    %3355 = vmatmul.mubr.f32.gmra.mrb[0].mxu0 %v1843
    %v3356 = vpop.f32.mrb[0].mxu0
    %v3357 = vadd.f32 %v3286, %v3356
    %v3358 = vpop.f32.mrb[0].mxu0
    %v3359 = vadd.f32 %v3288, %v3358
    %3360 = vdwg.mxu0
    %3361 = vmatprep.subr.mxu0 %v1146
    %3362 = vmatpush1.msra.mxu0 %v1145
    %3363 = vmatprep.subr.mxu0 %v1150
    %3364 = vmatpush1.msra.mxu0 %v1149
    %3365 = vmatprep.subr.mxu0 %v1154
    %3366 = vmatpush1.msra.mxu0 %v1153
    %3367 = vmatprep.subr.mxu0 %v1158
    %3368 = vmatpush1.msra.mxu0 %v1157
    %3369 = vmatprep.subr.mxu0 %v1162
    %3370 = vmatpush1.msra.mxu0 %v1161
    %3371 = vmatprep.subr.mxu0 %v1166
    %3372 = vmatpush1.msra.mxu0 %v1165
    %3373 = vmatprep.subr.mxu0 %v1170
    %3374 = vmatpush1.msra.mxu0 %v1169
    %3375 = vmatprep.subr.mxu0 %v1174
    %3376 = vmatpush1.msra.mxu0 %v1173
    %3377 = vmatprep.subr.mxu0 %v1178
    %3378 = vmatpush1.msra.mxu0 %v1177
    %3379 = vmatprep.subr.mxu0 %v1182
    %3380 = vmatpush1.msra.mxu0 %v1181
    %3381 = vmatprep.subr.mxu0 %v1186
    %3382 = vmatpush1.msra.mxu0 %v1185
    %3383 = vmatprep.subr.mxu0 %v1190
    %3384 = vmatpush1.msra.mxu0 %v1189
    %3385 = vmatprep.subr.mxu0 %v1194
    %3386 = vmatpush1.msra.mxu0 %v1193
    %3387 = vmatprep.subr.mxu0 %v1198
    %3388 = vmatpush1.msra.mxu0 %v1197
    %3389 = vmatprep.subr.mxu0 %v1202
    %3390 = vmatpush1.msra.mxu0 %v1201
    %3391 = vmatprep.subr.mxu0 %v1206
    %3392 = vmatpush1.msra.mxu0 %v1205
    %3393 = vmatprep.subr.mxu0 %v1210
    %3394 = vmatpush1.msra.mxu0 %v1209
    %3395 = vmatprep.subr.mxu0 %v1214
    %3396 = vmatpush1.msra.mxu0 %v1213
    %3397 = vmatprep.subr.mxu0 %v1218
    %3398 = vmatpush1.msra.mxu0 %v1217
    %3399 = vmatprep.subr.mxu0 %v1222
    %3400 = vmatpush1.msra.mxu0 %v1221
    %3401 = vmatprep.subr.mxu0 %v1226
    %3402 = vmatpush1.msra.mxu0 %v1225
    %3403 = vmatprep.subr.mxu0 %v1230
    %3404 = vmatpush1.msra.mxu0 %v1229
    %3405 = vmatprep.subr.mxu0 %v1234
    %3406 = vmatpush1.msra.mxu0 %v1233
    %3407 = vmatprep.subr.mxu0 %v1238
    %3408 = vmatpush1.msra.mxu0 %v1237
    %3409 = vmatprep.subr.mxu0 %v1242
    %3410 = vmatpush1.msra.mxu0 %v1241
    %3411 = vmatprep.subr.mxu0 %v1246
    %3412 = vmatpush1.msra.mxu0 %v1245
    %3413 = vmatprep.subr.mxu0 %v1250
    %3414 = vmatpush1.msra.mxu0 %v1249
    %3415 = vmatprep.subr.mxu0 %v1254
    %3416 = vmatpush1.msra.mxu0 %v1253
    %3417 = vmatprep.subr.mxu0 %v1258
    %3418 = vmatpush1.msra.mxu0 %v1257
    %3419 = vmatprep.subr.mxu0 %v1262
    %3420 = vmatpush1.msra.mxu0 %v1261
    %3421 = vmatprep.subr.mxu0 %v1266
    %3422 = vmatpush1.msra.mxu0 %v1265
    %3423 = vmatprep.subr.mxu0 %v1270
    %3424 = vmatpush1.msra.mxu0 %v1269
    %3425 = vmatprep.mubr.f32.mxu0 %v1878
    %3426 = vmatmul.mubr.f32.gmra.mrb[0].mxu0 %v1877
    %v3427 = vpop.f32.mrb[0].mxu0
    %v3428 = vadd.f32 %v3357, %v3427
    %v3429 = vpop.f32.mrb[0].mxu0
    %v3430 = vadd.f32 %v3359, %v3429
    %3431 = vdwg.mxu0
    %3432 = vmatprep.subr.mxu0 %v1274
    %3433 = vmatpush1.msra.mxu0 %v1273
    %3434 = vmatprep.subr.mxu0 %v1278
    %3435 = vmatpush1.msra.mxu0 %v1277
    %3436 = vmatprep.subr.mxu0 %v1282
    %3437 = vmatpush1.msra.mxu0 %v1281
    %3438 = vmatprep.subr.mxu0 %v1286
    %3439 = vmatpush1.msra.mxu0 %v1285
    %3440 = vmatprep.subr.mxu0 %v1290
    %3441 = vmatpush1.msra.mxu0 %v1289
    %3442 = vmatprep.subr.mxu0 %v1294
    %3443 = vmatpush1.msra.mxu0 %v1293
    %3444 = vmatprep.subr.mxu0 %v1298
    %3445 = vmatpush1.msra.mxu0 %v1297
    %3446 = vmatprep.subr.mxu0 %v1302
    %3447 = vmatpush1.msra.mxu0 %v1301
    %3448 = vmatprep.subr.mxu0 %v1306
    %3449 = vmatpush1.msra.mxu0 %v1305
    %3450 = vmatprep.subr.mxu0 %v1310
    %3451 = vmatpush1.msra.mxu0 %v1309
    %3452 = vmatprep.subr.mxu0 %v1314
    %3453 = vmatpush1.msra.mxu0 %v1313
    %3454 = vmatprep.subr.mxu0 %v1318
    %3455 = vmatpush1.msra.mxu0 %v1317
    %3456 = vmatprep.subr.mxu0 %v1322
    %3457 = vmatpush1.msra.mxu0 %v1321
    %3458 = vmatprep.subr.mxu0 %v1326
    %3459 = vmatpush1.msra.mxu0 %v1325
    %3460 = vmatprep.subr.mxu0 %v1330
    %3461 = vmatpush1.msra.mxu0 %v1329
    %3462 = vmatprep.subr.mxu0 %v1334
    %3463 = vmatpush1.msra.mxu0 %v1333
    %3464 = vmatprep.subr.mxu0 %v1338
    %3465 = vmatpush1.msra.mxu0 %v1337
    %3466 = vmatprep.subr.mxu0 %v1342
    %3467 = vmatpush1.msra.mxu0 %v1341
    %3468 = vmatprep.subr.mxu0 %v1346
    %3469 = vmatpush1.msra.mxu0 %v1345
    %3470 = vmatprep.subr.mxu0 %v1350
    %3471 = vmatpush1.msra.mxu0 %v1349
    %3472 = vmatprep.subr.mxu0 %v1354
    %3473 = vmatpush1.msra.mxu0 %v1353
    %3474 = vmatprep.subr.mxu0 %v1358
    %3475 = vmatpush1.msra.mxu0 %v1357
    %3476 = vmatprep.subr.mxu0 %v1362
    %3477 = vmatpush1.msra.mxu0 %v1361
    %3478 = vmatprep.subr.mxu0 %v1366
    %3479 = vmatpush1.msra.mxu0 %v1365
    %3480 = vmatprep.subr.mxu0 %v1370
    %3481 = vmatpush1.msra.mxu0 %v1369
    %3482 = vmatprep.subr.mxu0 %v1374
    %3483 = vmatpush1.msra.mxu0 %v1373
    %3484 = vmatprep.subr.mxu0 %v1378
    %3485 = vmatpush1.msra.mxu0 %v1377
    %3486 = vmatprep.subr.mxu0 %v1382
    %3487 = vmatpush1.msra.mxu0 %v1381
    %3488 = vmatprep.subr.mxu0 %v1386
    %3489 = vmatpush1.msra.mxu0 %v1385
    %3490 = vmatprep.subr.mxu0 %v1390
    %3491 = vmatpush1.msra.mxu0 %v1389
    %3492 = vmatprep.subr.mxu0 %v1394
    %3493 = vmatpush1.msra.mxu0 %v1393
    %3494 = vmatprep.subr.mxu0 %v1398
    %3495 = vmatpush1.msra.mxu0 %v1397
    %3496 = vmatprep.mubr.f32.mxu0 %v1880
    %3497 = vmatmul.mubr.f32.gmra.mrb[0].mxu0 %v1879
    %v3498 = vpop.f32.mrb[0].mxu0
    %v3499 = vadd.f32 %v3428, %v3498
    %v3500 = vpop.f32.mrb[0].mxu0
    %v3501 = vadd.f32 %v3430, %v3500
    %3502 = vdwg.mxu0
    %3503 = vmatprep.subr.mxu0 %v1402
    %3504 = vmatpush1.msra.mxu0 %v1401
    %3505 = vmatprep.subr.mxu0 %v1406
    %3506 = vmatpush1.msra.mxu0 %v1405
    %3507 = vmatprep.subr.mxu0 %v1410
    %3508 = vmatpush1.msra.mxu0 %v1409
    %3509 = vmatprep.subr.mxu0 %v1414
    %3510 = vmatpush1.msra.mxu0 %v1413
    %3511 = vmatprep.subr.mxu0 %v1418
    %3512 = vmatpush1.msra.mxu0 %v1417
    %3513 = vmatprep.subr.mxu0 %v1422
    %3514 = vmatpush1.msra.mxu0 %v1421
    %3515 = vmatprep.subr.mxu0 %v1426
    %3516 = vmatpush1.msra.mxu0 %v1425
    %3517 = vmatprep.subr.mxu0 %v1430
    %3518 = vmatpush1.msra.mxu0 %v1429
    %3519 = vmatprep.subr.mxu0 %v1434
    %3520 = vmatpush1.msra.mxu0 %v1433
    %3521 = vmatprep.subr.mxu0 %v1438
    %3522 = vmatpush1.msra.mxu0 %v1437
    %3523 = vmatprep.subr.mxu0 %v1442
    %3524 = vmatpush1.msra.mxu0 %v1441
    %3525 = vmatprep.subr.mxu0 %v1446
    %3526 = vmatpush1.msra.mxu0 %v1445
    %3527 = vmatprep.subr.mxu0 %v1450
    %3528 = vmatpush1.msra.mxu0 %v1449
    %3529 = vmatprep.subr.mxu0 %v1454
    %3530 = vmatpush1.msra.mxu0 %v1453
    %3531 = vmatprep.subr.mxu0 %v1458
    %3532 = vmatpush1.msra.mxu0 %v1457
    %3533 = vmatprep.subr.mxu0 %v1462
    %3534 = vmatpush1.msra.mxu0 %v1461
    %3535 = vmatprep.subr.mxu0 %v1466
    %3536 = vmatpush1.msra.mxu0 %v1465
    %3537 = vmatprep.subr.mxu0 %v1470
    %3538 = vmatpush1.msra.mxu0 %v1469
    %3539 = vmatprep.subr.mxu0 %v1474
    %3540 = vmatpush1.msra.mxu0 %v1473
    %3541 = vmatprep.subr.mxu0 %v1478
    %3542 = vmatpush1.msra.mxu0 %v1477
    %3543 = vmatprep.subr.mxu0 %v1482
    %3544 = vmatpush1.msra.mxu0 %v1481
    %3545 = vmatprep.subr.mxu0 %v1486
    %3546 = vmatpush1.msra.mxu0 %v1485
    %3547 = vmatprep.subr.mxu0 %v1490
    %3548 = vmatpush1.msra.mxu0 %v1489
    %3549 = vmatprep.subr.mxu0 %v1494
    %3550 = vmatpush1.msra.mxu0 %v1493
    %3551 = vmatprep.subr.mxu0 %v1498
    %3552 = vmatpush1.msra.mxu0 %v1497
    %3553 = vmatprep.subr.mxu0 %v1502
    %3554 = vmatpush1.msra.mxu0 %v1501
    %3555 = vmatprep.subr.mxu0 %v1506
    %3556 = vmatpush1.msra.mxu0 %v1505
    %3557 = vmatprep.subr.mxu0 %v1510
    %3558 = vmatpush1.msra.mxu0 %v1509
    %3559 = vmatprep.subr.mxu0 %v1514
    %3560 = vmatpush1.msra.mxu0 %v1513
    %3561 = vmatprep.subr.mxu0 %v1518
    %3562 = vmatpush1.msra.mxu0 %v1517
    %3563 = vmatprep.subr.mxu0 %v1522
    %3564 = vmatpush1.msra.mxu0 %v1521
    %3565 = vmatprep.subr.mxu0 %v1526
    %3566 = vmatpush1.msra.mxu0 %v1525
    %3567 = vmatprep.mubr.f32.mxu0 %v1914
    %3568 = vmatmul.mubr.f32.gmra.mrb[0].mxu0 %v1913
    %v3569 = vpop.f32.mrb[0].mxu0
    %v3570 = vadd.f32 %v3499, %v3569
    %v3571 = vpop.f32.mrb[0].mxu0
    %v3572 = vadd.f32 %v3501, %v3571
    %3573 = vdwg.mxu0
    %3574 = vmatprep.subr.mxu0 %v1530
    %3575 = vmatpush1.msra.mxu0 %v1529
    %3576 = vmatprep.subr.mxu0 %v1534
    %3577 = vmatpush1.msra.mxu0 %v1533
    %3578 = vmatprep.subr.mxu0 %v1538
    %3579 = vmatpush1.msra.mxu0 %v1537
    %3580 = vmatprep.subr.mxu0 %v1542
    %3581 = vmatpush1.msra.mxu0 %v1541
    %3582 = vmatprep.subr.mxu0 %v1546
    %3583 = vmatpush1.msra.mxu0 %v1545
    %3584 = vmatprep.subr.mxu0 %v1550
    %3585 = vmatpush1.msra.mxu0 %v1549
    %3586 = vmatprep.subr.mxu0 %v1554
    %3587 = vmatpush1.msra.mxu0 %v1553
    %3588 = vmatprep.subr.mxu0 %v1558
    %3589 = vmatpush1.msra.mxu0 %v1557
    %3590 = vmatprep.subr.mxu0 %v1562
    %3591 = vmatpush1.msra.mxu0 %v1561
    %3592 = vmatprep.subr.mxu0 %v1566
    %3593 = vmatpush1.msra.mxu0 %v1565
    %3594 = vmatprep.subr.mxu0 %v1570
    %3595 = vmatpush1.msra.mxu0 %v1569
    %3596 = vmatprep.subr.mxu0 %v1574
    %3597 = vmatpush1.msra.mxu0 %v1573
    %3598 = vmatprep.subr.mxu0 %v1578
    %3599 = vmatpush1.msra.mxu0 %v1577
    %3600 = vmatprep.subr.mxu0 %v1582
    %3601 = vmatpush1.msra.mxu0 %v1581
    %3602 = vmatprep.subr.mxu0 %v1586
    %3603 = vmatpush1.msra.mxu0 %v1585
    %3604 = vmatprep.subr.mxu0 %v1590
    %3605 = vmatpush1.msra.mxu0 %v1589
    %3606 = vmatprep.subr.mxu0 %v1594
    %3607 = vmatpush1.msra.mxu0 %v1593
    %3608 = vmatprep.subr.mxu0 %v1598
    %3609 = vmatpush1.msra.mxu0 %v1597
    %3610 = vmatprep.subr.mxu0 %v1602
    %3611 = vmatpush1.msra.mxu0 %v1601
    %3612 = vmatprep.subr.mxu0 %v1606
    %3613 = vmatpush1.msra.mxu0 %v1605
    %3614 = vmatprep.subr.mxu0 %v1610
    %3615 = vmatpush1.msra.mxu0 %v1609
    %3616 = vmatprep.subr.mxu0 %v1614
    %3617 = vmatpush1.msra.mxu0 %v1613
    %3618 = vmatprep.subr.mxu0 %v1618
    %3619 = vmatpush1.msra.mxu0 %v1617
    %3620 = vmatprep.subr.mxu0 %v1622
    %3621 = vmatpush1.msra.mxu0 %v1621
    %3622 = vmatprep.subr.mxu0 %v1626
    %3623 = vmatpush1.msra.mxu0 %v1625
    %3624 = vmatprep.subr.mxu0 %v1630
    %3625 = vmatpush1.msra.mxu0 %v1629
    %3626 = vmatprep.subr.mxu0 %v1634
    %3627 = vmatpush1.msra.mxu0 %v1633
    %3628 = vmatprep.subr.mxu0 %v1638
    %3629 = vmatpush1.msra.mxu0 %v1637
    %3630 = vmatprep.subr.mxu0 %v1642
    %3631 = vmatpush1.msra.mxu0 %v1641
    %3632 = vmatprep.subr.mxu0 %v1646
    %3633 = vmatpush1.msra.mxu0 %v1645
    %3634 = vmatprep.subr.mxu0 %v1650
    %3635 = vmatpush1.msra.mxu0 %v1649
    %3636 = vmatprep.subr.mxu0 %v1654
    %3637 = vmatpush1.msra.mxu0 %v1653
    %3638 = vmatprep.mubr.f32.mxu0 %v1916
    %3639 = vmatmul.mubr.f32.gmra.mrb[0].mxu0 %v1915
    %v3640 = vpop.f32.mrb[0].mxu0
    %v3641 = vadd.f32 %v3570, %v3640
    %v3642 = vpop.f32.mrb[0].mxu0
    %v3643 = vadd.f32 %v3572, %v3642
    %3644 = vdwg.mxu0
    %v3645 = vmax.f32 %v2789, 0.0
    %v3646 = vmax.f32 %v2791, 0.0
    %v3647 = vmax.f32 %v3641, 0.0
    %v3648 = vmax.f32 %v3643, 0.0
    %v3649 = vld [vmem:[#allocation7] sm:$0xff]
    %v3650 = vld [vmem:[#allocation7 + $0x8] sm:$0xff]
    %v3651 = vld [vmem:[#allocation7 + $0x10] sm:$0xff]
    %v3652 = vld [vmem:[#allocation7 + $0x18] sm:$0xff]
    %v3653 = vld [vmem:[#allocation7 + $0x20] sm:$0xff]
    %v3654 = vld [vmem:[#allocation7 + $0x28] sm:$0xff]
    %v3655 = vld [vmem:[#allocation7 + $0x30] sm:$0xff]
    %v3656 = vld [vmem:[#allocation7 + $0x38] sm:$0xff]
    %v3657 = vld [vmem:[#allocation7 + $0x40] sm:$0xff]
    %v3658 = vld [vmem:[#allocation7 + $0x48] sm:$0xff]
    %v3659 = vld [vmem:[#allocation7 + $0x50] sm:$0xff]
    %v3660 = vld [vmem:[#allocation7 + $0x58] sm:$0xff]
    %v3661 = vld [vmem:[#allocation7 + $0x60] sm:$0xff]
    %v3662 = vld [vmem:[#allocation7 + $0x68] sm:$0xff]
    %v3663 = vld [vmem:[#allocation7 + $0x70] sm:$0xff]
    %v3664 = vld [vmem:[#allocation7 + $0x78] sm:$0xff]
    %v3665 = vld [vmem:[#allocation7 + $0x80] sm:$0xff]
    %v3666 = vld [vmem:[#allocation7 + $0x88] sm:$0xff]
    %v3667 = vld [vmem:[#allocation7 + $0x90] sm:$0xff]
    %v3668 = vld [vmem:[#allocation7 + $0x98] sm:$0xff]
    %v3669 = vld [vmem:[#allocation7 + $0xa0] sm:$0xff]
    %v3670 = vld [vmem:[#allocation7 + $0xa8] sm:$0xff]
    %v3671 = vld [vmem:[#allocation7 + $0xb0] sm:$0xff]
    %v3672 = vld [vmem:[#allocation7 + $0xb8] sm:$0xff]
    %v3673 = vld [vmem:[#allocation7 + $0xc0] sm:$0xff]
    %v3674 = vld [vmem:[#allocation7 + $0xc8] sm:$0xff]
    %v3675 = vld [vmem:[#allocation7 + $0xd0] sm:$0xff]
    %v3676 = vld [vmem:[#allocation7 + $0xd8] sm:$0xff]
    %v3677 = vld [vmem:[#allocation7 + $0xe0] sm:$0xff]
    %v3678 = vld [vmem:[#allocation7 + $0xe8] sm:$0xff]
    %v3679 = vld [vmem:[#allocation7 + $0xf0] sm:$0xff]
    %v3680 = vld [vmem:[#allocation7 + $0xf8] sm:$0xff]
    %v3681 = vld [vmem:[#allocation7 + $0x100] sm:$0xff]
    %v3682 = vld [vmem:[#allocation7 + $0x108] sm:$0xff]
    %v3683 = vld [vmem:[#allocation7 + $0x110] sm:$0xff]
    %v3684 = vld [vmem:[#allocation7 + $0x118] sm:$0xff]
    %v3685 = vld [vmem:[#allocation7 + $0x120] sm:$0xff]
    %v3686 = vld [vmem:[#allocation7 + $0x128] sm:$0xff]
    %v3687 = vld [vmem:[#allocation7 + $0x130] sm:$0xff]
    %v3688 = vld [vmem:[#allocation7 + $0x138] sm:$0xff]
    %v3689 = vld [vmem:[#allocation7 + $0x140] sm:$0xff]
    %v3690 = vld [vmem:[#allocation7 + $0x148] sm:$0xff]
    %v3691 = vld [vmem:[#allocation7 + $0x150] sm:$0xff]
    %v3692 = vld [vmem:[#allocation7 + $0x158] sm:$0xff]
    %v3693 = vld [vmem:[#allocation7 + $0x160] sm:$0xff]
    %v3694 = vld [vmem:[#allocation7 + $0x168] sm:$0xff]
    %v3695 = vld [vmem:[#allocation7 + $0x170] sm:$0xff]
    %v3696 = vld [vmem:[#allocation7 + $0x178] sm:$0xff]
    %v3697 = vld [vmem:[#allocation7 + $0x180] sm:$0xff]
    %v3698 = vld [vmem:[#allocation7 + $0x188] sm:$0xff]
    %v3699 = vld [vmem:[#allocation7 + $0x190] sm:$0xff]
    %v3700 = vld [vmem:[#allocation7 + $0x198] sm:$0xff]
    %v3701 = vld [vmem:[#allocation7 + $0x1a0] sm:$0xff]
    %v3702 = vld [vmem:[#allocation7 + $0x1a8] sm:$0xff]
    %v3703 = vld [vmem:[#allocation7 + $0x1b0] sm:$0xff]
    %v3704 = vld [vmem:[#allocation7 + $0x1b8] sm:$0xff]
    %v3705 = vld [vmem:[#allocation7 + $0x1c0] sm:$0xff]
    %v3706 = vld [vmem:[#allocation7 + $0x1c8] sm:$0xff]
    %v3707 = vld [vmem:[#allocation7 + $0x1d0] sm:$0xff]
    %v3708 = vld [vmem:[#allocation7 + $0x1d8] sm:$0xff]
    %v3709 = vld [vmem:[#allocation7 + $0x1e0] sm:$0xff]
    %v3710 = vld [vmem:[#allocation7 + $0x1e8] sm:$0xff]
    %v3711 = vld [vmem:[#allocation7 + $0x1f0] sm:$0xff]
    %v3712 = vld [vmem:[#allocation7 + $0x1f8] sm:$0xff]
    %v3713 = vld [vmem:[#allocation8] sm:$0x1]
    %v3715 = vlaneseq
    %v3716 = vshrl.u32 %v3715, 7
    %v3717 = vsub.s32 0, %v3716
    %v3718 = vrot.slane %v3713, %v3717
    %3720 = vmatprep.subr.mxu0 0.0
    %3721 = vmatpush1.msra.mxu0 %v3649
    %3722 = vmatprep.subr.mxu0 0.0
    %3723 = vmatpush1.msra.mxu0 %v3650
    %3724 = vmatprep.subr.mxu0 0.0
    %3725 = vmatpush1.msra.mxu0 %v3651
    %3726 = vmatprep.subr.mxu0 0.0
    %3727 = vmatpush1.msra.mxu0 %v3652
    %3728 = vmatprep.subr.mxu0 0.0
    %3729 = vmatpush1.msra.mxu0 %v3653
    %3730 = vmatprep.subr.mxu0 0.0
    %3731 = vmatpush1.msra.mxu0 %v3654
    %3732 = vmatprep.subr.mxu0 0.0
    %3733 = vmatpush1.msra.mxu0 %v3655
    %3734 = vmatprep.subr.mxu0 0.0
    %3735 = vmatpush1.msra.mxu0 %v3656
    %3736 = vmatprep.subr.mxu0 0.0
    %3737 = vmatpush1.msra.mxu0 %v3657
    %3738 = vmatprep.subr.mxu0 0.0
    %3739 = vmatpush1.msra.mxu0 %v3658
    %3740 = vmatprep.subr.mxu0 0.0
    %3741 = vmatpush1.msra.mxu0 %v3659
    %3742 = vmatprep.subr.mxu0 0.0
    %3743 = vmatpush1.msra.mxu0 %v3660
    %3744 = vmatprep.subr.mxu0 0.0
    %3745 = vmatpush1.msra.mxu0 %v3661
    %3746 = vmatprep.subr.mxu0 0.0
    %3747 = vmatpush1.msra.mxu0 %v3662
    %3748 = vmatprep.subr.mxu0 0.0
    %3749 = vmatpush1.msra.mxu0 %v3663
    %3750 = vmatprep.subr.mxu0 0.0
    %3751 = vmatpush1.msra.mxu0 %v3664
    %3752 = vmatprep.subr.mxu0 0.0
    %3753 = vmatpush1.msra.mxu0 %v3665
    %3754 = vmatprep.subr.mxu0 0.0
    %3755 = vmatpush1.msra.mxu0 %v3666
    %3756 = vmatprep.subr.mxu0 0.0
    %3757 = vmatpush1.msra.mxu0 %v3667
    %3758 = vmatprep.subr.mxu0 0.0
    %3759 = vmatpush1.msra.mxu0 %v3668
    %3760 = vmatprep.subr.mxu0 0.0
    %3761 = vmatpush1.msra.mxu0 %v3669
    %3762 = vmatprep.subr.mxu0 0.0
    %3763 = vmatpush1.msra.mxu0 %v3670
    %3764 = vmatprep.subr.mxu0 0.0
    %3765 = vmatpush1.msra.mxu0 %v3671
    %3766 = vmatprep.subr.mxu0 0.0
    %3767 = vmatpush1.msra.mxu0 %v3672
    %3768 = vmatprep.subr.mxu0 0.0
    %3769 = vmatpush1.msra.mxu0 %v3673
    %3770 = vmatprep.subr.mxu0 0.0
    %3771 = vmatpush1.msra.mxu0 %v3674
    %3772 = vmatprep.subr.mxu0 0.0
    %3773 = vmatpush1.msra.mxu0 %v3675
    %3774 = vmatprep.subr.mxu0 0.0
    %3775 = vmatpush1.msra.mxu0 %v3676
    %3776 = vmatprep.subr.mxu0 0.0
    %3777 = vmatpush1.msra.mxu0 %v3677
    %3778 = vmatprep.subr.mxu0 0.0
    %3779 = vmatpush1.msra.mxu0 %v3678
    %3780 = vmatprep.subr.mxu0 0.0
    %3781 = vmatpush1.msra.mxu0 %v3679
    %3782 = vmatprep.subr.mxu0 0.0
    %3783 = vmatpush1.msra.mxu0 %v3680
    %3784 = vmatprep.mubr.f32.mxu0 %v3646
    %3785 = vmatmul.mubr.f32.gmra.mrb[0].mxu0 %v3645
    %v3786 = vpop.f32.mrb[0].mxu0
    %v3787 = vadd.f32 %v3718, %v3786
    %v3788 = vpop.f32.mrb[0].mxu0
    %3789 = vdwg.mxu0
    %3790 = vmatprep.subr.mxu0 0.0
    %3791 = vmatpush1.msra.mxu0 %v3681
    %3792 = vmatprep.subr.mxu0 0.0
    %3793 = vmatpush1.msra.mxu0 %v3682
    %3794 = vmatprep.subr.mxu0 0.0
    %3795 = vmatpush1.msra.mxu0 %v3683
    %3796 = vmatprep.subr.mxu0 0.0
    %3797 = vmatpush1.msra.mxu0 %v3684
    %3798 = vmatprep.subr.mxu0 0.0
    %3799 = vmatpush1.msra.mxu0 %v3685
    %3800 = vmatprep.subr.mxu0 0.0
    %3801 = vmatpush1.msra.mxu0 %v3686
    %3802 = vmatprep.subr.mxu0 0.0
    %3803 = vmatpush1.msra.mxu0 %v3687
    %3804 = vmatprep.subr.mxu0 0.0
    %3805 = vmatpush1.msra.mxu0 %v3688
    %3806 = vmatprep.subr.mxu0 0.0
    %3807 = vmatpush1.msra.mxu0 %v3689
    %3808 = vmatprep.subr.mxu0 0.0
    %3809 = vmatpush1.msra.mxu0 %v3690
    %3810 = vmatprep.subr.mxu0 0.0
    %3811 = vmatpush1.msra.mxu0 %v3691
    %3812 = vmatprep.subr.mxu0 0.0
    %3813 = vmatpush1.msra.mxu0 %v3692
    %3814 = vmatprep.subr.mxu0 0.0
    %3815 = vmatpush1.msra.mxu0 %v3693
    %3816 = vmatprep.subr.mxu0 0.0
    %3817 = vmatpush1.msra.mxu0 %v3694
    %3818 = vmatprep.subr.mxu0 0.0
    %3819 = vmatpush1.msra.mxu0 %v3695
    %3820 = vmatprep.subr.mxu0 0.0
    %3821 = vmatpush1.msra.mxu0 %v3696
    %3822 = vmatprep.subr.mxu0 0.0
    %3823 = vmatpush1.msra.mxu0 %v3697
    %3824 = vmatprep.subr.mxu0 0.0
    %3825 = vmatpush1.msra.mxu0 %v3698
    %3826 = vmatprep.subr.mxu0 0.0
    %3827 = vmatpush1.msra.mxu0 %v3699
    %3828 = vmatprep.subr.mxu0 0.0
    %3829 = vmatpush1.msra.mxu0 %v3700
    %3830 = vmatprep.subr.mxu0 0.0
    %3831 = vmatpush1.msra.mxu0 %v3701
    %3832 = vmatprep.subr.mxu0 0.0
    %3833 = vmatpush1.msra.mxu0 %v3702
    %3834 = vmatprep.subr.mxu0 0.0
    %3835 = vmatpush1.msra.mxu0 %v3703
    %3836 = vmatprep.subr.mxu0 0.0
    %3837 = vmatpush1.msra.mxu0 %v3704
    %3838 = vmatprep.subr.mxu0 0.0
    %3839 = vmatpush1.msra.mxu0 %v3705
    %3840 = vmatprep.subr.mxu0 0.0
    %3841 = vmatpush1.msra.mxu0 %v3706
    %3842 = vmatprep.subr.mxu0 0.0
    %3843 = vmatpush1.msra.mxu0 %v3707
    %3844 = vmatprep.subr.mxu0 0.0
    %3845 = vmatpush1.msra.mxu0 %v3708
    %3846 = vmatprep.subr.mxu0 0.0
    %3847 = vmatpush1.msra.mxu0 %v3709
    %3848 = vmatprep.subr.mxu0 0.0
    %3849 = vmatpush1.msra.mxu0 %v3710
    %3850 = vmatprep.subr.mxu0 0.0
    %3851 = vmatpush1.msra.mxu0 %v3711
    %3852 = vmatprep.subr.mxu0 0.0
    %3853 = vmatpush1.msra.mxu0 %v3712
    %3854 = vmatprep.mubr.f32.mxu0 %v3648
    %3855 = vmatmul.mubr.f32.gmra.mrb[0].mxu0 %v3647
    %v3856 = vpop.f32.mrb[0].mxu0
    %v3857 = vadd.f32 %v3787, %v3856
    %v3858 = vpop.f32.mrb[0].mxu0
    %3859 = vdwg.mxu0
    %v3860 = vmax.f32 %v3857, 0.0
    %v3861 = vld [vmem:[%s5] sm:$0xff]
    %v3862 = vld [vmem:[%s5 + $0x8] sm:$0xff]
    %v3863 = vld [vmem:[%s5 + $0x10] sm:$0xff]
    %v3864 = vld [vmem:[%s5 + $0x18] sm:$0xff]
    %v3865 = vld [vmem:[%s5 + $0x20] sm:$0xff]
    %v3866 = vld [vmem:[%s5 + $0x28] sm:$0xff]
    %v3867 = vld [vmem:[%s5 + $0x30] sm:$0xff]
    %v3868 = vld [vmem:[%s5 + $0x38] sm:$0xff]
    %v3869 = vld [vmem:[%s5 + $0x40] sm:$0xff]
    %v3870 = vld [vmem:[%s5 + $0x48] sm:$0xff]
    %v3871 = vld [vmem:[%s5 + $0x50] sm:$0xff]
    %v3872 = vld [vmem:[%s5 + $0x58] sm:$0xff]
    %v3873 = vld [vmem:[%s5 + $0x60] sm:$0xff]
    %v3874 = vld [vmem:[%s5 + $0x68] sm:$0xff]
    %v3875 = vld [vmem:[%s5 + $0x70] sm:$0xff]
    %v3876 = vld [vmem:[%s5 + $0x78] sm:$0xff]
    %v3877 = vld [vmem:[#allocation10] sm:$0x1]
    %v3879 = vlaneseq
    %v3880 = vshrl.u32 %v3879, 7
    %v3881 = vsub.s32 0, %v3880
    %v3882 = vrot.slane %v3877, %v3881
    %3884 = vmatprep.subr.mxu0 0.0
    %3885 = vmatpush1.msra.mxu0 %v3861
    %3886 = vmatprep.subr.mxu0 0.0
    %3887 = vmatpush1.msra.mxu0 %v3862
    %3888 = vmatprep.subr.mxu0 0.0
    %3889 = vmatpush1.msra.mxu0 %v3863
    %3890 = vmatprep.subr.mxu0 0.0
    %3891 = vmatpush1.msra.mxu0 %v3864
    %3892 = vmatprep.subr.mxu0 0.0
    %3893 = vmatpush1.msra.mxu0 %v3865
    %3894 = vmatprep.subr.mxu0 0.0
    %3895 = vmatpush1.msra.mxu0 %v3866
    %3896 = vmatprep.subr.mxu0 0.0
    %3897 = vmatpush1.msra.mxu0 %v3867
    %3898 = vmatprep.subr.mxu0 0.0
    %3899 = vmatpush1.msra.mxu0 %v3868
    %3900 = vmatprep.subr.mxu0 0.0
    %3901 = vmatpush1.msra.mxu0 %v3869
    %3902 = vmatprep.subr.mxu0 0.0
    %3903 = vmatpush1.msra.mxu0 %v3870
    %3904 = vmatprep.subr.mxu0 0.0
    %3905 = vmatpush1.msra.mxu0 %v3871
    %3906 = vmatprep.subr.mxu0 0.0
    %3907 = vmatpush1.msra.mxu0 %v3872
    %3908 = vmatprep.subr.mxu0 0.0
    %3909 = vmatpush1.msra.mxu0 %v3873
    %3910 = vmatprep.subr.mxu0 0.0
    %3911 = vmatpush1.msra.mxu0 %v3874
    %3912 = vmatprep.subr.mxu0 0.0
    %3913 = vmatpush1.msra.mxu0 %v3875
    %3914 = vmatprep.subr.mxu0 0.0
    %3915 = vmatpush1.msra.mxu0 %v3876
    %3916 = vmatprep.subr.mxu0 0.0
    %3917 = vmatpush1.msra.mxu0 0.0
    %3918 = vmatprep.subr.mxu0 0.0
    %3919 = vmatpush1.msra.mxu0 0.0
    %3920 = vmatprep.subr.mxu0 0.0
    %3921 = vmatpush1.msra.mxu0 0.0
    %3922 = vmatprep.subr.mxu0 0.0
    %3923 = vmatpush1.msra.mxu0 0.0
    %3924 = vmatprep.subr.mxu0 0.0
    %3925 = vmatpush1.msra.mxu0 0.0
    %3926 = vmatprep.subr.mxu0 0.0
    %3927 = vmatpush1.msra.mxu0 0.0
    %3928 = vmatprep.subr.mxu0 0.0
    %3929 = vmatpush1.msra.mxu0 0.0
    %3930 = vmatprep.subr.mxu0 0.0
    %3931 = vmatpush1.msra.mxu0 0.0
    %3932 = vmatprep.subr.mxu0 0.0
    %3933 = vmatpush1.msra.mxu0 0.0
    %3934 = vmatprep.subr.mxu0 0.0
    %3935 = vmatpush1.msra.mxu0 0.0
    %3936 = vmatprep.subr.mxu0 0.0
    %3937 = vmatpush1.msra.mxu0 0.0
    %3938 = vmatprep.subr.mxu0 0.0
    %3939 = vmatpush1.msra.mxu0 0.0
    %3940 = vmatprep.subr.mxu0 0.0
    %3941 = vmatpush1.msra.mxu0 0.0
    %3942 = vmatprep.subr.mxu0 0.0
    %3943 = vmatpush1.msra.mxu0 0.0
    %3944 = vmatprep.subr.mxu0 0.0
    %3945 = vmatpush1.msra.mxu0 0.0
    %3946 = vmatprep.subr.mxu0 0.0
    %3947 = vmatpush1.msra.mxu0 0.0
    %3948 = vmatprep.mubr.f32.mxu0 0.0
    %3949 = vmatmul.mubr.f32.gmra.mrb[0].mxu0 %v3860
    %v3950 = vpop.f32.mrb[0].mxu0
    %v3951 = vadd.f32 %v3882, %v3950
    %v3952 = vpop.f32.mrb[0].mxu0
    %3953 = vdwg.mxu0
    %v3954 = vmax.f32 %v3951, 0.0
    %v3955 = vld [vmem:[%s7] sm:$0xff]
    %v3956 = vld [vmem:[%s7 + $0x8] sm:$0xff]
    %v3957 = vld [vmem:[%s7 + $0x10] sm:$0xff]
    %v3958 = vld [vmem:[%s7 + $0x18] sm:$0xff]
    %v3959 = vld [vmem:[%s7 + $0x20] sm:$0xff]
    %v3960 = vld [vmem:[%s7 + $0x28] sm:$0xff]
    %v3961 = vld [vmem:[%s7 + $0x30] sm:$0xff]
    %v3962 = vld [vmem:[%s7 + $0x38] sm:$0xff]
    %v3963 = vld [vmem:[%s8] sm:$0x1]
    %v3965 = vlaneseq
    %v3966 = vshrl.u32 %v3965, 7
    %v3967 = vsub.s32 0, %v3966
    %v3968 = vrot.slane %v3963, %v3967
    %vm3970 = vcmask 523264
    %v3972 = vsel %vm3970, %v3954, 0
    %3974 = vmatprep.subr.mxu0 0.0
    %3975 = vmatpush1.msra.mxu0 %v3955
    %3976 = vmatprep.subr.mxu0 0.0
    %3977 = vmatpush1.msra.mxu0 %v3956
    %3978 = vmatprep.subr.mxu0 0.0
    %3979 = vmatpush1.msra.mxu0 %v3957
    %3980 = vmatprep.subr.mxu0 0.0
    %3981 = vmatpush1.msra.mxu0 %v3958
    %3982 = vmatprep.subr.mxu0 0.0
    %3983 = vmatpush1.msra.mxu0 %v3959
    %3984 = vmatprep.subr.mxu0 0.0
    %3985 = vmatpush1.msra.mxu0 %v3960
    %3986 = vmatprep.subr.mxu0 0.0
    %3987 = vmatpush1.msra.mxu0 %v3961
    %3988 = vmatprep.subr.mxu0 0.0
    %3989 = vmatpush1.msra.mxu0 %v3962
    %3990 = vmatprep.subr.mxu0 0.0
    %3991 = vmatpush1.msra.mxu0 0.0
    %3992 = vmatprep.subr.mxu0 0.0
    %3993 = vmatpush1.msra.mxu0 0.0
    %3994 = vmatprep.subr.mxu0 0.0
    %3995 = vmatpush1.msra.mxu0 0.0
    %3996 = vmatprep.subr.mxu0 0.0
    %3997 = vmatpush1.msra.mxu0 0.0
    %3998 = vmatprep.subr.mxu0 0.0
    %3999 = vmatpush1.msra.mxu0 0.0
    %4000 = vmatprep.subr.mxu0 0.0
    %4001 = vmatpush1.msra.mxu0 0.0
    %4002 = vmatprep.subr.mxu0 0.0
    %4003 = vmatpush1.msra.mxu0 0.0
    %4004 = vmatprep.subr.mxu0 0.0
    %4005 = vmatpush1.msra.mxu0 0.0
    %4006 = vmatprep.subr.mxu0 0.0
    %4007 = vmatpush1.msra.mxu0 0.0
    %4008 = vmatprep.subr.mxu0 0.0
    %4009 = vmatpush1.msra.mxu0 0.0
    %4010 = vmatprep.subr.mxu0 0.0
    %4011 = vmatpush1.msra.mxu0 0.0
    %4012 = vmatprep.subr.mxu0 0.0
    %4013 = vmatpush1.msra.mxu0 0.0
    %4014 = vmatprep.subr.mxu0 0.0
    %4015 = vmatpush1.msra.mxu0 0.0
    %4016 = vmatprep.subr.mxu0 0.0
    %4017 = vmatpush1.msra.mxu0 0.0
    %4018 = vmatprep.subr.mxu0 0.0
    %4019 = vmatpush1.msra.mxu0 0.0
    %4020 = vmatprep.subr.mxu0 0.0
    %4021 = vmatpush1.msra.mxu0 0.0
    %4022 = vmatprep.subr.mxu0 0.0
    %4023 = vmatpush1.msra.mxu0 0.0
    %4024 = vmatprep.subr.mxu0 0.0
    %4025 = vmatpush1.msra.mxu0 0.0
    %4026 = vmatprep.subr.mxu0 0.0
    %4027 = vmatpush1.msra.mxu0 0.0
    %4028 = vmatprep.subr.mxu0 0.0
    %4029 = vmatpush1.msra.mxu0 0.0
    %4030 = vmatprep.subr.mxu0 0.0
    %4031 = vmatpush1.msra.mxu0 0.0
    %4032 = vmatprep.subr.mxu0 0.0
    %4033 = vmatpush1.msra.mxu0 0.0
    %4034 = vmatprep.subr.mxu0 0.0
    %4035 = vmatpush1.msra.mxu0 0.0
    %4036 = vmatprep.subr.mxu0 0.0
    %4037 = vmatpush1.msra.mxu0 0.0
    %4038 = vmatprep.mubr.f32.mxu0 0.0
    %4039 = vmatmul.mubr.f32.gmra.mrb[0].mxu0 %v3972
    %v4040 = vpop.f32.mrb[0].mxu0
    %v4041 = vadd.f32 %v3968, %v4040
    %v4042 = vpop.f32.mrb[0].mxu0
    %4043 = vdwg.mxu0
    %4044 = vst [vmem:[#allocation11] sm:$0xff] %v4041
    // Predicated region
    $region58: #{cifar_dnn_forward.1} parent=1 // pred_check
      _
    $region59: #{cifar_dnn_forward.1} parent=1 // pred_check_branch
      %4046 = sbr.rel (0) target = $region61
    $region60: #{cifar_dnn_forward.1} parent=1 // pred_region
      %s4048 = ssub.s32 128, 32
      %4049 = vsyncadd [#allocation4], %s4048
      %s4050 = sshll.u32 [#allocation11], 4
      %s4051 = int_to_ptr.vmem [resolvable:$true] %s4050
      %4056 = dma.vmem_to_hbm [thread:$0]  %s4051, 32, %s9, [#allocation4], 32, 32, 2
    $region61: #{cifar_dnn_forward.1} parent=1 // pred_fallthru
      _
    // Predicated region
    $region62: #{cifar_dnn_forward.1} parent=1 // pred_check
      _
    $region63: #{cifar_dnn_forward.1} parent=1 // pred_check_branch
      %4058 = sbr.rel (0) target = $region65
    $region64: #{cifar_dnn_forward.1} parent=1 // pred_region
      %4059 = dma.done [#allocation4], 128
    $region65: #{cifar_dnn_forward.1} parent=1 // pred_fallthru
      _
    %4060 = vsyncpa [#allocation3], 1
    %4061 = vsyncpa [#allocation6], 1
    %4062 = vsyncpa [#allocation9], 1
    %4063 = vsyncpa [#allocation4], 1

</llo_original>
